<compile_context>
chip_gen: v5e
topology: v5e:2x2
jax: 0.10.0
libtpu: 0.0.40
codegen_flags: <defaults>
</compile_context>

<pallas_src>
import functools

import jax
import jax.numpy as jnp
from jax.experimental import pallas as pl
from jax.experimental.pallas import tpu as pltpu

_BN_EPS = 1e-5
_VMEM_LIMIT = 32 * 1024 * 1024   # fits v7x's 64 MiB physical VMEM with headroom


# ----------------------------------------------------------------------------
# small helpers
# ----------------------------------------------------------------------------
def _cdiv(a, b):
    return -(-a // b)


def _rup(a, b):
    return _cdiv(a, b) * b


def _device_policy():
    """True if the chip has 2 TensorCores sharing the grid (v7x/v4/v5p)."""
    try:
        kind = jax.devices()[0].device_kind.lower()
    except Exception:  # pragma: no cover
        kind = ""
    return any(t in kind for t in ("v7", "7x", "v4", "v5p"))


def _pick_tile(m, min_tn=128, cap=4096, two_cores=False):
    """Lane-tile size (multiple of 128, >= min_tn so the halo fits in ONE
    extra block).  Dual-TC chips aim for >= 4 grid steps (>= 2 per core);
    single-TC chips take the fewest, biggest tiles."""
    min_tn = max(128, _rup(min_tn, 128))
    if two_cores:
        tgt = 128 * max(1, m // (4 * 128))
    else:
        tgt = _rup(m, 128)
    tn = min(_rup(cap, 128), max(128, tgt))
    return int(max(tn, min_tn))          # halo bound always wins over the cap


def _fold_bn(w, bn):
    gamma, beta, mean, var = bn
    scale = gamma / jnp.sqrt(var + _BN_EPS)
    shift = beta - mean * scale
    return w * scale[:, None, None, None, None], shift


def _conv_in_weights(w, bn, k, cout_pad):
    wf, shift = _fold_bn(w, bn)
    cout, cin = w.shape[0], w.shape[1]
    w2 = jnp.transpose(wf, (0, 2, 3, 4, 1)).reshape(cout, k ** 3 * cin)
    w2 = jnp.pad(w2, ((0, cout_pad - cout), (0, 0)))
    s2 = jnp.pad(shift.reshape(cout, 1), ((0, cout_pad - cout), (0, 0)))
    return w2.astype(jnp.float32), s2.astype(jnp.float32)


def _conv3_merged_weights(w, bn, cin_pad, cout_pad):
    """(cout, cin, 3,3,3) -> merged (cout_pad, 27*cin_pad), tap-major rows
    matching the in-kernel im2col row order (tap t, then channel c)."""
    wf, shift = _fold_bn(w, bn)
    cout, cin = w.shape[0], w.shape[1]
    w_taps = jnp.transpose(wf, (2, 3, 4, 0, 1)).reshape(27, cout, cin)
    w_taps = jnp.pad(w_taps, ((0, 0), (0, cout_pad - cout), (0, cin_pad - cin)))
    w_merged = jnp.transpose(w_taps, (1, 0, 2)).reshape(cout_pad, 27 * cin_pad)
    s2 = jnp.pad(shift.reshape(cout, 1), ((0, cout_pad - cout), (0, 0)))
    return w_merged.astype(jnp.float32), s2.astype(jnp.float32)


def _conv1x1_weights(w, bn, cin_pad, cout_pad):
    wf, shift = _fold_bn(w, bn)
    cout, cin = w.shape[0], w.shape[1]
    wd = jnp.pad(wf.reshape(cout, cin), ((0, cout_pad - cout), (0, cin_pad - cin)))
    sd = jnp.pad(shift.reshape(cout, 1), ((0, cout_pad - cout), (0, 0)))
    return wd.astype(jnp.float32), sd.astype(jnp.float32)


def _strided_patches(x_c, k, stride):
    """x_c: (C, N, D, H, W) -> patches (k^3*C, N*Do*Ho*Wo), tap-major.
    k == stride (non-overlapping windows) => pure relayout, 1x traffic."""
    C, N, D, H, W = x_c.shape
    Do = (D - k) // stride + 1
    Ho = (H - k) // stride + 1
    Wo = (W - k) // stride + 1
    pieces = []
    for kd in range(k):
        for kh in range(k):
            for kw in range(k):
                pieces.append(x_c[:, :,
                                  kd:kd + stride * Do:stride,
                                  kh:kh + stride * Ho:stride,
                                  kw:kw + stride * Wo:stride])
    patches = jnp.stack(pieces, axis=0).reshape(k ** 3 * C, N * Do * Ho * Wo)
    return patches, (N, Do, Ho, Wo)


# ----------------------------------------------------------------------------
# Pallas kernel 1: GEMM + folded-BN shift + ReLU   (conv_in, k=2 s=2)
# ----------------------------------------------------------------------------
def _gemm_bn_relu_kernel(w_ref, s_ref, x_ref, o_ref):
    acc = jnp.dot(w_ref[...], x_ref[...], preferred_element_type=jnp.float32)
    o_ref[...] = jnp.maximum(acc + s_ref[...], 0.0).astype(o_ref.dtype)


def conv_in_strided(x_c, w, bn, k, stride, cout_pad, two_cores):
    """Strided dense Conv3d + folded BN + ReLU.
    x_c: (C_in, N, D, H, W) f32 -> (cout_pad, N, Do, Ho, Wo) f32, with the
    padded output channels exactly zero (so downstream kernels can use them
    directly as zero pad-channels)."""
    patches, (N, Do, Ho, Wo) = _strided_patches(x_c, k, stride)
    K, M = patches.shape
    Kp = _rup(K, 8)
    if Kp != K:
        patches = jnp.pad(patches, ((0, Kp - K), (0, 0)))
    w2, s2 = _conv_in_weights(w, bn, k, cout_pad)
    if w2.shape[1] != Kp:
        w2 = jnp.pad(w2, ((0, 0), (0, Kp - w2.shape[1])))

    tn = _pick_tile(M, min_tn=128, cap=2048, two_cores=two_cores)
    G = _cdiv(M, tn)
    Mp = G * tn
    if Mp != M:
        patches = jnp.pad(patches, ((0, 0), (0, Mp - M)))

    cost = pl.CostEstimate(
        flops=2 * cout_pad * Kp * Mp,
        transcendentals=0,
        bytes_accessed=int(4 * (patches.size + w2.size + cout_pad * Mp)),
    )
    out = pl.pallas_call(
        _gemm_bn_relu_kernel,
        out_shape=jax.ShapeDtypeStruct((cout_pad, Mp), jnp.float32),
        grid=(G,),
        in_specs=[
            pl.BlockSpec((cout_pad, Kp), lambda i: (0, 0)),
            pl.BlockSpec((cout_pad, 1), lambda i: (0, 0)),
            pl.BlockSpec((Kp, tn), lambda i: (0, i)),
        ],
        out_specs=pl.BlockSpec((cout_pad, tn), lambda i: (0, i)),
        compiler_params=pltpu.CompilerParams(
            dimension_semantics=("parallel",),
            vmem_limit_bytes=_VMEM_LIMIT),
        cost_estimate=cost,
    )(w2, s2, patches)
    return out[:, :M].reshape(cout_pad, N, Do, Ho, Wo)


# ----------------------------------------------------------------------------
# Pallas kernel 2: k=3 SAME conv as ONE deep-K matmul over an in-VMEM im2col
# slab, folded BN (+ReLU), optional fused skip (1x1-conv+BN or identity).
# ----------------------------------------------------------------------------
def _make_conv3_kernel(tap_offsets, tn, cp, skip_mode, relu):
    def kernel(*refs):
        idx = 0
        w_ref = refs[idx]; idx += 1
        s_ref = refs[idx]; idx += 1
        if skip_mode == "proj":
            wd_ref = refs[idx]; idx += 1
            sd_ref = refs[idx]; idx += 1
        if skip_mode != "none":
            skip_ref = refs[idx]; idx += 1
        m_ref = refs[idx]; idx += 1
        x0_ref = refs[idx]; idx += 1
        x1_ref = refs[idx]; idx += 1
        o_ref = refs[idx]; idx += 1
        col_ref = refs[idx]; idx += 1      # (27*cp, tn) VMEM scratch

        # Build the im2col slab from the 2-block halo window: 27 static
        # shifted copies written straight into the scratch (no concatenate).
        for t, off in enumerate(tap_offsets):
            r0 = t * cp
            if off == 0:
                col_ref[r0:r0 + cp, :] = x0_ref[...]
            else:
                col_ref[r0:r0 + cp, :tn - off] = x0_ref[:, off:]
                col_ref[r0:r0 + cp, tn - off:] = x1_ref[:, :off]

        # Single deep-contraction MXU matmul: (cout, 27*cp) @ (27*cp, tn).
        acc = jnp.dot(w_ref[...], col_ref[...],
                      preferred_element_type=jnp.float32)
        acc = acc + s_ref[...]
        if relu:
            acc = jnp.maximum(acc, 0.0)
        if skip_mode == "proj":          # fused 1x1 conv + BN, added post-ReLU
            acc = acc + jnp.dot(wd_ref[...], skip_ref[...],
                                preferred_element_type=jnp.float32) + sd_ref[...]
        elif skip_mode == "identity":    # plain residual add, no matmul
            acc = acc + skip_ref[...]
        # Mask non-valid padded-grid positions to zero so the output is a
        # valid "base layout" array (directly chainable into the next conv).
        o_ref[...] = (acc * m_ref[...]).astype(o_ref.dtype)
    return kernel


class _FlatGrid:
    """Flattened padded-grid bookkeeping for the k=3 SAME convs.

    base layout  : values at output coords (d,h,w), zeros elsewhere  (written)
    padded layout: the spatially zero-padded tensor, flattened        (read)
    padded = front-shift(base) by (Hp*Wp + Wp + 1)  ->  one jnp.pad.
    """

    def __init__(self, N, D, H, W, two_cores):
        self.N, self.D, self.H, self.W = N, D, H, W
        self.Dp, self.Hp, self.Wp = D + 2, H + 2, W + 2
        self.M = N * self.Dp * self.Hp * self.Wp
        self.shift = self.Hp * self.Wp + self.Wp + 1
        self.tap_offsets = tuple(kd * self.Hp * self.Wp + kh * self.Wp + kw
                                 for kd in range(3)
                                 for kh in range(3)
                                 for kw in range(3))
        self.max_off = self.tap_offsets[-1]
        # tn >= max tap offset  =>  halo always fits in ONE extra block.
        self.tn = _pick_tile(self.M, min_tn=self.max_off, cap=4096,
                             two_cores=two_cores)
        assert self.max_off <= self.tn and self.shift <= self.tn
        self.G = _cdiv(self.M, self.tn)
        self.w_out = self.G * self.tn            # width the kernels write
        self.w_in = (self.G + 1) * self.tn       # width the kernels read

    def to_base(self, x_c):
        C = x_c.shape[0]
        xb = jnp.pad(x_c, ((0, 0), (0, 0), (0, 2), (0, 2), (0, 2)))
        xb = xb.reshape(C, self.M)
        return jnp.pad(xb, ((0, 0), (0, self.w_out - self.M)))

    def to_padded(self, x_base):
        return jnp.pad(x_base, ((0, 0), (self.shift, self.tn - self.shift)))

    def from_base(self, x_base):
        C = x_base.shape[0]
        x = x_base[:, :self.M].reshape(C, self.N, self.Dp, self.Hp, self.Wp)
        return x[:, :, :self.D, :self.H, :self.W]

    def valid_mask(self):
        m = jnp.zeros((self.N, self.Dp, self.Hp, self.Wp), jnp.float32)
        m = m.at[:, :self.D, :self.H, :self.W].set(1.0)
        m = m.reshape(1, self.M)
        return jnp.pad(m, ((0, 0), (0, self.w_out - self.M)))


def conv3_pallas(fg, x_pad, w_merged, s2, mask, relu=True,
                 skip_mode="none", skip=None, wd=None, sd=None):
    """One k=3 SAME conv (+folded BN, +ReLU, +optional fused skip) over the
    flattened padded grid.  x_pad: (cp, (G+1)*tn) padded-layout input.
    Returns (cout, G*tn) masked base-layout output."""
    cp = x_pad.shape[0]
    cout = w_merged.shape[0]
    K = w_merged.shape[1]
    assert K == 27 * cp
    assert x_pad.shape[1] == fg.w_in
    assert mask.shape == (1, fg.w_out)
    tn, G = fg.tn, fg.G

    kernel = _make_conv3_kernel(fg.tap_offsets, tn, cp, skip_mode, relu)

    args = [w_merged, s2]
    in_specs = [
        pl.BlockSpec((cout, K), lambda i: (0, 0)),
        pl.BlockSpec((cout, 1), lambda i: (0, 0)),
    ]
    skip_flops = 0
    skip_bytes = 0
    if skip_mode == "proj":
        args += [wd, sd]
        in_specs += [
            pl.BlockSpec((cout, wd.shape[1]), lambda i: (0, 0)),
            pl.BlockSpec((cout, 1), lambda i: (0, 0)),
        ]
        skip_flops = 2 * cout * wd.shape[1] * G * tn
    if skip_mode != "none":
        args += [skip]
        in_specs += [pl.BlockSpec((skip.shape[0], tn), lambda i: (0, i))]
        skip_bytes = int(skip.size) * 4
    args += [mask, x_pad, x_pad]          # mask, window block i, window block i+1
    in_specs += [
        pl.BlockSpec((1, tn), lambda i: (0, i)),
        pl.BlockSpec((cp, tn), lambda i: (0, i)),
        pl.BlockSpec((cp, tn), lambda i: (0, i + 1)),
    ]

    cost = pl.CostEstimate(
        flops=2 * cout * K * G * tn + skip_flops,
        transcendentals=0,
        bytes_accessed=int(4 * (2 * cp * tn * G + cout * G * tn
                                + w_merged.size + G * tn) + skip_bytes),
    )
    out = pl.pallas_call(
        kernel,
        out_shape=jax.ShapeDtypeStruct((cout, G * tn), jnp.float32),
        grid=(G,),
        in_specs=in_specs,
        out_specs=pl.BlockSpec((cout, tn), lambda i: (0, i)),
        scratch_shapes=[pltpu.VMEM((K, tn), jnp.float32)],
        compiler_params=pltpu.CompilerParams(
            dimension_semantics=("parallel",),
            vmem_limit_bytes=_VMEM_LIMIT),
        cost_estimate=cost,
    )(*args)
    return out


# ----------------------------------------------------------------------------
# Parameters (deterministic, in-script)
# ----------------------------------------------------------------------------
def make_bn_params(key, c):
    k1, k2 = jax.random.split(key)
    gamma = 1.0 + 0.1 * jax.random.normal(k1, (c,), jnp.float32)
    beta = 0.1 * jax.random.normal(k2, (c,), jnp.float32)
    mean = jnp.zeros((c,), jnp.float32)
    var = jnp.ones((c,), jnp.float32)
    return (gamma, beta, mean, var)


def make_conv_weight(key, c_out, c_in, k):
    fan_in = c_in * k ** 3
    return (jax.random.normal(key, (c_out, c_in, k, k, k), jnp.float32)
            / jnp.sqrt(float(fan_in)))


def init_resnet_down_params(key, down_conv_nn=(4, 8), kernel_size=2, stride=2, N=1):
    c_in, c_out = down_conv_nn
    conv1_output = c_in if stride > 1 else c_out
    keys = jax.random.split(key, 2 + 6 * max(N, 1))
    params = {
        "conv_in_w": make_conv_weight(keys[0], conv1_output, c_in, kernel_size),
        "conv_in_bn": make_bn_params(keys[1], conv1_output),
        "blocks": [],
    }
    blk_in = conv1_output
    for n in range(N):
        kk = keys[2 + 6 * n: 2 + 6 * (n + 1)]
        blk = {
            "w1": make_conv_weight(kk[0], c_out, blk_in, 3),
            "bn1": make_bn_params(kk[1], c_out),
            "w2": make_conv_weight(kk[2], c_out, c_out, 3),
            "bn2": make_bn_params(kk[3], c_out),
        }
        if blk_in != c_out:
            blk["wd"] = make_conv_weight(kk[4], c_out, blk_in, 1)
            blk["bnd"] = make_bn_params(kk[5], c_out)
        params["blocks"].append(blk)
        blk_in = c_out
    return params


# ----------------------------------------------------------------------------
# Forward pass
# ----------------------------------------------------------------------------
def resnet_down_forward(params, x_ncdhw, kernel_size=2, stride=2):
    two_cores = _device_policy()
    x_c = jnp.transpose(x_ncdhw, (1, 0, 2, 3, 4)).astype(jnp.float32)

    c_real = params["conv_in_w"].shape[0]
    cpad = _rup(c_real, 8)
    out_c = conv_in_strided(x_c, params["conv_in_w"], params["conv_in_bn"],
                            kernel_size, stride, cpad, two_cores)

    if not params["blocks"]:
        out_c = out_c[:c_real]
        return jnp.transpose(out_c, (1, 0, 2, 3, 4)).astype(jnp.float32)

    _, N, D, H, W = out_c.shape
    fg = _FlatGrid(N, D, H, W, two_cores)
    mask = fg.valid_mask()
    x_base = fg.to_base(out_c)           # flat base layout, stays flat across blocks

    for blk in params["blocks"]:
        cp = x_base.shape[0]
        c_out_real = blk["w1"].shape[0]
        cop = _rup(c_out_real, 8)

        # conv1: k=3 SAME + BN + ReLU
        x_pad = fg.to_padded(x_base)
        w1, s1 = _conv3_merged_weights(blk["w1"], blk["bn1"], cp, cop)
        h_base = conv3_pallas(fg, x_pad, w1, s1, mask, relu=True,
                              skip_mode="none")

        # conv2: k=3 SAME + BN + ReLU, fused skip added AFTER the ReLU
        # (matches torch_points3d ResBlock.forward: out = block(x); out += skip(x))
        h_pad = fg.to_padded(h_base)
        w2, s2 = _conv3_merged_weights(blk["w2"], blk["bn2"], cop, cop)
        if "wd" in blk:
            wd, sd = _conv1x1_weights(blk["wd"], blk["bnd"], cp, cop)
            x_base = conv3_pallas(fg, h_pad, w2, s2, mask, relu=True,
                                  skip_mode="proj", skip=x_base, wd=wd, sd=sd)
        else:
            x_base = conv3_pallas(fg, h_pad, w2, s2, mask, relu=True,
                                  skip_mode="identity", skip=x_base)
        c_real = c_out_real

    out = fg.from_base(x_base)[:c_real]
    return jnp.transpose(out, (1, 0, 2, 3, 4)).astype(jnp.float32)


# ----------------------------------------------------------------------------
# Pure-JAX reference (independent formulation via lax.conv_general_dilated)
# ----------------------------------------------------------------------------
def _ref_bn(y, p):
    gamma, beta, mean, var = p
    s = gamma / jnp.sqrt(var + _BN_EPS)
    b = beta - mean * s
    return y * s.reshape(1, -1, 1, 1, 1) + b.reshape(1, -1, 1, 1, 1)


def _ref_conv(x, w, stride, padding):
    return jax.lax.conv_general_dilated(
        x, w, window_strides=(stride, stride, stride), padding=padding,
        dimension_numbers=("NCDHW", "OIDHW", "NCDHW"),
        precision=jax.lax.Precision.HIGHEST)


def resnet_down_reference(params, x, kernel_size=2, stride=2):
    x = x.astype(jnp.float32)
    out = jax.nn.relu(_ref_bn(
        _ref_conv(x, params["conv_in_w"], stride, "VALID"),
        params["conv_in_bn"]))
    for blk in params["blocks"]:
        inp = out
        h = jax.nn.relu(_ref_bn(_ref_conv(inp, blk["w1"], 1, "SAME"), blk["bn1"]))
        o2 = jax.nn.relu(_ref_bn(_ref_conv(h, blk["w2"], 1, "SAME"), blk["bn2"]))
        if "wd" in blk:
            sk = _ref_bn(_ref_conv(inp, blk["wd"], 1, "SAME"), blk["bnd"])
        else:
            sk = inp
        out = o2 + sk
    return out


# ----------------------------------------------------------------------------
if __name__ == "__main__":
    key = jax.random.PRNGKey(0)
    k_param, k_x = jax.random.split(key)

    down_conv_nn = (4, 8)
    params = init_resnet_down_params(k_param, down_conv_nn=down_conv_nn,
                                     kernel_size=2, stride=2, N=1)

    # x: (batch=2, channels=4, D=8, H=8, W=8) in NCDHW
    x = jax.random.normal(k_x, (2, 4, 8, 8, 8), jnp.float32)

    fwd = jax.jit(functools.partial(resnet_down_forward, kernel_size=2, stride=2))
    out = jax.block_until_ready(fwd(params, x))

    ref = jax.block_until_ready(resnet_down_reference(params, x))
    assert out.shape == (2, 8, 4, 4, 4), out.shape
    err = float(jnp.max(jnp.abs(out - ref)))
    assert err < 2e-2, err

    print("KERNEL_OK")
</pallas_src>

<mosaic_0001>
module attributes {stable_mosaic.version = 11 : i64} {
  func.func @_gemm_bn_relu_kernel(%arg0: i32, %arg1: memref<8x32xf32, #tpu.memory_space<vmem>>, %arg2: memref<8x1xf32, #tpu.memory_space<vmem>>, %arg3: memref<32x128xf32, #tpu.memory_space<vmem>>, %arg4: memref<8x128xf32, #tpu.memory_space<vmem>>) attributes {dimension_semantics = [#tpu.dimension_semantics<parallel>], iteration_bounds = array<i64: 1>, scalar_prefetch = 0 : i64, scratch_operands = 0 : i64, tpu.core_type = #tpu.core_type<tc>, window_params = [{pipeline_mode = #tpu.pipeline_mode<synchronous>, transform_indices = @transform_0, window_bounds = array<i64: 8, 32>}, {pipeline_mode = #tpu.pipeline_mode<synchronous>, transform_indices = @transform_1, window_bounds = array<i64: 8, 1>}, {transform_indices = @transform_2, window_bounds = array<i64: 32, 128>}, {transform_indices = @transform_3, window_bounds = array<i64: 8, 128>}]} {
    %c0 = arith.constant 0 : index
    %c0_0 = arith.constant 0 : index
    %0 = vector.load %arg1[%c0, %c0_0] : memref<8x32xf32, #tpu.memory_space<vmem>>, vector<8x32xf32>
    %c0_1 = arith.constant 0 : index
    %c0_2 = arith.constant 0 : index
    %1 = vector.load %arg3[%c0_1, %c0_2] : memref<32x128xf32, #tpu.memory_space<vmem>>, vector<32x128xf32>
    %cst = arith.constant dense<0.000000e+00> : vector<8x128xf32>
    %2 = tpu.matmul %0, %1, %cst {dimension_numbers = #tpu.dot_dimension_numbers<[1], [0], [0], [1], [0, 0, 1, 1], [], []>} : vector<8x32xf32>, vector<32x128xf32>, vector<8x128xf32> -> vector<8x128xf32>
    %c0_3 = arith.constant 0 : index
    %c0_4 = arith.constant 0 : index
    %3 = vector.load %arg2[%c0_3, %c0_4] : memref<8x1xf32, #tpu.memory_space<vmem>>, vector<8x1xf32>
    %4 = vector.broadcast %3 : vector<8x1xf32> to vector<8x128xf32>
    %5 = arith.addf %2, %4 : vector<8x128xf32>
    %cst_5 = arith.constant 0.000000e+00 : f32
    %6 = vector.broadcast %cst_5 : f32 to vector<8x128xf32>
    %7 = arith.maximumf %5, %6 : vector<8x128xf32>
    %c0_6 = arith.constant 0 : index
    %c0_7 = arith.constant 0 : index
    %8 = vector.load %arg4[%c0_6, %c0_7] : memref<8x128xf32, #tpu.memory_space<vmem>>, vector<8x128xf32>
    tpu.vector_store %arg4[%c0_6, %c0_7], %7 {strides = array<i32>} : memref<8x128xf32, #tpu.memory_space<vmem>>, vector<8x128xf32>,
    return
  }
  func.func @transform_0(%arg0: i32) -> (i32, i32) {
    %c0_i32 = arith.constant 0 : i32
    %c0_i32_0 = arith.constant 0 : i32
    %c0_i32_1 = arith.constant 0 : i32
    return %c0_i32, %c0_i32_0 : i32, i32
  }
  func.func @transform_1(%arg0: i32) -> (i32, i32) {
    %c0_i32 = arith.constant 0 : i32
    %c0_i32_0 = arith.constant 0 : i32
    %c0_i32_1 = arith.constant 0 : i32
    return %c0_i32, %c0_i32_0 : i32, i32
  }
  func.func @transform_2(%arg0: i32) -> (i32, i32) {
    %c0_i32 = arith.constant 0 : i32
    %c0_i32_0 = arith.constant 0 : i32
    return %c0_i32, %arg0 : i32, i32
  }
  func.func @transform_3(%arg0: i32) -> (i32, i32) {
    %c0_i32 = arith.constant 0 : i32
    %c0_i32_0 = arith.constant 0 : i32
    return %c0_i32, %arg0 : i32, i32
  }
}

module attributes {stable_mosaic.version = 11 : i64} {
  func.func @kernel(%arg0: i32, %arg1: memref<8x216xf32, #tpu.memory_space<vmem>>, %arg2: memref<8x1xf32, #tpu.memory_space<vmem>>, %arg3: memref<1x512xf32, #tpu.memory_space<vmem>>, %arg4: memref<8x512xf32, #tpu.memory_space<vmem>>, %arg5: memref<8x512xf32, #tpu.memory_space<vmem>>, %arg6: memref<8x512xf32, #tpu.memory_space<vmem>>, %arg7: memref<216x512xf32, #tpu.memory_space<vmem>>) attributes {dimension_semantics = [#tpu.dimension_semantics<parallel>], iteration_bounds = array<i64: 1>, scalar_prefetch = 0 : i64, scratch_operands = 1 : i64, tpu.core_type = #tpu.core_type<tc>, window_params = [{pipeline_mode = #tpu.pipeline_mode<synchronous>, transform_indices = @transform_0, window_bounds = array<i64: 8, 216>}, {pipeline_mode = #tpu.pipeline_mode<synchronous>, transform_indices = @transform_1, window_bounds = array<i64: 8, 1>}, {transform_indices = @transform_2, window_bounds = array<i64: 1, 512>}, {transform_indices = @transform_3, window_bounds = array<i64: 8, 512>}, {transform_indices = @transform_4, window_bounds = array<i64: 8, 512>}, {transform_indices = @transform_5, window_bounds = array<i64: 8, 512>}]} {
    %c0 = arith.constant 0 : index
    %c0_0 = arith.constant 0 : index
    %0 = vector.load %arg4[%c0, %c0_0] : memref<8x512xf32, #tpu.memory_space<vmem>>, vector<8x512xf32>
    %c0_1 = arith.constant 0 : index
    %c0_2 = arith.constant 0 : index
    %1 = vector.load %arg7[%c0_1, %c0_2] : memref<216x512xf32, #tpu.memory_space<vmem>>, vector<8x512xf32>
    tpu.vector_store %arg7[%c0_1, %c0_2], %0 {strides = array<i32>} : memref<216x512xf32, #tpu.memory_space<vmem>>, vector<8x512xf32>,
    %c0_3 = arith.constant 0 : index
    %c1 = arith.constant 1 : index
    %2 = vector.load %arg4[%c0_3, %c1] : memref<8x512xf32, #tpu.memory_space<vmem>>, vector<8x511xf32>
    %c8 = arith.constant 8 : index
    %c0_4 = arith.constant 0 : index
    %3 = vector.load %arg7[%c8, %c0_4] : memref<216x512xf32, #tpu.memory_space<vmem>>, vector<8x511xf32>
    tpu.vector_store %arg7[%c8, %c0_4], %2 {strides = array<i32>} : memref<216x512xf32, #tpu.memory_space<vmem>>, vector<8x511xf32>,
    %c0_5 = arith.constant 0 : index
    %c0_6 = arith.constant 0 : index
    %4 = vector.load %arg5[%c0_5, %c0_6] : memref<8x512xf32, #tpu.memory_space<vmem>>, vector<8x1xf32>
    %c8_7 = arith.constant 8 : index
    %c511 = arith.constant 511 : index
    %5 = vector.load %arg7[%c8_7, %c511] : memref<216x512xf32, #tpu.memory_space<vmem>>, vector<8x1xf32>
    tpu.vector_store %arg7[%c8_7, %c511], %4 {strides = array<i32>} : memref<216x512xf32, #tpu.memory_space<vmem>>, vector<8x1xf32>,
    %c0_8 = arith.constant 0 : index
    %c2 = arith.constant 2 : index
    %6 = vector.load %arg4[%c0_8, %c2] : memref<8x512xf32, #tpu.memory_space<vmem>>, vector<8x510xf32>
    %c16 = arith.constant 16 : index
    %c0_9 = arith.constant 0 : index
    %7 = vector.load %arg7[%c16, %c0_9] : memref<216x512xf32, #tpu.memory_space<vmem>>, vector<8x510xf32>
    tpu.vector_store %arg7[%c16, %c0_9], %6 {strides = array<i32>} : memref<216x512xf32, #tpu.memory_space<vmem>>, vector<8x510xf32>,
    %c0_10 = arith.constant 0 : index
    %c0_11 = arith.constant 0 : index
    %8 = vector.load %arg5[%c0_10, %c0_11] : memref<8x512xf32, #tpu.memory_space<vmem>>, vector<8x2xf32>
    %c16_12 = arith.constant 16 : index
    %c510 = arith.constant 510 : index
    %9 = vector.load %arg7[%c16_12, %c510] : memref<216x512xf32, #tpu.memory_space<vmem>>, vector<8x2xf32>
    tpu.vector_store %arg7[%c16_12, %c510], %8 {strides = array<i32>} : memref<216x512xf32, #tpu.memory_space<vmem>>, vector<8x2xf32>,
    %c0_13 = arith.constant 0 : index
    %c6 = arith.constant 6 : index
    %10 = vector.load %arg4[%c0_13, %c6] : memref<8x512xf32, #tpu.memory_space<vmem>>, vector<8x506xf32>
    %c24 = arith.constant 24 : index
    %c0_14 = arith.constant 0 : index
    %11 = vector.load %arg7[%c24, %c0_14] : memref<216x512xf32, #tpu.memory_space<vmem>>, vector<8x506xf32>
    tpu.vector_store %arg7[%c24, %c0_14], %10 {strides = array<i32>} : memref<216x512xf32, #tpu.memory_space<vmem>>, vector<8x506xf32>,
    %c0_15 = arith.constant 0 : index
    %c0_16 = arith.constant 0 : index
    %12 = vector.load %arg5[%c0_15, %c0_16] : memref<8x512xf32, #tpu.memory_space<vmem>>, vector<8x6xf32>
    %c24_17 = arith.constant 24 : index
    %c506 = arith.constant 506 : index
    %13 = vector.load %arg7[%c24_17, %c506] : memref<216x512xf32, #tpu.memory_space<vmem>>, vector<8x6xf32>
    tpu.vector_store %arg7[%c24_17, %c506], %12 {strides = array<i32>} : memref<216x512xf32, #tpu.memory_space<vmem>>, vector<8x6xf32>,
    %c0_18 = arith.constant 0 : index
    %c7 = arith.constant 7 : index
    %14 = vector.load %arg4[%c0_18, %c7] : memref<8x512xf32, #tpu.memory_space<vmem>>, vector<8x505xf32>
    %c32 = arith.constant 32 : index
    %c0_19 = arith.constant 0 : index
    %15 = vector.load %arg7[%c32, %c0_19] : memref<216x512xf32, #tpu.memory_space<vmem>>, vector<8x505xf32>
    tpu.vector_store %arg7[%c32, %c0_19], %14 {strides = array<i32>} : memref<216x512xf32, #tpu.memory_space<vmem>>, vector<8x505xf32>,
    %c0_20 = arith.constant 0 : index
    %c0_21 = arith.constant 0 : index
    %16 = vector.load %arg5[%c0_20, %c0_21] : memref<8x512xf32, #tpu.memory_space<vmem>>, vector<8x7xf32>
    %c32_22 = arith.constant 32 : index
    %c505 = arith.constant 505 : index
    %17 = vector.load %arg7[%c32_22, %c505] : memref<216x512xf32, #tpu.memory_space<vmem>>, vector<8x7xf32>
    tpu.vector_store %arg7[%c32_22, %c505], %16 {strides = array<i32>} : memref<216x512xf32, #tpu.memory_space<vmem>>, vector<8x7xf32>,
    %c0_23 = arith.constant 0 : index
    %c8_24 = arith.constant 8 : index
    %18 = vector.load %arg4[%c0_23, %c8_24] : memref<8x512xf32, #tpu.memory_space<vmem>>, vector<8x504xf32>
    %c40 = arith.constant 40 : index
    %c0_25 = arith.constant 0 : index
    %19 = vector.load %arg7[%c40, %c0_25] : memref<216x512xf32, #tpu.memory_space<vmem>>, vector<8x504xf32>
    tpu.vector_store %arg7[%c40, %c0_25], %18 {strides = array<i32>} : memref<216x512xf32, #tpu.memory_space<vmem>>, vector<8x504xf32>,
    %c0_26 = arith.constant 0 : index
    %c0_27 = arith.constant 0 : index
    %20 = vector.load %arg5[%c0_26, %c0_27] : memref<8x512xf32, #tpu.memory_space<vmem>>, vector<8x8xf32>
    %c40_28 = arith.constant 40 : index
    %c504 = arith.constant 504 : index
    %21 = vector.load %arg7[%c40_28, %c504] : memref<216x512xf32, #tpu.memory_space<vmem>>, vector<8x8xf32>
    tpu.vector_store %arg7[%c40_28, %c504], %20 {strides = array<i32>} : memref<216x512xf32, #tpu.memory_space<vmem>>, vector<8x8xf32>,
    %c0_29 = arith.constant 0 : index
    %c12 = arith.constant 12 : index
    %22 = vector.load %arg4[%c0_29, %c12] : memref<8x512xf32, #tpu.memory_space<vmem>>, vector<8x500xf32>
    %c48 = arith.constant 48 : index
    %c0_30 = arith.constant 0 : index
    %23 = vector.load %arg7[%c48, %c0_30] : memref<216x512xf32, #tpu.memory_space<vmem>>, vector<8x500xf32>
    tpu.vector_store %arg7[%c48, %c0_30], %22 {strides = array<i32>} : memref<216x512xf32, #tpu.memory_space<vmem>>, vector<8x500xf32>,
    %c0_31 = arith.constant 0 : index
    %c0_32 = arith.constant 0 : index
    %24 = vector.load %arg5[%c0_31, %c0_32] : memref<8x512xf32, #tpu.memory_space<vmem>>, vector<8x12xf32>
    %c48_33 = arith.constant 48 : index
    %c500 = arith.constant 500 : index
    %25 = vector.load %arg7[%c48_33, %c500] : memref<216x512xf32, #tpu.memory_space<vmem>>, vector<8x12xf32>
    tpu.vector_store %arg7[%c48_33, %c500], %24 {strides = array<i32>} : memref<216x512xf32, #tpu.memory_space<vmem>>, vector<8x12xf32>,
    %c0_34 = arith.constant 0 : index
    %c13 = arith.constant 13 : index
    %26 = vector.load %arg4[%c0_34, %c13] : memref<8x512xf32, #tpu.memory_space<vmem>>, vector<8x499xf32>
    %c56 = arith.constant 56 : index
    %c0_35 = arith.constant 0 : index
    %27 = vector.load %arg7[%c56, %c0_35] : memref<216x512xf32, #tpu.memory_space<vmem>>, vector<8x499xf32>
    tpu.vector_store %arg7[%c56, %c0_35], %26 {strides = array<i32>} : memref<216x512xf32, #tpu.memory_space<vmem>>, vector<8x499xf32>,
    %c0_36 = arith.constant 0 : index
    %c0_37 = arith.constant 0 : index
    %28 = vector.load %arg5[%c0_36, %c0_37] : memref<8x512xf32, #tpu.memory_space<vmem>>, vector<8x13xf32>
    %c56_38 = arith.constant 56 : index
    %c499 = arith.constant 499 : index
    %29 = vector.load %arg7[%c56_38, %c499] : memref<216x512xf32, #tpu.memory_space<vmem>>, vector<8x13xf32>
    tpu.vector_store %arg7[%c56_38, %c499], %28 {strides = array<i32>} : memref<216x512xf32, #tpu.memory_space<vmem>>, vector<8x13xf32>,
    %c0_39 = arith.constant 0 : index
    %c14 = arith.constant 14 : index
    %30 = vector.load %arg4[%c0_39, %c14] : memref<8x512xf32, #tpu.memory_space<vmem>>, vector<8x498xf32>
    %c64 = arith.constant 64 : index
    %c0_40 = arith.constant 0 : index
    %31 = vector.load %arg7[%c64, %c0_40] : memref<216x512xf32, #tpu.memory_space<vmem>>, vector<8x498xf32>
    tpu.vector_store %arg7[%c64, %c0_40], %30 {strides = array<i32>} : memref<216x512xf32, #tpu.memory_space<vmem>>, vector<8x498xf32>,
    %c0_41 = arith.constant 0 : index
    %c0_42 = arith.constant 0 : index
    %32 = vector.load %arg5[%c0_41, %c0_42] : memref<8x512xf32, #tpu.memory_space<vmem>>, vector<8x14xf32>
    %c64_43 = arith.constant 64 : index
    %c498 = arith.constant 498 : index
    %33 = vector.load %arg7[%c64_43, %c498] : memref<216x512xf32, #tpu.memory_space<vmem>>, vector<8x14xf32>
    tpu.vector_store %arg7[%c64_43, %c498], %32 {strides = array<i32>} : memref<216x512xf32, #tpu.memory_space<vmem>>, vector<8x14xf32>,
    %c0_44 = arith.constant 0 : index
    %c36 = arith.constant 36 : index
    %34 = vector.load %arg4[%c0_44, %c36] : memref<8x512xf32, #tpu.memory_space<vmem>>, vector<8x476xf32>
    %c72 = arith.constant 72 : index
    %c0_45 = arith.constant 0 : index
    %35 = vector.load %arg7[%c72, %c0_45] : memref<216x512xf32, #tpu.memory_space<vmem>>, vector<8x476xf32>
    tpu.vector_store %arg7[%c72, %c0_45], %34 {strides = array<i32>} : memref<216x512xf32, #tpu.memory_space<vmem>>, vector<8x476xf32>,
    %c0_46 = arith.constant 0 : index
    %c0_47 = arith.constant 0 : index
    %36 = vector.load %arg5[%c0_46, %c0_47] : memref<8x512xf32, #tpu.memory_space<vmem>>, vector<8x36xf32>
    %c72_48 = arith.constant 72 : index
    %c476 = arith.constant 476 : index
    %37 = vector.load %arg7[%c72_48, %c476] : memref<216x512xf32, #tpu.memory_space<vmem>>, vector<8x36xf32>
    tpu.vector_store %arg7[%c72_48, %c476], %36 {strides = array<i32>} : memref<216x512xf32, #tpu.memory_space<vmem>>, vector<8x36xf32>,
    %c0_49 = arith.constant 0 : index
    %c37 = arith.constant 37 : index
    %38 = vector.load %arg4[%c0_49, %c37] : memref<8x512xf32, #tpu.memory_space<vmem>>, vector<8x475xf32>
    %c80 = arith.constant 80 : index
    %c0_50 = arith.constant 0 : index
    %39 = vector.load %arg7[%c80, %c0_50] : memref<216x512xf32, #tpu.memory_space<vmem>>, vector<8x475xf32>
    tpu.vector_store %arg7[%c80, %c0_50], %38 {strides = array<i32>} : memref<216x512xf32, #tpu.memory_space<vmem>>, vector<8x475xf32>,
    %c0_51 = arith.constant 0 : index
    %c0_52 = arith.constant 0 : index
    %40 = vector.load %arg5[%c0_51, %c0_52] : memref<8x512xf32, #tpu.memory_space<vmem>>, vector<8x37xf32>
    %c80_53 = arith.constant 80 : index
    %c475 = arith.constant 475 : index
    %41 = vector.load %arg7[%c80_53, %c475] : memref<216x512xf32, #tpu.memory_space<vmem>>, vector<8x37xf32>
    tpu.vector_store %arg7[%c80_53, %c475], %40 {strides = array<i32>} : memref<216x512xf32, #tpu.memory_space<vmem>>, vector<8x37xf32>,
    %c0_54 = arith.constant 0 : index
    %c38 = arith.constant 38 : index
    %42 = vector.load %arg4[%c0_54, %c38] : memref<8x512xf32, #tpu.memory_space<vmem>>, vector<8x474xf32>
    %c88 = arith.constant 88 : index
    %c0_55 = arith.constant 0 : index
    %43 = vector.load %arg7[%c88, %c0_55] : memref<216x512xf32, #tpu.memory_space<vmem>>, vector<8x474xf32>
    tpu.vector_store %arg7[%c88, %c0_55], %42 {strides = array<i32>} : memref<216x512xf32, #tpu.memory_space<vmem>>, vector<8x474xf32>,
    %c0_56 = arith.constant 0 : index
    %c0_57 = arith.constant 0 : index
    %44 = vector.load %arg5[%c0_56, %c0_57] : memref<8x512xf32, #tpu.memory_space<vmem>>, vector<8x38xf32>
    %c88_58 = arith.constant 88 : index
    %c474 = arith.constant 474 : index
    %45 = vector.load %arg7[%c88_58, %c474] : memref<216x512xf32, #tpu.memory_space<vmem>>, vector<8x38xf32>
    tpu.vector_store %arg7[%c88_58, %c474], %44 {strides = array<i32>} : memref<216x512xf32, #tpu.memory_space<vmem>>, vector<8x38xf32>,
    %c0_59 = arith.constant 0 : index
    %c42 = arith.constant 42 : index
    %46 = vector.load %arg4[%c0_59, %c42] : memref<8x512xf32, #tpu.memory_space<vmem>>, vector<8x470xf32>
    %c96 = arith.constant 96 : index
    %c0_60 = arith.constant 0 : index
    %47 = vector.load %arg7[%c96, %c0_60] : memref<216x512xf32, #tpu.memory_space<vmem>>, vector<8x470xf32>
    tpu.vector_store %arg7[%c96, %c0_60], %46 {strides = array<i32>} : memref<216x512xf32, #tpu.memory_space<vmem>>, vector<8x470xf32>,
    %c0_61 = arith.constant 0 : index
    %c0_62 = arith.constant 0 : index
    %48 = vector.load %arg5[%c0_61, %c0_62] : memref<8x512xf32, #tpu.memory_space<vmem>>, vector<8x42xf32>
    %c96_63 = arith.constant 96 : index
    %c470 = arith.constant 470 : index
    %49 = vector.load %arg7[%c96_63, %c470] : memref<216x512xf32, #tpu.memory_space<vmem>>, vector<8x42xf32>
    tpu.vector_store %arg7[%c96_63, %c470], %48 {strides = array<i32>} : memref<216x512xf32, #tpu.memory_space<vmem>>, vector<8x42xf32>,
    %c0_64 = arith.constant 0 : index
    %c43 = arith.constant 43 : index
    %50 = vector.load %arg4[%c0_64, %c43] : memref<8x512xf32, #tpu.memory_space<vmem>>, vector<8x469xf32>
    %c104 = arith.constant 104 : index
    %c0_65 = arith.constant 0 : index
    %51 = vector.load %arg7[%c104, %c0_65] : memref<216x512xf32, #tpu.memory_space<vmem>>, vector<8x469xf32>
    tpu.vector_store %arg7[%c104, %c0_65], %50 {strides = array<i32>} : memref<216x512xf32, #tpu.memory_space<vmem>>, vector<8x469xf32>,
    %c0_66 = arith.constant 0 : index
    %c0_67 = arith.constant 0 : index
    %52 = vector.load %arg5[%c0_66, %c0_67] : memref<8x512xf32, #tpu.memory_space<vmem>>, vector<8x43xf32>
    %c104_68 = arith.constant 104 : index
    %c469 = arith.constant 469 : index
    %53 = vector.load %arg7[%c104_68, %c469] : memref<216x512xf32, #tpu.memory_space<vmem>>, vector<8x43xf32>
    tpu.vector_store %arg7[%c104_68, %c469], %52 {strides = array<i32>} : memref<216x512xf32, #tpu.memory_space<vmem>>, vector<8x43xf32>,
    %c0_69 = arith.constant 0 : index
    %c44 = arith.constant 44 : index
    %54 = vector.load %arg4[%c0_69, %c44] : memref<8x512xf32, #tpu.memory_space<vmem>>, vector<8x468xf32>
    %c112 = arith.constant 112 : index
    %c0_70 = arith.constant 0 : index
    %55 = vector.load %arg7[%c112, %c0_70] : memref<216x512xf32, #tpu.memory_space<vmem>>, vector<8x468xf32>
    tpu.vector_store %arg7[%c112, %c0_70], %54 {strides = array<i32>} : memref<216x512xf32, #tpu.memory_space<vmem>>, vector<8x468xf32>,
    %c0_71 = arith.constant 0 : index
    %c0_72 = arith.constant 0 : index
    %56 = vector.load %arg5[%c0_71, %c0_72] : memref<8x512xf32, #tpu.memory_space<vmem>>, vector<8x44xf32>
    %c112_73 = arith.constant 112 : index
    %c468 = arith.constant 468 : index
    %57 = vector.load %arg7[%c112_73, %c468] : memref<216x512xf32, #tpu.memory_space<vmem>>, vector<8x44xf32>
    tpu.vector_store %arg7[%c112_73, %c468], %56 {strides = array<i32>} : memref<216x512xf32, #tpu.memory_space<vmem>>, vector<8x44xf32>,
    %c0_74 = arith.constant 0 : index
    %c48_75 = arith.constant 48 : index
    %58 = vector.load %arg4[%c0_74, %c48_75] : memref<8x512xf32, #tpu.memory_space<vmem>>, vector<8x464xf32>
    %c120 = arith.constant 120 : index
    %c0_76 = arith.constant 0 : index
    %59 = vector.load %arg7[%c120, %c0_76] : memref<216x512xf32, #tpu.memory_space<vmem>>, vector<8x464xf32>
    tpu.vector_store %arg7[%c120, %c0_76], %58 {strides = array<i32>} : memref<216x512xf32, #tpu.memory_space<vmem>>, vector<8x464xf32>,
    %c0_77 = arith.constant 0 : index
    %c0_78 = arith.constant 0 : index
    %60 = vector.load %arg5[%c0_77, %c0_78] : memref<8x512xf32, #tpu.memory_space<vmem>>, vector<8x48xf32>
    %c120_79 = arith.constant 120 : index
    %c464 = arith.constant 464 : index
    %61 = vector.load %arg7[%c120_79, %c464] : memref<216x512xf32, #tpu.memory_space<vmem>>, vector<8x48xf32>
    tpu.vector_store %arg7[%c120_79, %c464], %60 {strides = array<i32>} : memref<216x512xf32, #tpu.memory_space<vmem>>, vector<8x48xf32>,
    %c0_80 = arith.constant 0 : index
    %c49 = arith.constant 49 : index
    %62 = vector.load %arg4[%c0_80, %c49] : memref<8x512xf32, #tpu.memory_space<vmem>>, vector<8x463xf32>
    %c128 = arith.constant 128 : index
    %c0_81 = arith.constant 0 : index
    %63 = vector.load %arg7[%c128, %c0_81] : memref<216x512xf32, #tpu.memory_space<vmem>>, vector<8x463xf32>
    tpu.vector_store %arg7[%c128, %c0_81], %62 {strides = array<i32>} : memref<216x512xf32, #tpu.memory_space<vmem>>, vector<8x463xf32>,
    %c0_82 = arith.constant 0 : index
    %c0_83 = arith.constant 0 : index
    %64 = vector.load %arg5[%c0_82, %c0_83] : memref<8x512xf32, #tpu.memory_space<vmem>>, vector<8x49xf32>
    %c128_84 = arith.constant 128 : index
    %c463 = arith.constant 463 : index
    %65 = vector.load %arg7[%c128_84, %c463] : memref<216x512xf32, #tpu.memory_space<vmem>>, vector<8x49xf32>
    tpu.vector_store %arg7[%c128_84, %c463], %64 {strides = array<i32>} : memref<216x512xf32, #tpu.memory_space<vmem>>, vector<8x49xf32>,
    %c0_85 = arith.constant 0 : index
    %c50 = arith.constant 50 : index
    %66 = vector.load %arg4[%c0_85, %c50] : memref<8x512xf32, #tpu.memory_space<vmem>>, vector<8x462xf32>
    %c136 = arith.constant 136 : index
    %c0_86 = arith.constant 0 : index
    %67 = vector.load %arg7[%c136, %c0_86] : memref<216x512xf32, #tpu.memory_space<vmem>>, vector<8x462xf32>
    tpu.vector_store %arg7[%c136, %c0_86], %66 {strides = array<i32>} : memref<216x512xf32, #tpu.memory_space<vmem>>, vector<8x462xf32>,
    %c0_87 = arith.constant 0 : index
    %c0_88 = arith.constant 0 : index
    %68 = vector.load %arg5[%c0_87, %c0_88] : memref<8x512xf32, #tpu.memory_space<vmem>>, vector<8x50xf32>
    %c136_89 = arith.constant 136 : index
    %c462 = arith.constant 462 : index
    %69 = vector.load %arg7[%c136_89, %c462] : memref<216x512xf32, #tpu.memory_space<vmem>>, vector<8x50xf32>
    tpu.vector_store %arg7[%c136_89, %c462], %68 {strides = array<i32>} : memref<216x512xf32, #tpu.memory_space<vmem>>, vector<8x50xf32>,
    %c0_90 = arith.constant 0 : index
    %c72_91 = arith.constant 72 : index
    %70 = vector.load %arg4[%c0_90, %c72_91] : memref<8x512xf32, #tpu.memory_space<vmem>>, vector<8x440xf32>
    %c144 = arith.constant 144 : index
    %c0_92 = arith.constant 0 : index
    %71 = vector.load %arg7[%c144, %c0_92] : memref<216x512xf32, #tpu.memory_space<vmem>>, vector<8x440xf32>
    tpu.vector_store %arg7[%c144, %c0_92], %70 {strides = array<i32>} : memref<216x512xf32, #tpu.memory_space<vmem>>, vector<8x440xf32>,
    %c0_93 = arith.constant 0 : index
    %c0_94 = arith.constant 0 : index
    %72 = vector.load %arg5[%c0_93, %c0_94] : memref<8x512xf32, #tpu.memory_space<vmem>>, vector<8x72xf32>
    %c144_95 = arith.constant 144 : index
    %c440 = arith.constant 440 : index
    %73 = vector.load %arg7[%c144_95, %c440] : memref<216x512xf32, #tpu.memory_space<vmem>>, vector<8x72xf32>
    tpu.vector_store %arg7[%c144_95, %c440], %72 {strides = array<i32>} : memref<216x512xf32, #tpu.memory_space<vmem>>, vector<8x72xf32>,
    %c0_96 = arith.constant 0 : index
    %c73 = arith.constant 73 : index
    %74 = vector.load %arg4[%c0_96, %c73] : memref<8x512xf32, #tpu.memory_space<vmem>>, vector<8x439xf32>
    %c152 = arith.constant 152 : index
    %c0_97 = arith.constant 0 : index
    %75 = vector.load %arg7[%c152, %c0_97] : memref<216x512xf32, #tpu.memory_space<vmem>>, vector<8x439xf32>
    tpu.vector_store %arg7[%c152, %c0_97], %74 {strides = array<i32>} : memref<216x512xf32, #tpu.memory_space<vmem>>, vector<8x439xf32>,
    %c0_98 = arith.constant 0 : index
    %c0_99 = arith.constant 0 : index
    %76 = vector.load %arg5[%c0_98, %c0_99] : memref<8x512xf32, #tpu.memory_space<vmem>>, vector<8x73xf32>
    %c152_100 = arith.constant 152 : index
    %c439 = arith.constant 439 : index
    %77 = vector.load %arg7[%c152_100, %c439] : memref<216x512xf32, #tpu.memory_space<vmem>>, vector<8x73xf32>
    tpu.vector_store %arg7[%c152_100, %c439], %76 {strides = array<i32>} : memref<216x512xf32, #tpu.memory_space<vmem>>, vector<8x73xf32>,
    %c0_101 = arith.constant 0 : index
    %c74 = arith.constant 74 : index
    %78 = vector.load %arg4[%c0_101, %c74] : memref<8x512xf32, #tpu.memory_space<vmem>>, vector<8x438xf32>
    %c160 = arith.constant 160 : index
    %c0_102 = arith.constant 0 : index
    %79 = vector.load %arg7[%c160, %c0_102] : memref<216x512xf32, #tpu.memory_space<vmem>>, vector<8x438xf32>
    tpu.vector_store %arg7[%c160, %c0_102], %78 {strides = array<i32>} : memref<216x512xf32, #tpu.memory_space<vmem>>, vector<8x438xf32>,
    %c0_103 = arith.constant 0 : index
    %c0_104 = arith.constant 0 : index
    %80 = vector.load %arg5[%c0_103, %c0_104] : memref<8x512xf32, #tpu.memory_space<vmem>>, vector<8x74xf32>
    %c160_105 = arith.constant 160 : index
    %c438 = arith.constant 438 : index
    %81 = vector.load %arg7[%c160_105, %c438] : memref<216x512xf32, #tpu.memory_space<vmem>>, vector<8x74xf32>
    tpu.vector_store %arg7[%c160_105, %c438], %80 {strides = array<i32>} : memref<216x512xf32, #tpu.memory_space<vmem>>, vector<8x74xf32>,
    %c0_106 = arith.constant 0 : index
    %c78 = arith.constant 78 : index
    %82 = vector.load %arg4[%c0_106, %c78] : memref<8x512xf32, #tpu.memory_space<vmem>>, vector<8x434xf32>
    %c168 = arith.constant 168 : index
    %c0_107 = arith.constant 0 : index
    %83 = vector.load %arg7[%c168, %c0_107] : memref<216x512xf32, #tpu.memory_space<vmem>>, vector<8x434xf32>
    tpu.vector_store %arg7[%c168, %c0_107], %82 {strides = array<i32>} : memref<216x512xf32, #tpu.memory_space<vmem>>, vector<8x434xf32>,
    %c0_108 = arith.constant 0 : index
    %c0_109 = arith.constant 0 : index
    %84 = vector.load %arg5[%c0_108, %c0_109] : memref<8x512xf32, #tpu.memory_space<vmem>>, vector<8x78xf32>
    %c168_110 = arith.constant 168 : index
    %c434 = arith.constant 434 : index
    %85 = vector.load %arg7[%c168_110, %c434] : memref<216x512xf32, #tpu.memory_space<vmem>>, vector<8x78xf32>
    tpu.vector_store %arg7[%c168_110, %c434], %84 {strides = array<i32>} : memref<216x512xf32, #tpu.memory_space<vmem>>, vector<8x78xf32>,
    %c0_111 = arith.constant 0 : index
    %c79 = arith.constant 79 : index
    %86 = vector.load %arg4[%c0_111, %c79] : memref<8x512xf32, #tpu.memory_space<vmem>>, vector<8x433xf32>
    %c176 = arith.constant 176 : index
    %c0_112 = arith.constant 0 : index
    %87 = vector.load %arg7[%c176, %c0_112] : memref<216x512xf32, #tpu.memory_space<vmem>>, vector<8x433xf32>
    tpu.vector_store %arg7[%c176, %c0_112], %86 {strides = array<i32>} : memref<216x512xf32, #tpu.memory_space<vmem>>, vector<8x433xf32>,
    %c0_113 = arith.constant 0 : index
    %c0_114 = arith.constant 0 : index
    %88 = vector.load %arg5[%c0_113, %c0_114] : memref<8x512xf32, #tpu.memory_space<vmem>>, vector<8x79xf32>
    %c176_115 = arith.constant 176 : index
    %c433 = arith.constant 433 : index
    %89 = vector.load %arg7[%c176_115, %c433] : memref<216x512xf32, #tpu.memory_space<vmem>>, vector<8x79xf32>
    tpu.vector_store %arg7[%c176_115, %c433], %88 {strides = array<i32>} : memref<216x512xf32, #tpu.memory_space<vmem>>, vector<8x79xf32>,
    %c0_116 = arith.constant 0 : index
    %c80_117 = arith.constant 80 : index
    %90 = vector.load %arg4[%c0_116, %c80_117] : memref<8x512xf32, #tpu.memory_space<vmem>>, vector<8x432xf32>
    %c184 = arith.constant 184 : index
    %c0_118 = arith.constant 0 : index
    %91 = vector.load %arg7[%c184, %c0_118] : memref<216x512xf32, #tpu.memory_space<vmem>>, vector<8x432xf32>
    tpu.vector_store %arg7[%c184, %c0_118], %90 {strides = array<i32>} : memref<216x512xf32, #tpu.memory_space<vmem>>, vector<8x432xf32>,
    %c0_119 = arith.constant 0 : index
    %c0_120 = arith.constant 0 : index
    %92 = vector.load %arg5[%c0_119, %c0_120] : memref<8x512xf32, #tpu.memory_space<vmem>>, vector<8x80xf32>
    %c184_121 = arith.constant 184 : index
    %c432 = arith.constant 432 : index
    %93 = vector.load %arg7[%c184_121, %c432] : memref<216x512xf32, #tpu.memory_space<vmem>>, vector<8x80xf32>
    tpu.vector_store %arg7[%c184_121, %c432], %92 {strides = array<i32>} : memref<216x512xf32, #tpu.memory_space<vmem>>, vector<8x80xf32>,
    %c0_122 = arith.constant 0 : index
    %c84 = arith.constant 84 : index
    %94 = vector.load %arg4[%c0_122, %c84] : memref<8x512xf32, #tpu.memory_space<vmem>>, vector<8x428xf32>
    %c192 = arith.constant 192 : index
    %c0_123 = arith.constant 0 : index
    %95 = vector.load %arg7[%c192, %c0_123] : memref<216x512xf32, #tpu.memory_space<vmem>>, vector<8x428xf32>
    tpu.vector_store %arg7[%c192, %c0_123], %94 {strides = array<i32>} : memref<216x512xf32, #tpu.memory_space<vmem>>, vector<8x428xf32>,
    %c0_124 = arith.constant 0 : index
    %c0_125 = arith.constant 0 : index
    %96 = vector.load %arg5[%c0_124, %c0_125] : memref<8x512xf32, #tpu.memory_space<vmem>>, vector<8x84xf32>
    %c192_126 = arith.constant 192 : index
    %c428 = arith.constant 428 : index
    %97 = vector.load %arg7[%c192_126, %c428] : memref<216x512xf32, #tpu.memory_space<vmem>>, vector<8x84xf32>
    tpu.vector_store %arg7[%c192_126, %c428], %96 {strides = array<i32>} : memref<216x512xf32, #tpu.memory_space<vmem>>, vector<8x84xf32>,
    %c0_127 = arith.constant 0 : index
    %c85 = arith.constant 85 : index
    %98 = vector.load %arg4[%c0_127, %c85] : memref<8x512xf32, #tpu.memory_space<vmem>>, vector<8x427xf32>
    %c200 = arith.constant 200 : index
    %c0_128 = arith.constant 0 : index
    %99 = vector.load %arg7[%c200, %c0_128] : memref<216x512xf32, #tpu.memory_space<vmem>>, vector<8x427xf32>
    tpu.vector_store %arg7[%c200, %c0_128], %98 {strides = array<i32>} : memref<216x512xf32, #tpu.memory_space<vmem>>, vector<8x427xf32>,
    %c0_129 = arith.constant 0 : index
    %c0_130 = arith.constant 0 : index
    %100 = vector.load %arg5[%c0_129, %c0_130] : memref<8x512xf32, #tpu.memory_space<vmem>>, vector<8x85xf32>
    %c200_131 = arith.constant 200 : index
    %c427 = arith.constant 427 : index
    %101 = vector.load %arg7[%c200_131, %c427] : memref<216x512xf32, #tpu.memory_space<vmem>>, vector<8x85xf32>
    tpu.vector_store %arg7[%c200_131, %c427], %100 {strides = array<i32>} : memref<216x512xf32, #tpu.memory_space<vmem>>, vector<8x85xf32>,
    %c0_132 = arith.constant 0 : index
    %c86 = arith.constant 86 : index
    %102 = vector.load %arg4[%c0_132, %c86] : memref<8x512xf32, #tpu.memory_space<vmem>>, vector<8x426xf32>
    %c208 = arith.constant 208 : index
    %c0_133 = arith.constant 0 : index
    %103 = vector.load %arg7[%c208, %c0_133] : memref<216x512xf32, #tpu.memory_space<vmem>>, vector<8x426xf32>
    tpu.vector_store %arg7[%c208, %c0_133], %102 {strides = array<i32>} : memref<216x512xf32, #tpu.memory_space<vmem>>, vector<8x426xf32>,
    %c0_134 = arith.constant 0 : index
    %c0_135 = arith.constant 0 : index
    %104 = vector.load %arg5[%c0_134, %c0_135] : memref<8x512xf32, #tpu.memory_space<vmem>>, vector<8x86xf32>
    %c208_136 = arith.constant 208 : index
    %c426 = arith.constant 426 : index
    %105 = vector.load %arg7[%c208_136, %c426] : memref<216x512xf32, #tpu.memory_space<vmem>>, vector<8x86xf32>
    tpu.vector_store %arg7[%c208_136, %c426], %104 {strides = array<i32>} : memref<216x512xf32, #tpu.memory_space<vmem>>, vector<8x86xf32>,
    %c0_137 = arith.constant 0 : index
    %c0_138 = arith.constant 0 : index
    %106 = vector.load %arg1[%c0_137, %c0_138] : memref<8x216xf32, #tpu.memory_space<vmem>>, vector<8x216xf32>
    %c0_139 = arith.constant 0 : index
    %c0_140 = arith.constant 0 : index
    %107 = vector.load %arg7[%c0_139, %c0_140] : memref<216x512xf32, #tpu.memory_space<vmem>>, vector<216x512xf32>
    %cst = arith.constant dense<0.000000e+00> : vector<8x512xf32>
    %108 = tpu.matmul %106, %107, %cst {dimension_numbers = #tpu.dot_dimension_numbers<[1], [0], [0], [1], [0, 0, 1, 1], [], []>} : vector<8x216xf32>, vector<216x512xf32>, vector<8x512xf32> -> vector<8x512xf32>
    %c0_141 = arith.constant 0 : index
    %c0_142 = arith.constant 0 : index
    %109 = vector.load %arg2[%c0_141, %c0_142] : memref<8x1xf32, #tpu.memory_space<vmem>>, vector<8x1xf32>
    %110 = vector.broadcast %109 : vector<8x1xf32> to vector<8x512xf32>
    %111 = arith.addf %108, %110 : vector<8x512xf32>
    %cst_143 = arith.constant 0.000000e+00 : f32
    %112 = vector.broadcast %cst_143 : f32 to vector<8x512xf32>
    %113 = arith.maximumf %111, %112 : vector<8x512xf32>
    %c0_144 = arith.constant 0 : index
    %c0_145 = arith.constant 0 : index
    %114 = vector.load %arg3[%c0_144, %c0_145] : memref<1x512xf32, #tpu.memory_space<vmem>>, vector<1x512xf32>
    %115 = vector.broadcast %114 : vector<1x512xf32> to vector<8x512xf32>
    %116 = arith.mulf %113, %115 : vector<8x512xf32>
    %c0_146 = arith.constant 0 : index
    %c0_147 = arith.constant 0 : index
    %117 = vector.load %arg6[%c0_146, %c0_147] : memref<8x512xf32, #tpu.memory_space<vmem>>, vector<8x512xf32>
    tpu.vector_store %arg6[%c0_146, %c0_147], %116 {strides = array<i32>} : memref<8x512xf32, #tpu.memory_space<vmem>>, vector<8x512xf32>,
    return
  }
  func.func @transform_0(%arg0: i32) -> (i32, i32) {
    %c0_i32 = arith.constant 0 : i32
    %c0_i32_0 = arith.constant 0 : i32
    %c0_i32_1 = arith.constant 0 : i32
    return %c0_i32, %c0_i32_0 : i32, i32
  }
  func.func @transform_1(%arg0: i32) -> (i32, i32) {
    %c0_i32 = arith.constant 0 : i32
    %c0_i32_0 = arith.constant 0 : i32
    %c0_i32_1 = arith.constant 0 : i32
    return %c0_i32, %c0_i32_0 : i32, i32
  }
  func.func @transform_2(%arg0: i32) -> (i32, i32) {
    %c0_i32 = arith.constant 0 : i32
    %c0_i32_0 = arith.constant 0 : i32
    return %c0_i32, %arg0 : i32, i32
  }
  func.func @transform_3(%arg0: i32) -> (i32, i32) {
    %c0_i32 = arith.constant 0 : i32
    %c0_i32_0 = arith.constant 0 : i32
    return %c0_i32, %arg0 : i32, i32
  }
  func.func @transform_4(%arg0: i32) -> (i32, i32) {
    %c1_i32 = arith.constant 1 : i32
    %0 = arith.addi %arg0, %c1_i32 : i32
    %c0_i32 = arith.constant 0 : i32
    %c0_i32_0 = arith.constant 0 : i32
    return %c0_i32, %0 : i32, i32
  }
  func.func @transform_5(%arg0: i32) -> (i32, i32) {
    %c0_i32 = arith.constant 0 : i32
    %c0_i32_0 = arith.constant 0 : i32
    return %c0_i32, %arg0 : i32, i32
  }
}

module attributes {stable_mosaic.version = 11 : i64} {
  func.func @kernel(%arg0: i32, %arg1: memref<8x216xf32, #tpu.memory_space<vmem>>, %arg2: memref<8x1xf32, #tpu.memory_space<vmem>>, %arg3: memref<8x8xf32, #tpu.memory_space<vmem>>, %arg4: memref<8x1xf32, #tpu.memory_space<vmem>>, %arg5: memref<8x512xf32, #tpu.memory_space<vmem>>, %arg6: memref<1x512xf32, #tpu.memory_space<vmem>>, %arg7: memref<8x512xf32, #tpu.memory_space<vmem>>, %arg8: memref<8x512xf32, #tpu.memory_space<vmem>>, %arg9: memref<8x512xf32, #tpu.memory_space<vmem>>, %arg10: memref<216x512xf32, #tpu.memory_space<vmem>>) attributes {dimension_semantics = [#tpu.dimension_semantics<parallel>], iteration_bounds = array<i64: 1>, scalar_prefetch = 0 : i64, scratch_operands = 1 : i64, tpu.core_type = #tpu.core_type<tc>, window_params = [{pipeline_mode = #tpu.pipeline_mode<synchronous>, transform_indices = @transform_0, window_bounds = array<i64: 8, 216>}, {pipeline_mode = #tpu.pipeline_mode<synchronous>, transform_indices = @transform_1, window_bounds = array<i64: 8, 1>}, {pipeline_mode = #tpu.pipeline_mode<synchronous>, transform_indices = @transform_2, window_bounds = array<i64: 8, 8>}, {pipeline_mode = #tpu.pipeline_mode<synchronous>, transform_indices = @transform_3, window_bounds = array<i64: 8, 1>}, {transform_indices = @transform_4, window_bounds = array<i64: 8, 512>}, {transform_indices = @transform_5, window_bounds = array<i64: 1, 512>}, {transform_indices = @transform_6, window_bounds = array<i64: 8, 512>}, {transform_indices = @transform_7, window_bounds = array<i64: 8, 512>}, {transform_indices = @transform_8, window_bounds = array<i64: 8, 512>}]} {
    %c0 = arith.constant 0 : index
    %c0_0 = arith.constant 0 : index
    %0 = vector.load %arg7[%c0, %c0_0] : memref<8x512xf32, #tpu.memory_space<vmem>>, vector<8x512xf32>
    %c0_1 = arith.constant 0 : index
    %c0_2 = arith.constant 0 : index
    %1 = vector.load %arg10[%c0_1, %c0_2] : memref<216x512xf32, #tpu.memory_space<vmem>>, vector<8x512xf32>
    tpu.vector_store %arg10[%c0_1, %c0_2], %0 {strides = array<i32>} : memref<216x512xf32, #tpu.memory_space<vmem>>, vector<8x512xf32>,
    %c0_3 = arith.constant 0 : index
    %c1 = arith.constant 1 : index
    %2 = vector.load %arg7[%c0_3, %c1] : memref<8x512xf32, #tpu.memory_space<vmem>>, vector<8x511xf32>
    %c8 = arith.constant 8 : index
    %c0_4 = arith.constant 0 : index
    %3 = vector.load %arg10[%c8, %c0_4] : memref<216x512xf32, #tpu.memory_space<vmem>>, vector<8x511xf32>
    tpu.vector_store %arg10[%c8, %c0_4], %2 {strides = array<i32>} : memref<216x512xf32, #tpu.memory_space<vmem>>, vector<8x511xf32>,
    %c0_5 = arith.constant 0 : index
    %c0_6 = arith.constant 0 : index
    %4 = vector.load %arg8[%c0_5, %c0_6] : memref<8x512xf32, #tpu.memory_space<vmem>>, vector<8x1xf32>
    %c8_7 = arith.constant 8 : index
    %c511 = arith.constant 511 : index
    %5 = vector.load %arg10[%c8_7, %c511] : memref<216x512xf32, #tpu.memory_space<vmem>>, vector<8x1xf32>
    tpu.vector_store %arg10[%c8_7, %c511], %4 {strides = array<i32>} : memref<216x512xf32, #tpu.memory_space<vmem>>, vector<8x1xf32>,
    %c0_8 = arith.constant 0 : index
    %c2 = arith.constant 2 : index
    %6 = vector.load %arg7[%c0_8, %c2] : memref<8x512xf32, #tpu.memory_space<vmem>>, vector<8x510xf32>
    %c16 = arith.constant 16 : index
    %c0_9 = arith.constant 0 : index
    %7 = vector.load %arg10[%c16, %c0_9] : memref<216x512xf32, #tpu.memory_space<vmem>>, vector<8x510xf32>
    tpu.vector_store %arg10[%c16, %c0_9], %6 {strides = array<i32>} : memref<216x512xf32, #tpu.memory_space<vmem>>, vector<8x510xf32>,
    %c0_10 = arith.constant 0 : index
    %c0_11 = arith.constant 0 : index
    %8 = vector.load %arg8[%c0_10, %c0_11] : memref<8x512xf32, #tpu.memory_space<vmem>>, vector<8x2xf32>
    %c16_12 = arith.constant 16 : index
    %c510 = arith.constant 510 : index
    %9 = vector.load %arg10[%c16_12, %c510] : memref<216x512xf32, #tpu.memory_space<vmem>>, vector<8x2xf32>
    tpu.vector_store %arg10[%c16_12, %c510], %8 {strides = array<i32>} : memref<216x512xf32, #tpu.memory_space<vmem>>, vector<8x2xf32>,
    %c0_13 = arith.constant 0 : index
    %c6 = arith.constant 6 : index
    %10 = vector.load %arg7[%c0_13, %c6] : memref<8x512xf32, #tpu.memory_space<vmem>>, vector<8x506xf32>
    %c24 = arith.constant 24 : index
    %c0_14 = arith.constant 0 : index
    %11 = vector.load %arg10[%c24, %c0_14] : memref<216x512xf32, #tpu.memory_space<vmem>>, vector<8x506xf32>
    tpu.vector_store %arg10[%c24, %c0_14], %10 {strides = array<i32>} : memref<216x512xf32, #tpu.memory_space<vmem>>, vector<8x506xf32>,
    %c0_15 = arith.constant 0 : index
    %c0_16 = arith.constant 0 : index
    %12 = vector.load %arg8[%c0_15, %c0_16] : memref<8x512xf32, #tpu.memory_space<vmem>>, vector<8x6xf32>
    %c24_17 = arith.constant 24 : index
    %c506 = arith.constant 506 : index
    %13 = vector.load %arg10[%c24_17, %c506] : memref<216x512xf32, #tpu.memory_space<vmem>>, vector<8x6xf32>
    tpu.vector_store %arg10[%c24_17, %c506], %12 {strides = array<i32>} : memref<216x512xf32, #tpu.memory_space<vmem>>, vector<8x6xf32>,
    %c0_18 = arith.constant 0 : index
    %c7 = arith.constant 7 : index
    %14 = vector.load %arg7[%c0_18, %c7] : memref<8x512xf32, #tpu.memory_space<vmem>>, vector<8x505xf32>
    %c32 = arith.constant 32 : index
    %c0_19 = arith.constant 0 : index
    %15 = vector.load %arg10[%c32, %c0_19] : memref<216x512xf32, #tpu.memory_space<vmem>>, vector<8x505xf32>
    tpu.vector_store %arg10[%c32, %c0_19], %14 {strides = array<i32>} : memref<216x512xf32, #tpu.memory_space<vmem>>, vector<8x505xf32>,
    %c0_20 = arith.constant 0 : index
    %c0_21 = arith.constant 0 : index
    %16 = vector.load %arg8[%c0_20, %c0_21] : memref<8x512xf32, #tpu.memory_space<vmem>>, vector<8x7xf32>
    %c32_22 = arith.constant 32 : index
    %c505 = arith.constant 505 : index
    %17 = vector.load %arg10[%c32_22, %c505] : memref<216x512xf32, #tpu.memory_space<vmem>>, vector<8x7xf32>
    tpu.vector_store %arg10[%c32_22, %c505], %16 {strides = array<i32>} : memref<216x512xf32, #tpu.memory_space<vmem>>, vector<8x7xf32>,
    %c0_23 = arith.constant 0 : index
    %c8_24 = arith.constant 8 : index
    %18 = vector.load %arg7[%c0_23, %c8_24] : memref<8x512xf32, #tpu.memory_space<vmem>>, vector<8x504xf32>
    %c40 = arith.constant 40 : index
    %c0_25 = arith.constant 0 : index
    %19 = vector.load %arg10[%c40, %c0_25] : memref<216x512xf32, #tpu.memory_space<vmem>>, vector<8x504xf32>
    tpu.vector_store %arg10[%c40, %c0_25], %18 {strides = array<i32>} : memref<216x512xf32, #tpu.memory_space<vmem>>, vector<8x504xf32>,
    %c0_26 = arith.constant 0 : index
    %c0_27 = arith.constant 0 : index
    %20 = vector.load %arg8[%c0_26, %c0_27] : memref<8x512xf32, #tpu.memory_space<vmem>>, vector<8x8xf32>
    %c40_28 = arith.constant 40 : index
    %c504 = arith.constant 504 : index
    %21 = vector.load %arg10[%c40_28, %c504] : memref<216x512xf32, #tpu.memory_space<vmem>>, vector<8x8xf32>
    tpu.vector_store %arg10[%c40_28, %c504], %20 {strides = array<i32>} : memref<216x512xf32, #tpu.memory_space<vmem>>, vector<8x8xf32>,
    %c0_29 = arith.constant 0 : index
    %c12 = arith.constant 12 : index
    %22 = vector.load %arg7[%c0_29, %c12] : memref<8x512xf32, #tpu.memory_space<vmem>>, vector<8x500xf32>
    %c48 = arith.constant 48 : index
    %c0_30 = arith.constant 0 : index
    %23 = vector.load %arg10[%c48, %c0_30] : memref<216x512xf32, #tpu.memory_space<vmem>>, vector<8x500xf32>
    tpu.vector_store %arg10[%c48, %c0_30], %22 {strides = array<i32>} : memref<216x512xf32, #tpu.memory_space<vmem>>, vector<8x500xf32>,
    %c0_31 = arith.constant 0 : index
    %c0_32 = arith.constant 0 : index
    %24 = vector.load %arg8[%c0_31, %c0_32] : memref<8x512xf32, #tpu.memory_space<vmem>>, vector<8x12xf32>
    %c48_33 = arith.constant 48 : index
    %c500 = arith.constant 500 : index
    %25 = vector.load %arg10[%c48_33, %c500] : memref<216x512xf32, #tpu.memory_space<vmem>>, vector<8x12xf32>
    tpu.vector_store %arg10[%c48_33, %c500], %24 {strides = array<i32>} : memref<216x512xf32, #tpu.memory_space<vmem>>, vector<8x12xf32>,
    %c0_34 = arith.constant 0 : index
    %c13 = arith.constant 13 : index
    %26 = vector.load %arg7[%c0_34, %c13] : memref<8x512xf32, #tpu.memory_space<vmem>>, vector<8x499xf32>
    %c56 = arith.constant 56 : index
    %c0_35 = arith.constant 0 : index
    %27 = vector.load %arg10[%c56, %c0_35] : memref<216x512xf32, #tpu.memory_space<vmem>>, vector<8x499xf32>
    tpu.vector_store %arg10[%c56, %c0_35], %26 {strides = array<i32>} : memref<216x512xf32, #tpu.memory_space<vmem>>, vector<8x499xf32>,
    %c0_36 = arith.constant 0 : index
    %c0_37 = arith.constant 0 : index
    %28 = vector.load %arg8[%c0_36, %c0_37] : memref<8x512xf32, #tpu.memory_space<vmem>>, vector<8x13xf32>
    %c56_38 = arith.constant 56 : index
    %c499 = arith.constant 499 : index
    %29 = vector.load %arg10[%c56_38, %c499] : memref<216x512xf32, #tpu.memory_space<vmem>>, vector<8x13xf32>
    tpu.vector_store %arg10[%c56_38, %c499], %28 {strides = array<i32>} : memref<216x512xf32, #tpu.memory_space<vmem>>, vector<8x13xf32>,
    %c0_39 = arith.constant 0 : index
    %c14 = arith.constant 14 : index
    %30 = vector.load %arg7[%c0_39, %c14] : memref<8x512xf32, #tpu.memory_space<vmem>>, vector<8x498xf32>
    %c64 = arith.constant 64 : index
    %c0_40 = arith.constant 0 : index
    %31 = vector.load %arg10[%c64, %c0_40] : memref<216x512xf32, #tpu.memory_space<vmem>>, vector<8x498xf32>
    tpu.vector_store %arg10[%c64, %c0_40], %30 {strides = array<i32>} : memref<216x512xf32, #tpu.memory_space<vmem>>, vector<8x498xf32>,
    %c0_41 = arith.constant 0 : index
    %c0_42 = arith.constant 0 : index
    %32 = vector.load %arg8[%c0_41, %c0_42] : memref<8x512xf32, #tpu.memory_space<vmem>>, vector<8x14xf32>
    %c64_43 = arith.constant 64 : index
    %c498 = arith.constant 498 : index
    %33 = vector.load %arg10[%c64_43, %c498] : memref<216x512xf32, #tpu.memory_space<vmem>>, vector<8x14xf32>
    tpu.vector_store %arg10[%c64_43, %c498], %32 {strides = array<i32>} : memref<216x512xf32, #tpu.memory_space<vmem>>, vector<8x14xf32>,
    %c0_44 = arith.constant 0 : index
    %c36 = arith.constant 36 : index
    %34 = vector.load %arg7[%c0_44, %c36] : memref<8x512xf32, #tpu.memory_space<vmem>>, vector<8x476xf32>
    %c72 = arith.constant 72 : index
    %c0_45 = arith.constant 0 : index
    %35 = vector.load %arg10[%c72, %c0_45] : memref<216x512xf32, #tpu.memory_space<vmem>>, vector<8x476xf32>
    tpu.vector_store %arg10[%c72, %c0_45], %34 {strides = array<i32>} : memref<216x512xf32, #tpu.memory_space<vmem>>, vector<8x476xf32>,
    %c0_46 = arith.constant 0 : index
    %c0_47 = arith.constant 0 : index
    %36 = vector.load %arg8[%c0_46, %c0_47] : memref<8x512xf32, #tpu.memory_space<vmem>>, vector<8x36xf32>
    %c72_48 = arith.constant 72 : index
    %c476 = arith.constant 476 : index
    %37 = vector.load %arg10[%c72_48, %c476] : memref<216x512xf32, #tpu.memory_space<vmem>>, vector<8x36xf32>
    tpu.vector_store %arg10[%c72_48, %c476], %36 {strides = array<i32>} : memref<216x512xf32, #tpu.memory_space<vmem>>, vector<8x36xf32>,
    %c0_49 = arith.constant 0 : index
    %c37 = arith.constant 37 : index
    %38 = vector.load %arg7[%c0_49, %c37] : memref<8x512xf32, #tpu.memory_space<vmem>>, vector<8x475xf32>
    %c80 = arith.constant 80 : index
    %c0_50 = arith.constant 0 : index
    %39 = vector.load %arg10[%c80, %c0_50] : memref<216x512xf32, #tpu.memory_space<vmem>>, vector<8x475xf32>
    tpu.vector_store %arg10[%c80, %c0_50], %38 {strides = array<i32>} : memref<216x512xf32, #tpu.memory_space<vmem>>, vector<8x475xf32>,
    %c0_51 = arith.constant 0 : index
    %c0_52 = arith.constant 0 : index
    %40 = vector.load %arg8[%c0_51, %c0_52] : memref<8x512xf32, #tpu.memory_space<vmem>>, vector<8x37xf32>
    %c80_53 = arith.constant 80 : index
    %c475 = arith.constant 475 : index
    %41 = vector.load %arg10[%c80_53, %c475] : memref<216x512xf32, #tpu.memory_space<vmem>>, vector<8x37xf32>
    tpu.vector_store %arg10[%c80_53, %c475], %40 {strides = array<i32>} : memref<216x512xf32, #tpu.memory_space<vmem>>, vector<8x37xf32>,
    %c0_54 = arith.constant 0 : index
    %c38 = arith.constant 38 : index
    %42 = vector.load %arg7[%c0_54, %c38] : memref<8x512xf32, #tpu.memory_space<vmem>>, vector<8x474xf32>
    %c88 = arith.constant 88 : index
    %c0_55 = arith.constant 0 : index
    %43 = vector.load %arg10[%c88, %c0_55] : memref<216x512xf32, #tpu.memory_space<vmem>>, vector<8x474xf32>
    tpu.vector_store %arg10[%c88, %c0_55], %42 {strides = array<i32>} : memref<216x512xf32, #tpu.memory_space<vmem>>, vector<8x474xf32>,
    %c0_56 = arith.constant 0 : index
    %c0_57 = arith.constant 0 : index
    %44 = vector.load %arg8[%c0_56, %c0_57] : memref<8x512xf32, #tpu.memory_space<vmem>>, vector<8x38xf32>
    %c88_58 = arith.constant 88 : index
    %c474 = arith.constant 474 : index
    %45 = vector.load %arg10[%c88_58, %c474] : memref<216x512xf32, #tpu.memory_space<vmem>>, vector<8x38xf32>
    tpu.vector_store %arg10[%c88_58, %c474], %44 {strides = array<i32>} : memref<216x512xf32, #tpu.memory_space<vmem>>, vector<8x38xf32>,
    %c0_59 = arith.constant 0 : index
    %c42 = arith.constant 42 : index
    %46 = vector.load %arg7[%c0_59, %c42] : memref<8x512xf32, #tpu.memory_space<vmem>>, vector<8x470xf32>
    %c96 = arith.constant 96 : index
    %c0_60 = arith.constant 0 : index
    %47 = vector.load %arg10[%c96, %c0_60] : memref<216x512xf32, #tpu.memory_space<vmem>>, vector<8x470xf32>
    tpu.vector_store %arg10[%c96, %c0_60], %46 {strides = array<i32>} : memref<216x512xf32, #tpu.memory_space<vmem>>, vector<8x470xf32>,
    %c0_61 = arith.constant 0 : index
    %c0_62 = arith.constant 0 : index
    %48 = vector.load %arg8[%c0_61, %c0_62] : memref<8x512xf32, #tpu.memory_space<vmem>>, vector<8x42xf32>
    %c96_63 = arith.constant 96 : index
    %c470 = arith.constant 470 : index
    %49 = vector.load %arg10[%c96_63, %c470] : memref<216x512xf32, #tpu.memory_space<vmem>>, vector<8x42xf32>
    tpu.vector_store %arg10[%c96_63, %c470], %48 {strides = array<i32>} : memref<216x512xf32, #tpu.memory_space<vmem>>, vector<8x42xf32>,
    %c0_64 = arith.constant 0 : index
    %c43 = arith.constant 43 : index
    %50 = vector.load %arg7[%c0_64, %c43] : memref<8x512xf32, #tpu.memory_space<vmem>>, vector<8x469xf32>
    %c104 = arith.constant 104 : index
    %c0_65 = arith.constant 0 : index
    %51 = vector.load %arg10[%c104, %c0_65] : memref<216x512xf32, #tpu.memory_space<vmem>>, vector<8x469xf32>
    tpu.vector_store %arg10[%c104, %c0_65], %50 {strides = array<i32>} : memref<216x512xf32, #tpu.memory_space<vmem>>, vector<8x469xf32>,
    %c0_66 = arith.constant 0 : index
    %c0_67 = arith.constant 0 : index
    %52 = vector.load %arg8[%c0_66, %c0_67] : memref<8x512xf32, #tpu.memory_space<vmem>>, vector<8x43xf32>
    %c104_68 = arith.constant 104 : index
    %c469 = arith.constant 469 : index
    %53 = vector.load %arg10[%c104_68, %c469] : memref<216x512xf32, #tpu.memory_space<vmem>>, vector<8x43xf32>
    tpu.vector_store %arg10[%c104_68, %c469], %52 {strides = array<i32>} : memref<216x512xf32, #tpu.memory_space<vmem>>, vector<8x43xf32>,
    %c0_69 = arith.constant 0 : index
    %c44 = arith.constant 44 : index
    %54 = vector.load %arg7[%c0_69, %c44] : memref<8x512xf32, #tpu.memory_space<vmem>>, vector<8x468xf32>
    %c112 = arith.constant 112 : index
    %c0_70 = arith.constant 0 : index
    %55 = vector.load %arg10[%c112, %c0_70] : memref<216x512xf32, #tpu.memory_space<vmem>>, vector<8x468xf32>
    tpu.vector_store %arg10[%c112, %c0_70], %54 {strides = array<i32>} : memref<216x512xf32, #tpu.memory_space<vmem>>, vector<8x468xf32>,
    %c0_71 = arith.constant 0 : index
    %c0_72 = arith.constant 0 : index
    %56 = vector.load %arg8[%c0_71, %c0_72] : memref<8x512xf32, #tpu.memory_space<vmem>>, vector<8x44xf32>
    %c112_73 = arith.constant 112 : index
    %c468 = arith.constant 468 : index
    %57 = vector.load %arg10[%c112_73, %c468] : memref<216x512xf32, #tpu.memory_space<vmem>>, vector<8x44xf32>
    tpu.vector_store %arg10[%c112_73, %c468], %56 {strides = array<i32>} : memref<216x512xf32, #tpu.memory_space<vmem>>, vector<8x44xf32>,
    %c0_74 = arith.constant 0 : index
    %c48_75 = arith.constant 48 : index
    %58 = vector.load %arg7[%c0_74, %c48_75] : memref<8x512xf32, #tpu.memory_space<vmem>>, vector<8x464xf32>
    %c120 = arith.constant 120 : index
    %c0_76 = arith.constant 0 : index
    %59 = vector.load %arg10[%c120, %c0_76] : memref<216x512xf32, #tpu.memory_space<vmem>>, vector<8x464xf32>
    tpu.vector_store %arg10[%c120, %c0_76], %58 {strides = array<i32>} : memref<216x512xf32, #tpu.memory_space<vmem>>, vector<8x464xf32>,
    %c0_77 = arith.constant 0 : index
    %c0_78 = arith.constant 0 : index
    %60 = vector.load %arg8[%c0_77, %c0_78] : memref<8x512xf32, #tpu.memory_space<vmem>>, vector<8x48xf32>
    %c120_79 = arith.constant 120 : index
    %c464 = arith.constant 464 : index
    %61 = vector.load %arg10[%c120_79, %c464] : memref<216x512xf32, #tpu.memory_space<vmem>>, vector<8x48xf32>
    tpu.vector_store %arg10[%c120_79, %c464], %60 {strides = array<i32>} : memref<216x512xf32, #tpu.memory_space<vmem>>, vector<8x48xf32>,
    %c0_80 = arith.constant 0 : index
    %c49 = arith.constant 49 : index
    %62 = vector.load %arg7[%c0_80, %c49] : memref<8x512xf32, #tpu.memory_space<vmem>>, vector<8x463xf32>
    %c128 = arith.constant 128 : index
    %c0_81 = arith.constant 0 : index
    %63 = vector.load %arg10[%c128, %c0_81] : memref<216x512xf32, #tpu.memory_space<vmem>>, vector<8x463xf32>
    tpu.vector_store %arg10[%c128, %c0_81], %62 {strides = array<i32>} : memref<216x512xf32, #tpu.memory_space<vmem>>, vector<8x463xf32>,
    %c0_82 = arith.constant 0 : index
    %c0_83 = arith.constant 0 : index
    %64 = vector.load %arg8[%c0_82, %c0_83] : memref<8x512xf32, #tpu.memory_space<vmem>>, vector<8x49xf32>
    %c128_84 = arith.constant 128 : index
    %c463 = arith.constant 463 : index
    %65 = vector.load %arg10[%c128_84, %c463] : memref<216x512xf32, #tpu.memory_space<vmem>>, vector<8x49xf32>
    tpu.vector_store %arg10[%c128_84, %c463], %64 {strides = array<i32>} : memref<216x512xf32, #tpu.memory_space<vmem>>, vector<8x49xf32>,
    %c0_85 = arith.constant 0 : index
    %c50 = arith.constant 50 : index
    %66 = vector.load %arg7[%c0_85, %c50] : memref<8x512xf32, #tpu.memory_space<vmem>>, vector<8x462xf32>
    %c136 = arith.constant 136 : index
    %c0_86 = arith.constant 0 : index
    %67 = vector.load %arg10[%c136, %c0_86] : memref<216x512xf32, #tpu.memory_space<vmem>>, vector<8x462xf32>
    tpu.vector_store %arg10[%c136, %c0_86], %66 {strides = array<i32>} : memref<216x512xf32, #tpu.memory_space<vmem>>, vector<8x462xf32>,
    %c0_87 = arith.constant 0 : index
    %c0_88 = arith.constant 0 : index
    %68 = vector.load %arg8[%c0_87, %c0_88] : memref<8x512xf32, #tpu.memory_space<vmem>>, vector<8x50xf32>
    %c136_89 = arith.constant 136 : index
    %c462 = arith.constant 462 : index
    %69 = vector.load %arg10[%c136_89, %c462] : memref<216x512xf32, #tpu.memory_space<vmem>>, vector<8x50xf32>
    tpu.vector_store %arg10[%c136_89, %c462], %68 {strides = array<i32>} : memref<216x512xf32, #tpu.memory_space<vmem>>, vector<8x50xf32>,
    %c0_90 = arith.constant 0 : index
    %c72_91 = arith.constant 72 : index
    %70 = vector.load %arg7[%c0_90, %c72_91] : memref<8x512xf32, #tpu.memory_space<vmem>>, vector<8x440xf32>
    %c144 = arith.constant 144 : index
    %c0_92 = arith.constant 0 : index
    %71 = vector.load %arg10[%c144, %c0_92] : memref<216x512xf32, #tpu.memory_space<vmem>>, vector<8x440xf32>
    tpu.vector_store %arg10[%c144, %c0_92], %70 {strides = array<i32>} : memref<216x512xf32, #tpu.memory_space<vmem>>, vector<8x440xf32>,
    %c0_93 = arith.constant 0 : index
    %c0_94 = arith.constant 0 : index
    %72 = vector.load %arg8[%c0_93, %c0_94] : memref<8x512xf32, #tpu.memory_space<vmem>>, vector<8x72xf32>
    %c144_95 = arith.constant 144 : index
    %c440 = arith.constant 440 : index
    %73 = vector.load %arg10[%c144_95, %c440] : memref<216x512xf32, #tpu.memory_space<vmem>>, vector<8x72xf32>
    tpu.vector_store %arg10[%c144_95, %c440], %72 {strides = array<i32>} : memref<216x512xf32, #tpu.memory_space<vmem>>, vector<8x72xf32>,
    %c0_96 = arith.constant 0 : index
    %c73 = arith.constant 73 : index
    %74 = vector.load %arg7[%c0_96, %c73] : memref<8x512xf32, #tpu.memory_space<vmem>>, vector<8x439xf32>
    %c152 = arith.constant 152 : index
    %c0_97 = arith.constant 0 : index
    %75 = vector.load %arg10[%c152, %c0_97] : memref<216x512xf32, #tpu.memory_space<vmem>>, vector<8x439xf32>
    tpu.vector_store %arg10[%c152, %c0_97], %74 {strides = array<i32>} : memref<216x512xf32, #tpu.memory_space<vmem>>, vector<8x439xf32>,
    %c0_98 = arith.constant 0 : index
    %c0_99 = arith.constant 0 : index
    %76 = vector.load %arg8[%c0_98, %c0_99] : memref<8x512xf32, #tpu.memory_space<vmem>>, vector<8x73xf32>
    %c152_100 = arith.constant 152 : index
    %c439 = arith.constant 439 : index
    %77 = vector.load %arg10[%c152_100, %c439] : memref<216x512xf32, #tpu.memory_space<vmem>>, vector<8x73xf32>
    tpu.vector_store %arg10[%c152_100, %c439], %76 {strides = array<i32>} : memref<216x512xf32, #tpu.memory_space<vmem>>, vector<8x73xf32>,
    %c0_101 = arith.constant 0 : index
    %c74 = arith.constant 74 : index
    %78 = vector.load %arg7[%c0_101, %c74] : memref<8x512xf32, #tpu.memory_space<vmem>>, vector<8x438xf32>
    %c160 = arith.constant 160 : index
    %c0_102 = arith.constant 0 : index
    %79 = vector.load %arg10[%c160, %c0_102] : memref<216x512xf32, #tpu.memory_space<vmem>>, vector<8x438xf32>
    tpu.vector_store %arg10[%c160, %c0_102], %78 {strides = array<i32>} : memref<216x512xf32, #tpu.memory_space<vmem>>, vector<8x438xf32>,
    %c0_103 = arith.constant 0 : index
    %c0_104 = arith.constant 0 : index
    %80 = vector.load %arg8[%c0_103, %c0_104] : memref<8x512xf32, #tpu.memory_space<vmem>>, vector<8x74xf32>
    %c160_105 = arith.constant 160 : index
    %c438 = arith.constant 438 : index
    %81 = vector.load %arg10[%c160_105, %c438] : memref<216x512xf32, #tpu.memory_space<vmem>>, vector<8x74xf32>
    tpu.vector_store %arg10[%c160_105, %c438], %80 {strides = array<i32>} : memref<216x512xf32, #tpu.memory_space<vmem>>, vector<8x74xf32>,
    %c0_106 = arith.constant 0 : index
    %c78 = arith.constant 78 : index
    %82 = vector.load %arg7[%c0_106, %c78] : memref<8x512xf32, #tpu.memory_space<vmem>>, vector<8x434xf32>
    %c168 = arith.constant 168 : index
    %c0_107 = arith.constant 0 : index
    %83 = vector.load %arg10[%c168, %c0_107] : memref<216x512xf32, #tpu.memory_space<vmem>>, vector<8x434xf32>
    tpu.vector_store %arg10[%c168, %c0_107], %82 {strides = array<i32>} : memref<216x512xf32, #tpu.memory_space<vmem>>, vector<8x434xf32>,
    %c0_108 = arith.constant 0 : index
    %c0_109 = arith.constant 0 : index
    %84 = vector.load %arg8[%c0_108, %c0_109] : memref<8x512xf32, #tpu.memory_space<vmem>>, vector<8x78xf32>
    %c168_110 = arith.constant 168 : index
    %c434 = arith.constant 434 : index
    %85 = vector.load %arg10[%c168_110, %c434] : memref<216x512xf32, #tpu.memory_space<vmem>>, vector<8x78xf32>
    tpu.vector_store %arg10[%c168_110, %c434], %84 {strides = array<i32>} : memref<216x512xf32, #tpu.memory_space<vmem>>, vector<8x78xf32>,
    %c0_111 = arith.constant 0 : index
    %c79 = arith.constant 79 : index
    %86 = vector.load %arg7[%c0_111, %c79] : memref<8x512xf32, #tpu.memory_space<vmem>>, vector<8x433xf32>
    %c176 = arith.constant 176 : index
    %c0_112 = arith.constant 0 : index
    %87 = vector.load %arg10[%c176, %c0_112] : memref<216x512xf32, #tpu.memory_space<vmem>>, vector<8x433xf32>
    tpu.vector_store %arg10[%c176, %c0_112], %86 {strides = array<i32>} : memref<216x512xf32, #tpu.memory_space<vmem>>, vector<8x433xf32>,
    %c0_113 = arith.constant 0 : index
    %c0_114 = arith.constant 0 : index
    %88 = vector.load %arg8[%c0_113, %c0_114] : memref<8x512xf32, #tpu.memory_space<vmem>>, vector<8x79xf32>
    %c176_115 = arith.constant 176 : index
    %c433 = arith.constant 433 : index
    %89 = vector.load %arg10[%c176_115, %c433] : memref<216x512xf32, #tpu.memory_space<vmem>>, vector<8x79xf32>
    tpu.vector_store %arg10[%c176_115, %c433], %88 {strides = array<i32>} : memref<216x512xf32, #tpu.memory_space<vmem>>, vector<8x79xf32>,
    %c0_116 = arith.constant 0 : index
    %c80_117 = arith.constant 80 : index
    %90 = vector.load %arg7[%c0_116, %c80_117] : memref<8x512xf32, #tpu.memory_space<vmem>>, vector<8x432xf32>
    %c184 = arith.constant 184 : index
    %c0_118 = arith.constant 0 : index
    %91 = vector.load %arg10[%c184, %c0_118] : memref<216x512xf32, #tpu.memory_space<vmem>>, vector<8x432xf32>
    tpu.vector_store %arg10[%c184, %c0_118], %90 {strides = array<i32>} : memref<216x512xf32, #tpu.memory_space<vmem>>, vector<8x432xf32>,
    %c0_119 = arith.constant 0 : index
    %c0_120 = arith.constant 0 : index
    %92 = vector.load %arg8[%c0_119, %c0_120] : memref<8x512xf32, #tpu.memory_space<vmem>>, vector<8x80xf32>
    %c184_121 = arith.constant 184 : index
    %c432 = arith.constant 432 : index
    %93 = vector.load %arg10[%c184_121, %c432] : memref<216x512xf32, #tpu.memory_space<vmem>>, vector<8x80xf32>
    tpu.vector_store %arg10[%c184_121, %c432], %92 {strides = array<i32>} : memref<216x512xf32, #tpu.memory_space<vmem>>, vector<8x80xf32>,
    %c0_122 = arith.constant 0 : index
    %c84 = arith.constant 84 : index
    %94 = vector.load %arg7[%c0_122, %c84] : memref<8x512xf32, #tpu.memory_space<vmem>>, vector<8x428xf32>
    %c192 = arith.constant 192 : index
    %c0_123 = arith.constant 0 : index
    %95 = vector.load %arg10[%c192, %c0_123] : memref<216x512xf32, #tpu.memory_space<vmem>>, vector<8x428xf32>
    tpu.vector_store %arg10[%c192, %c0_123], %94 {strides = array<i32>} : memref<216x512xf32, #tpu.memory_space<vmem>>, vector<8x428xf32>,
    %c0_124 = arith.constant 0 : index
    %c0_125 = arith.constant 0 : index
    %96 = vector.load %arg8[%c0_124, %c0_125] : memref<8x512xf32, #tpu.memory_space<vmem>>, vector<8x84xf32>
    %c192_126 = arith.constant 192 : index
    %c428 = arith.constant 428 : index
    %97 = vector.load %arg10[%c192_126, %c428] : memref<216x512xf32, #tpu.memory_space<vmem>>, vector<8x84xf32>
    tpu.vector_store %arg10[%c192_126, %c428], %96 {strides = array<i32>} : memref<216x512xf32, #tpu.memory_space<vmem>>, vector<8x84xf32>,
    %c0_127 = arith.constant 0 : index
    %c85 = arith.constant 85 : index
    %98 = vector.load %arg7[%c0_127, %c85] : memref<8x512xf32, #tpu.memory_space<vmem>>, vector<8x427xf32>
    %c200 = arith.constant 200 : index
    %c0_128 = arith.constant 0 : index
    %99 = vector.load %arg10[%c200, %c0_128] : memref<216x512xf32, #tpu.memory_space<vmem>>, vector<8x427xf32>
    tpu.vector_store %arg10[%c200, %c0_128], %98 {strides = array<i32>} : memref<216x512xf32, #tpu.memory_space<vmem>>, vector<8x427xf32>,
    %c0_129 = arith.constant 0 : index
    %c0_130 = arith.constant 0 : index
    %100 = vector.load %arg8[%c0_129, %c0_130] : memref<8x512xf32, #tpu.memory_space<vmem>>, vector<8x85xf32>
    %c200_131 = arith.constant 200 : index
    %c427 = arith.constant 427 : index
    %101 = vector.load %arg10[%c200_131, %c427] : memref<216x512xf32, #tpu.memory_space<vmem>>, vector<8x85xf32>
    tpu.vector_store %arg10[%c200_131, %c427], %100 {strides = array<i32>} : memref<216x512xf32, #tpu.memory_space<vmem>>, vector<8x85xf32>,
    %c0_132 = arith.constant 0 : index
    %c86 = arith.constant 86 : index
    %102 = vector.load %arg7[%c0_132, %c86] : memref<8x512xf32, #tpu.memory_space<vmem>>, vector<8x426xf32>
    %c208 = arith.constant 208 : index
    %c0_133 = arith.constant 0 : index
    %103 = vector.load %arg10[%c208, %c0_133] : memref<216x512xf32, #tpu.memory_space<vmem>>, vector<8x426xf32>
    tpu.vector_store %arg10[%c208, %c0_133], %102 {strides = array<i32>} : memref<216x512xf32, #tpu.memory_space<vmem>>, vector<8x426xf32>,
    %c0_134 = arith.constant 0 : index
    %c0_135 = arith.constant 0 : index
    %104 = vector.load %arg8[%c0_134, %c0_135] : memref<8x512xf32, #tpu.memory_space<vmem>>, vector<8x86xf32>
    %c208_136 = arith.constant 208 : index
    %c426 = arith.constant 426 : index
    %105 = vector.load %arg10[%c208_136, %c426] : memref<216x512xf32, #tpu.memory_space<vmem>>, vector<8x86xf32>
    tpu.vector_store %arg10[%c208_136, %c426], %104 {strides = array<i32>} : memref<216x512xf32, #tpu.memory_space<vmem>>, vector<8x86xf32>,
    %c0_137 = arith.constant 0 : index
    %c0_138 = arith.constant 0 : index
    %106 = vector.load %arg1[%c0_137, %c0_138] : memref<8x216xf32, #tpu.memory_space<vmem>>, vector<8x216xf32>
    %c0_139 = arith.constant 0 : index
    %c0_140 = arith.constant 0 : index
    %107 = vector.load %arg10[%c0_139, %c0_140] : memref<216x512xf32, #tpu.memory_space<vmem>>, vector<216x512xf32>
    %cst = arith.constant dense<0.000000e+00> : vector<8x512xf32>
    %108 = tpu.matmul %106, %107, %cst {dimension_numbers = #tpu.dot_dimension_numbers<[1], [0], [0], [1], [0, 0, 1, 1], [], []>} : vector<8x216xf32>, vector<216x512xf32>, vector<8x512xf32> -> vector<8x512xf32>
    %c0_141 = arith.constant 0 : index
    %c0_142 = arith.constant 0 : index
    %109 = vector.load %arg2[%c0_141, %c0_142] : memref<8x1xf32, #tpu.memory_space<vmem>>, vector<8x1xf32>
    %110 = vector.broadcast %109 : vector<8x1xf32> to vector<8x512xf32>
    %111 = arith.addf %108, %110 : vector<8x512xf32>
    %cst_143 = arith.constant 0.000000e+00 : f32
    %112 = vector.broadcast %cst_143 : f32 to vector<8x512xf32>
    %113 = arith.maximumf %111, %112 : vector<8x512xf32>
    %c0_144 = arith.constant 0 : index
    %c0_145 = arith.constant 0 : index
    %114 = vector.load %arg3[%c0_144, %c0_145] : memref<8x8xf32, #tpu.memory_space<vmem>>, vector<8x8xf32>
    %c0_146 = arith.constant 0 : index
    %c0_147 = arith.constant 0 : index
    %115 = vector.load %arg5[%c0_146, %c0_147] : memref<8x512xf32, #tpu.memory_space<vmem>>, vector<8x512xf32>
    %cst_148 = arith.constant dense<0.000000e+00> : vector<8x512xf32>
    %116 = tpu.matmul %114, %115, %cst_148 {dimension_numbers = #tpu.dot_dimension_numbers<[1], [0], [0], [1], [0, 0, 1, 1], [], []>} : vector<8x8xf32>, vector<8x512xf32>, vector<8x512xf32> -> vector<8x512xf32>
    %117 = arith.addf %113, %116 : vector<8x512xf32>
    %c0_149 = arith.constant 0 : index
    %c0_150 = arith.constant 0 : index
    %118 = vector.load %arg4[%c0_149, %c0_150] : memref<8x1xf32, #tpu.memory_space<vmem>>, vector<8x1xf32>
    %119 = vector.broadcast %118 : vector<8x1xf32> to vector<8x512xf32>
    %120 = arith.addf %117, %119 : vector<8x512xf32>
    %c0_151 = arith.constant 0 : index
    %c0_152 = arith.constant 0 : index
    %121 = vector.load %arg6[%c0_151, %c0_152] : memref<1x512xf32, #tpu.memory_space<vmem>>, vector<1x512xf32>
    %122 = vector.broadcast %121 : vector<1x512xf32> to vector<8x512xf32>
    %123 = arith.mulf %120, %122 : vector<8x512xf32>
    %c0_153 = arith.constant 0 : index
    %c0_154 = arith.constant 0 : index
    %124 = vector.load %arg9[%c0_153, %c0_154] : memref<8x512xf32, #tpu.memory_space<vmem>>, vector<8x512xf32>
    tpu.vector_store %arg9[%c0_153, %c0_154], %123 {strides = array<i32>} : memref<8x512xf32, #tpu.memory_space<vmem>>, vector<8x512xf32>,
    return
  }
  func.func @transform_0(%arg0: i32) -> (i32, i32) {
    %c0_i32 = arith.constant 0 : i32
    %c0_i32_0 = arith.constant 0 : i32
    %c0_i32_1 = arith.constant 0 : i32
    return %c0_i32, %c0_i32_0 : i32, i32
  }
  func.func @transform_1(%arg0: i32) -> (i32, i32) {
    %c0_i32 = arith.constant 0 : i32
    %c0_i32_0 = arith.constant 0 : i32
    %c0_i32_1 = arith.constant 0 : i32
    return %c0_i32, %c0_i32_0 : i32, i32
  }
  func.func @transform_2(%arg0: i32) -> (i32, i32) {
    %c0_i32 = arith.constant 0 : i32
    %c0_i32_0 = arith.constant 0 : i32
    %c0_i32_1 = arith.constant 0 : i32
    return %c0_i32, %c0_i32_0 : i32, i32
  }
  func.func @transform_3(%arg0: i32) -> (i32, i32) {
    %c0_i32 = arith.constant 0 : i32
    %c0_i32_0 = arith.constant 0 : i32
    %c0_i32_1 = arith.constant 0 : i32
    return %c0_i32, %c0_i32_0 : i32, i32
  }
  func.func @transform_4(%arg0: i32) -> (i32, i32) {
    %c0_i32 = arith.constant 0 : i32
    %c0_i32_0 = arith.constant 0 : i32
    return %c0_i32, %arg0 : i32, i32
  }
  func.func @transform_5(%arg0: i32) -> (i32, i32) {
    %c0_i32 = arith.constant 0 : i32
    %c0_i32_0 = arith.constant 0 : i32
    return %c0_i32, %arg0 : i32, i32
  }
  func.func @transform_6(%arg0: i32) -> (i32, i32) {
    %c0_i32 = arith.constant 0 : i32
    %c0_i32_0 = arith.constant 0 : i32
    return %c0_i32, %arg0 : i32, i32
  }
  func.func @transform_7(%arg0: i32) -> (i32, i32) {
    %c1_i32 = arith.constant 1 : i32
    %0 = arith.addi %arg0, %c1_i32 : i32
    %c0_i32 = arith.constant 0 : i32
    %c0_i32_0 = arith.constant 0 : i32
    return %c0_i32, %0 : i32, i32
  }
  func.func @transform_8(%arg0: i32) -> (i32, i32) {
    %c0_i32 = arith.constant 0 : i32
    %c0_i32_0 = arith.constant 0 : i32
    return %c0_i32, %arg0 : i32, i32
  }
}

</mosaic_0001>

<llo_original>
// kernel: resnet_down_forward.3
$region0: #{resnet_down_forward.3}
  #allocation0 [shape = 'u32[]', space=smem, size = 0x4, offset = 0x4, fixed_abs, tag = 'smem constant byte address 0x4 - core index']
  #allocation1 [shape = 'u32[72,128]{1,0:T(1,128)}', space=vmem, size = 0x9000, scoped, tag = 'internal scratch']
  %s0 = inlined_call_operand.vmem [shape: f32[8,32], index: 0, kind: input, shape index: {}]
  %s1 = inlined_call_operand.vmem [shape: f32[8,1], index: 1, kind: input, shape index: {}]
  %s2 = inlined_call_operand.vmem [shape: f32[32,128], index: 2, kind: input, shape index: {}]
  %s3 = inlined_call_operand.vmem [shape: f32[8,128], index: 3, kind: output, shape index: {}]
  %s4 = sld [smem:[#allocation0]]
  $region22: #{resnet_down_forward.3} parent=0
    _
  %s6 = ssub.s32 1, %s4
  %s7 = scalar_select 0, %s6, %s4
  // Predicated region
  $region2: #{resnet_down_forward.3} parent=0 // pred_check
    _
  $region3: #{resnet_down_forward.3} parent=0 // pred_check_branch
    %9 = sbr.rel (0) target = $region5
  $region4: #{resnet_down_forward.3} parent=0 // pred_region
    _
  $region5: #{resnet_down_forward.3} parent=0 // pred_fallthru
    _
  // Predicated region
  $region6: #{resnet_down_forward.3} parent=0 // pred_check
    _
  $region7: #{resnet_down_forward.3} parent=0 // pred_check_branch
    %11 = sbr.rel (0) target = $region9
  $region8: #{resnet_down_forward.3} parent=0 // pred_region
    _
  $region9: #{resnet_down_forward.3} parent=0 // pred_fallthru
    _
  // Predicated region
  $region10: #{resnet_down_forward.3} parent=0 // pred_check
    _
  $region11: #{resnet_down_forward.3} parent=0 // pred_check_branch
    %13 = sbr.rel (0) target = $region13
  $region12: #{resnet_down_forward.3} parent=0 // pred_region
    _
  $region13: #{resnet_down_forward.3} parent=0 // pred_fallthru
    _
  %v14 = vld [vmem:[%s0] sm:$0xff]
  %v15 = vld [vmem:[%s2] sm:$0xff]
  %v16 = vld [vmem:[%s2 + $0x8] sm:$0xff]
  %v17 = vld [vmem:[%s2 + $0x10] sm:$0xff]
  %v18 = vld [vmem:[%s2 + $0x18] sm:$0xff]
  %v19 = vld [vmem:[%s1] sm:$0xff]
  %21 = vset.pattern.permute.xlu0 0
  %22 = vperm.xlu0 %21, %v19
  %v23 = vpop.permute.xlu0 %22
  %vm25 = vcmask 261120
  %v27 = vsel %vm25, %v14, 0
  %29 = vmatpush.msra.mxu0 0.0
  %30 = vmatpush.msra.mxu0 0.0
  %31 = vmatpush.msra.mxu0 0.0
  %32 = vmatpush.msra.mxu0 0.0
  %33 = vmatpush.msra.mxu0 0.0
  %34 = vmatpush.msra.mxu0 0.0
  %35 = vmatpush.msra.mxu0 0.0
  %36 = vmatpush.msra.mxu0 0.0
  %37 = vmatpush.msra.mxu0 0.0
  %38 = vmatpush.msra.mxu0 0.0
  %39 = vmatpush.msra.mxu0 0.0
  %40 = vmatpush.msra.mxu0 0.0
  %41 = vmatpush.msra.mxu0 %v18
  %42 = vmatpush.msra.mxu0 %v17
  %43 = vmatpush.msra.mxu0 %v16
  %44 = vmatpush.msra.mxu0 %v15
  %45 = vmatmul.f32.gmra.mxu0 %v27
  %v46 = vpop.f32.mrf.mxu0
  %v47 = vadd.f32 %v23, %v46
  %48 = vdwg.mxu0
  %v49 = vmax.f32 %v47, 0.0
  %50 = vst [vmem:[%s3] sm:$0xff] %v49
  // Predicated region
  $region14: #{resnet_down_forward.3} parent=0 // pred_check
    _
  $region15: #{resnet_down_forward.3} parent=0 // pred_check_branch
    %52 = sbr.rel (0) target = $region17
  $region16: #{resnet_down_forward.3} parent=0 // pred_region
    _
  $region17: #{resnet_down_forward.3} parent=0 // pred_fallthru
    _
  // Predicated region
  $region18: #{resnet_down_forward.3} parent=0 // pred_check
    _
  $region19: #{resnet_down_forward.3} parent=0 // pred_check_branch
    %54 = sbr.rel (0) target = $region21
  $region20: #{resnet_down_forward.3} parent=0 // pred_region
    _
  $region21: #{resnet_down_forward.3} parent=0 // pred_fallthru
    _

// kernel: resnet_down_forward.5
$region0: #{resnet_down_forward.5}
  #allocation0 [shape = 'u32[]', space=smem, size = 0x4, offset = 0x4, fixed_abs, tag = 'smem constant byte address 0x4 - core index']
  #allocation1 [shape = 'u32[72,128]{1,0:T(1,128)}', space=vmem, size = 0x9000, scoped, tag = 'internal scratch']
  #allocation2 [shape = 'f32[216,512]{1,0:T(8,128)}', space=vmem, size = 0x6c000, scoped, tag = 'scratch operand']
  %s0 = inlined_call_operand.vmem [shape: f32[8,216], index: 0, kind: input, shape index: {}]
  %s1 = inlined_call_operand.vmem [shape: f32[8,1], index: 1, kind: input, shape index: {}]
  %s2 = inlined_call_operand.vmem [shape: f32[8,8], index: 2, kind: input, shape index: {}]
  %s3 = inlined_call_operand.vmem [shape: f32[8,1], index: 3, kind: input, shape index: {}]
  %s4 = inlined_call_operand.vmem [shape: f32[8,512], index: 4, kind: input, shape index: {}]
  %s5 = inlined_call_operand.vmem [shape: f32[1,512], index: 5, kind: input, shape index: {}]
  %s6 = inlined_call_operand.vmem [shape: f32[8,1024], index: 6, kind: input, shape index: {}, may-alias: {6,7}]
  %s7 = inlined_call_operand.vmem [shape: f32[8,1024], index: 7, kind: input, shape index: {}, may-alias: {6,7}]
  %s8 = inlined_call_operand.vmem [shape: f32[8,512], index: 8, kind: output, shape index: {}]
  %s9 = sld [smem:[#allocation0]]
  $region42: #{resnet_down_forward.5} parent=0
    _
  %s11 = ssub.s32 1, %s9
  %s12 = scalar_select 0, %s11, %s9
  // Predicated region
  $region2: #{resnet_down_forward.5} parent=0 // pred_check
    _
  $region3: #{resnet_down_forward.5} parent=0 // pred_check_branch
    %14 = sbr.rel (0) target = $region5
  $region4: #{resnet_down_forward.5} parent=0 // pred_region
    _
  $region5: #{resnet_down_forward.5} parent=0 // pred_fallthru
    _
  // Predicated region
  $region6: #{resnet_down_forward.5} parent=0 // pred_check
    _
  $region7: #{resnet_down_forward.5} parent=0 // pred_check_branch
    %16 = sbr.rel (0) target = $region9
  $region8: #{resnet_down_forward.5} parent=0 // pred_region
    _
  $region9: #{resnet_down_forward.5} parent=0 // pred_fallthru
    _
  // Predicated region
  $region10: #{resnet_down_forward.5} parent=0 // pred_check
    _
  $region11: #{resnet_down_forward.5} parent=0 // pred_check_branch
    %18 = sbr.rel (0) target = $region13
  $region12: #{resnet_down_forward.5} parent=0 // pred_region
    _
  $region13: #{resnet_down_forward.5} parent=0 // pred_fallthru
    _
  // Predicated region
  $region14: #{resnet_down_forward.5} parent=0 // pred_check
    _
  $region15: #{resnet_down_forward.5} parent=0 // pred_check_branch
    %20 = sbr.rel (0) target = $region17
  $region16: #{resnet_down_forward.5} parent=0 // pred_region
    _
  $region17: #{resnet_down_forward.5} parent=0 // pred_fallthru
    _
  // Predicated region
  $region18: #{resnet_down_forward.5} parent=0 // pred_check
    _
  $region19: #{resnet_down_forward.5} parent=0 // pred_check_branch
    %22 = sbr.rel (0) target = $region21
  $region20: #{resnet_down_forward.5} parent=0 // pred_region
    _
  $region21: #{resnet_down_forward.5} parent=0 // pred_fallthru
    _
  // Predicated region
  $region22: #{resnet_down_forward.5} parent=0 // pred_check
    _
  $region23: #{resnet_down_forward.5} parent=0 // pred_check_branch
    %24 = sbr.rel (0) target = $region25
  $region24: #{resnet_down_forward.5} parent=0 // pred_region
    _
  $region25: #{resnet_down_forward.5} parent=0 // pred_fallthru
    _
  // Predicated region
  $region26: #{resnet_down_forward.5} parent=0 // pred_check
    _
  $region27: #{resnet_down_forward.5} parent=0 // pred_check_branch
    %26 = sbr.rel (0) target = $region29
  $region28: #{resnet_down_forward.5} parent=0 // pred_region
    _
  $region29: #{resnet_down_forward.5} parent=0 // pred_fallthru
    _
  // Predicated region
  $region30: #{resnet_down_forward.5} parent=0 // pred_check
    _
  $region31: #{resnet_down_forward.5} parent=0 // pred_check_branch
    %28 = sbr.rel (0) target = $region33
  $region32: #{resnet_down_forward.5} parent=0 // pred_region
    %s29 = sadd.s32 0, 1
    %s30 = smul.u32 4, %s29
    %p31 = scmp.lt.s32.totalorder %s30, 7
    %s32 = scalar_select %p31, %s30, 7
    %s33 = smul.addr %s32, 8
    %s34 = scalar_lea.vmem %s7, %s33
    %s35 = sadd.s32 0, 1
    %s36 = smul.u32 4, %s35
  $region33: #{resnet_down_forward.5} parent=0 // pred_fallthru
    _
  %s37 = sadd.s32 0, 1
  %s38 = smul.u32 4, %s37
  %p39 = scmp.lt.s32.totalorder %s38, 7
  %s40 = scalar_select %p39, %s38, 7
  %s41 = smul.addr %s40, 8
  %s42 = scalar_lea.vmem %s7, %s41
  %s43 = sadd.s32 0, 1
  %s44 = smul.u32 4, %s43
  %p45 = scmp.lt.s32.totalorder %s44, 7
  %s46 = scalar_select %p45, %s44, 7
  %s47 = smul.addr %s46, 8
  %s48 = scalar_lea.vmem %s7, %s47
  %s49 = sadd.s32 0, 1
  %s50 = smul.u32 4, %s49
  %v51 = vld [vmem:[%s6] sm:$0xff]
  %v52 = vld [vmem:[%s6 + $0x8] sm:$0xff]
  %v53 = vld [vmem:[%s6 + $0x10] sm:$0xff]
  %v54 = vld [vmem:[%s6 + $0x18] sm:$0xff]
  %55 = vst [vmem:[#allocation2] sm:$0xff] %v51
  %56 = vst [vmem:[#allocation2 + $0x8] sm:$0xff] %v52
  %57 = vst [vmem:[#allocation2 + $0x10] sm:$0xff] %v53
  %58 = vst [vmem:[#allocation2 + $0x18] sm:$0xff] %v54
  %v59 = vld [vmem:[%s6] sm:$0xff]
  %v60 = vld [vmem:[%s6 + $0x8] sm:$0xff]
  %v61 = vld [vmem:[%s6 + $0x10] sm:$0xff]
  %v62 = vld [vmem:[%s6 + $0x18] sm:$0xff]
  %67 = vrot.lane.b32.xlu0 %v59, 127
  %v68 = vpop.permute.xlu0 %67
  %69 = vrot.lane.b32.xlu0 %v60, 127
  %v70 = vpop.permute.xlu0 %69
  %71 = vrot.lane.b32.xlu0 %v61, 127
  %v72 = vpop.permute.xlu0 %71
  %73 = vrot.lane.b32.xlu0 %v62, 127
  %v74 = vpop.permute.xlu0 %73
  %vm75 = vcmask 1039360
  %v76 = vsel %vm75, %v68, %v70
  %v77 = vsel %vm75, %v70, %v72
  %v78 = vsel %vm75, %v72, %v74
  %83 = vst [vmem:[#allocation2 + $0x20] sm:$0xff] %v76
  %84 = vst [vmem:[#allocation2 + $0x28] sm:$0xff] %v77
  %85 = vst [vmem:[#allocation2 + $0x30] sm:$0xff] %v78
  %86 = vst.msk [vmem:[#allocation2 + $0x38] sm:$0xff] %vm75, %v74
  %v87 = vld [vmem:[%s48] sm:$0xff]
  %89 = vrot.lane.b32.xlu0 %v87, 127
  %v90 = vpop.permute.xlu0 %89
  %vm92 = vcmask 1048568
  %93 = vst.msk [vmem:[#allocation2 + $0x38] sm:$0xff] %vm92, %v90
  %v94 = vld [vmem:[%s6] sm:$0xff]
  %v95 = vld [vmem:[%s6 + $0x8] sm:$0xff]
  %v96 = vld [vmem:[%s6 + $0x10] sm:$0xff]
  %v97 = vld [vmem:[%s6 + $0x18] sm:$0xff]
  %102 = vrot.lane.b32.xlu0 %v94, 126
  %v103 = vpop.permute.xlu0 %102
  %104 = vrot.lane.b32.xlu0 %v95, 126
  %v105 = vpop.permute.xlu0 %104
  %106 = vrot.lane.b32.xlu0 %v96, 126
  %v107 = vpop.permute.xlu0 %106
  %108 = vrot.lane.b32.xlu0 %v97, 126
  %v109 = vpop.permute.xlu0 %108
  %vm110 = vcmask 1031168
  %v111 = vsel %vm110, %v103, %v105
  %v112 = vsel %vm110, %v105, %v107
  %v113 = vsel %vm110, %v107, %v109
  %118 = vst [vmem:[#allocation2 + $0x40] sm:$0xff] %v111
  %119 = vst [vmem:[#allocation2 + $0x48] sm:$0xff] %v112
  %120 = vst [vmem:[#allocation2 + $0x50] sm:$0xff] %v113
  %121 = vst.msk [vmem:[#allocation2 + $0x58] sm:$0xff] %vm110, %v109
  %v122 = vld [vmem:[%s48] sm:$0xff]
  %124 = vrot.lane.b32.xlu0 %v122, 126
  %v125 = vpop.permute.xlu0 %124
  %vm127 = vcmask 1048560
  %128 = vst.msk [vmem:[#allocation2 + $0x58] sm:$0xff] %vm127, %v125
  %v129 = vld [vmem:[%s6] sm:$0xff]
  %v130 = vld [vmem:[%s6 + $0x8] sm:$0xff]
  %v131 = vld [vmem:[%s6 + $0x10] sm:$0xff]
  %v132 = vld [vmem:[%s6 + $0x18] sm:$0xff]
  %137 = vrot.lane.b32.xlu0 %v129, 122
  %v138 = vpop.permute.xlu0 %137
  %139 = vrot.lane.b32.xlu0 %v130, 122
  %v140 = vpop.permute.xlu0 %139
  %141 = vrot.lane.b32.xlu0 %v131, 122
  %v142 = vpop.permute.xlu0 %141
  %143 = vrot.lane.b32.xlu0 %v132, 122
  %v144 = vpop.permute.xlu0 %143
  %vm145 = vcmask 998400
  %v146 = vsel %vm145, %v138, %v140
  %v147 = vsel %vm145, %v140, %v142
  %v148 = vsel %vm145, %v142, %v144
  %153 = vst [vmem:[#allocation2 + $0x60] sm:$0xff] %v146
  %154 = vst [vmem:[#allocation2 + $0x68] sm:$0xff] %v147
  %155 = vst [vmem:[#allocation2 + $0x70] sm:$0xff] %v148
  %156 = vst.msk [vmem:[#allocation2 + $0x78] sm:$0xff] %vm145, %v144
  %v157 = vld [vmem:[%s48] sm:$0xff]
  %159 = vrot.lane.b32.xlu0 %v157, 122
  %v160 = vpop.permute.xlu0 %159
  %vm162 = vcmask 1048528
  %163 = vst.msk [vmem:[#allocation2 + $0x78] sm:$0xff] %vm162, %v160
  %v164 = vld [vmem:[%s6] sm:$0xff]
  %v165 = vld [vmem:[%s6 + $0x8] sm:$0xff]
  %v166 = vld [vmem:[%s6 + $0x10] sm:$0xff]
  %v167 = vld [vmem:[%s6 + $0x18] sm:$0xff]
  %172 = vrot.lane.b32.xlu0 %v164, 121
  %v173 = vpop.permute.xlu0 %172
  %174 = vrot.lane.b32.xlu0 %v165, 121
  %v175 = vpop.permute.xlu0 %174
  %176 = vrot.lane.b32.xlu0 %v166, 121
  %v177 = vpop.permute.xlu0 %176
  %178 = vrot.lane.b32.xlu0 %v167, 121
  %v179 = vpop.permute.xlu0 %178
  %vm180 = vcmask 990208
  %v181 = vsel %vm180, %v173, %v175
  %v182 = vsel %vm180, %v175, %v177
  %v183 = vsel %vm180, %v177, %v179
  %188 = vst [vmem:[#allocation2 + $0x80] sm:$0xff] %v181
  %189 = vst [vmem:[#allocation2 + $0x88] sm:$0xff] %v182
  %190 = vst [vmem:[#allocation2 + $0x90] sm:$0xff] %v183
  %191 = vst.msk [vmem:[#allocation2 + $0x98] sm:$0xff] %vm180, %v179
  %v192 = vld [vmem:[%s48] sm:$0xff]
  %194 = vrot.lane.b32.xlu0 %v192, 121
  %v195 = vpop.permute.xlu0 %194
  %vm197 = vcmask 1048520
  %198 = vst.msk [vmem:[#allocation2 + $0x98] sm:$0xff] %vm197, %v195
  %v199 = vld [vmem:[%s6] sm:$0xff]
  %v200 = vld [vmem:[%s6 + $0x8] sm:$0xff]
  %v201 = vld [vmem:[%s6 + $0x10] sm:$0xff]
  %v202 = vld [vmem:[%s6 + $0x18] sm:$0xff]
  %207 = vrot.lane.b32.xlu0 %v199, 120
  %v208 = vpop.permute.xlu0 %207
  %209 = vrot.lane.b32.xlu0 %v200, 120
  %v210 = vpop.permute.xlu0 %209
  %211 = vrot.lane.b32.xlu0 %v201, 120
  %v212 = vpop.permute.xlu0 %211
  %213 = vrot.lane.b32.xlu0 %v202, 120
  %v214 = vpop.permute.xlu0 %213
  %vm215 = vcmask 982016
  %v216 = vsel %vm215, %v208, %v210
  %v217 = vsel %vm215, %v210, %v212
  %v218 = vsel %vm215, %v212, %v214
  %223 = vst [vmem:[#allocation2 + $0xa0] sm:$0xff] %v216
  %224 = vst [vmem:[#allocation2 + $0xa8] sm:$0xff] %v217
  %225 = vst [vmem:[#allocation2 + $0xb0] sm:$0xff] %v218
  %226 = vst.msk [vmem:[#allocation2 + $0xb8] sm:$0xff] %vm215, %v214
  %v227 = vld [vmem:[%s48] sm:$0xff]
  %229 = vrot.lane.b32.xlu0 %v227, 120
  %v230 = vpop.permute.xlu0 %229
  %vm232 = vcmask 1048512
  %233 = vst.msk [vmem:[#allocation2 + $0xb8] sm:$0xff] %vm232, %v230
  %v234 = vld [vmem:[%s6] sm:$0xff]
  %v235 = vld [vmem:[%s6 + $0x8] sm:$0xff]
  %v236 = vld [vmem:[%s6 + $0x10] sm:$0xff]
  %v237 = vld [vmem:[%s6 + $0x18] sm:$0xff]
  %242 = vrot.lane.b32.xlu0 %v234, 116
  %v243 = vpop.permute.xlu0 %242
  %244 = vrot.lane.b32.xlu0 %v235, 116
  %v245 = vpop.permute.xlu0 %244
  %246 = vrot.lane.b32.xlu0 %v236, 116
  %v247 = vpop.permute.xlu0 %246
  %248 = vrot.lane.b32.xlu0 %v237, 116
  %v249 = vpop.permute.xlu0 %248
  %vm250 = vcmask 949248
  %v251 = vsel %vm250, %v243, %v245
  %v252 = vsel %vm250, %v245, %v247
  %v253 = vsel %vm250, %v247, %v249
  %258 = vst [vmem:[#allocation2 + $0xc0] sm:$0xff] %v251
  %259 = vst [vmem:[#allocation2 + $0xc8] sm:$0xff] %v252
  %260 = vst [vmem:[#allocation2 + $0xd0] sm:$0xff] %v253
  %261 = vst.msk [vmem:[#allocation2 + $0xd8] sm:$0xff] %vm250, %v249
  %v262 = vld [vmem:[%s48] sm:$0xff]
  %264 = vrot.lane.b32.xlu0 %v262, 116
  %v265 = vpop.permute.xlu0 %264
  %vm267 = vcmask 1048480
  %268 = vst.msk [vmem:[#allocation2 + $0xd8] sm:$0xff] %vm267, %v265
  %v269 = vld [vmem:[%s6] sm:$0xff]
  %v270 = vld [vmem:[%s6 + $0x8] sm:$0xff]
  %v271 = vld [vmem:[%s6 + $0x10] sm:$0xff]
  %v272 = vld [vmem:[%s6 + $0x18] sm:$0xff]
  %277 = vrot.lane.b32.xlu0 %v269, 115
  %v278 = vpop.permute.xlu0 %277
  %279 = vrot.lane.b32.xlu0 %v270, 115
  %v280 = vpop.permute.xlu0 %279
  %281 = vrot.lane.b32.xlu0 %v271, 115
  %v282 = vpop.permute.xlu0 %281
  %283 = vrot.lane.b32.xlu0 %v272, 115
  %v284 = vpop.permute.xlu0 %283
  %vm285 = vcmask 941056
  %v286 = vsel %vm285, %v278, %v280
  %v287 = vsel %vm285, %v280, %v282
  %v288 = vsel %vm285, %v282, %v284
  %293 = vst [vmem:[#allocation2 + $0xe0] sm:$0xff] %v286
  %294 = vst [vmem:[#allocation2 + $0xe8] sm:$0xff] %v287
  %295 = vst [vmem:[#allocation2 + $0xf0] sm:$0xff] %v288
  %296 = vst.msk [vmem:[#allocation2 + $0xf8] sm:$0xff] %vm285, %v284
  %v297 = vld [vmem:[%s48] sm:$0xff]
  %299 = vrot.lane.b32.xlu0 %v297, 115
  %v300 = vpop.permute.xlu0 %299
  %vm302 = vcmask 1048472
  %303 = vst.msk [vmem:[#allocation2 + $0xf8] sm:$0xff] %vm302, %v300
  %v304 = vld [vmem:[%s6] sm:$0xff]
  %v305 = vld [vmem:[%s6 + $0x8] sm:$0xff]
  %v306 = vld [vmem:[%s6 + $0x10] sm:$0xff]
  %v307 = vld [vmem:[%s6 + $0x18] sm:$0xff]
  %312 = vrot.lane.b32.xlu0 %v304, 114
  %v313 = vpop.permute.xlu0 %312
  %314 = vrot.lane.b32.xlu0 %v305, 114
  %v315 = vpop.permute.xlu0 %314
  %316 = vrot.lane.b32.xlu0 %v306, 114
  %v317 = vpop.permute.xlu0 %316
  %318 = vrot.lane.b32.xlu0 %v307, 114
  %v319 = vpop.permute.xlu0 %318
  %vm320 = vcmask 932864
  %v321 = vsel %vm320, %v313, %v315
  %v322 = vsel %vm320, %v315, %v317
  %v323 = vsel %vm320, %v317, %v319
  %328 = vst [vmem:[#allocation2 + $0x100] sm:$0xff] %v321
  %329 = vst [vmem:[#allocation2 + $0x108] sm:$0xff] %v322
  %330 = vst [vmem:[#allocation2 + $0x110] sm:$0xff] %v323
  %331 = vst.msk [vmem:[#allocation2 + $0x118] sm:$0xff] %vm320, %v319
  %v332 = vld [vmem:[%s48] sm:$0xff]
  %334 = vrot.lane.b32.xlu0 %v332, 114
  %v335 = vpop.permute.xlu0 %334
  %vm337 = vcmask 1048464
  %338 = vst.msk [vmem:[#allocation2 + $0x118] sm:$0xff] %vm337, %v335
  %v339 = vld [vmem:[%s6] sm:$0xff]
  %v340 = vld [vmem:[%s6 + $0x8] sm:$0xff]
  %v341 = vld [vmem:[%s6 + $0x10] sm:$0xff]
  %v342 = vld [vmem:[%s6 + $0x18] sm:$0xff]
  %347 = vrot.lane.b32.xlu0 %v339, 92
  %v348 = vpop.permute.xlu0 %347
  %349 = vrot.lane.b32.xlu0 %v340, 92
  %v350 = vpop.permute.xlu0 %349
  %351 = vrot.lane.b32.xlu0 %v341, 92
  %v352 = vpop.permute.xlu0 %351
  %353 = vrot.lane.b32.xlu0 %v342, 92
  %v354 = vpop.permute.xlu0 %353
  %vm355 = vcmask 752640
  %v356 = vsel %vm355, %v348, %v350
  %v357 = vsel %vm355, %v350, %v352
  %v358 = vsel %vm355, %v352, %v354
  %363 = vst [vmem:[#allocation2 + $0x120] sm:$0xff] %v356
  %364 = vst [vmem:[#allocation2 + $0x128] sm:$0xff] %v357
  %365 = vst [vmem:[#allocation2 + $0x130] sm:$0xff] %v358
  %366 = vst.msk [vmem:[#allocation2 + $0x138] sm:$0xff] %vm355, %v354
  %v367 = vld [vmem:[%s48] sm:$0xff]
  %369 = vrot.lane.b32.xlu0 %v367, 92
  %v370 = vpop.permute.xlu0 %369
  %vm372 = vcmask 1048288
  %373 = vst.msk [vmem:[#allocation2 + $0x138] sm:$0xff] %vm372, %v370
  %v374 = vld [vmem:[%s6] sm:$0xff]
  %v375 = vld [vmem:[%s6 + $0x8] sm:$0xff]
  %v376 = vld [vmem:[%s6 + $0x10] sm:$0xff]
  %v377 = vld [vmem:[%s6 + $0x18] sm:$0xff]
  %382 = vrot.lane.b32.xlu0 %v374, 91
  %v383 = vpop.permute.xlu0 %382
  %384 = vrot.lane.b32.xlu0 %v375, 91
  %v385 = vpop.permute.xlu0 %384
  %386 = vrot.lane.b32.xlu0 %v376, 91
  %v387 = vpop.permute.xlu0 %386
  %388 = vrot.lane.b32.xlu0 %v377, 91
  %v389 = vpop.permute.xlu0 %388
  %vm390 = vcmask 744448
  %v391 = vsel %vm390, %v383, %v385
  %v392 = vsel %vm390, %v385, %v387
  %v393 = vsel %vm390, %v387, %v389
  %398 = vst [vmem:[#allocation2 + $0x140] sm:$0xff] %v391
  %399 = vst [vmem:[#allocation2 + $0x148] sm:$0xff] %v392
  %400 = vst [vmem:[#allocation2 + $0x150] sm:$0xff] %v393
  %401 = vst.msk [vmem:[#allocation2 + $0x158] sm:$0xff] %vm390, %v389
  %v402 = vld [vmem:[%s48] sm:$0xff]
  %404 = vrot.lane.b32.xlu0 %v402, 91
  %v405 = vpop.permute.xlu0 %404
  %vm407 = vcmask 1048280
  %408 = vst.msk [vmem:[#allocation2 + $0x158] sm:$0xff] %vm407, %v405
  %v409 = vld [vmem:[%s6] sm:$0xff]
  %v410 = vld [vmem:[%s6 + $0x8] sm:$0xff]
  %v411 = vld [vmem:[%s6 + $0x10] sm:$0xff]
  %v412 = vld [vmem:[%s6 + $0x18] sm:$0xff]
  %417 = vrot.lane.b32.xlu0 %v409, 90
  %v418 = vpop.permute.xlu0 %417
  %419 = vrot.lane.b32.xlu0 %v410, 90
  %v420 = vpop.permute.xlu0 %419
  %421 = vrot.lane.b32.xlu0 %v411, 90
  %v422 = vpop.permute.xlu0 %421
  %423 = vrot.lane.b32.xlu0 %v412, 90
  %v424 = vpop.permute.xlu0 %423
  %vm425 = vcmask 736256
  %v426 = vsel %vm425, %v418, %v420
  %v427 = vsel %vm425, %v420, %v422
  %v428 = vsel %vm425, %v422, %v424
  %433 = vst [vmem:[#allocation2 + $0x160] sm:$0xff] %v426
  %434 = vst [vmem:[#allocation2 + $0x168] sm:$0xff] %v427
  %435 = vst [vmem:[#allocation2 + $0x170] sm:$0xff] %v428
  %436 = vst.msk [vmem:[#allocation2 + $0x178] sm:$0xff] %vm425, %v424
  %v437 = vld [vmem:[%s48] sm:$0xff]
  %439 = vrot.lane.b32.xlu0 %v437, 90
  %v440 = vpop.permute.xlu0 %439
  %vm442 = vcmask 1048272
  %443 = vst.msk [vmem:[#allocation2 + $0x178] sm:$0xff] %vm442, %v440
  %v444 = vld [vmem:[%s6] sm:$0xff]
  %v445 = vld [vmem:[%s6 + $0x8] sm:$0xff]
  %v446 = vld [vmem:[%s6 + $0x10] sm:$0xff]
  %v447 = vld [vmem:[%s6 + $0x18] sm:$0xff]
  %452 = vrot.lane.b32.xlu0 %v444, 86
  %v453 = vpop.permute.xlu0 %452
  %454 = vrot.lane.b32.xlu0 %v445, 86
  %v455 = vpop.permute.xlu0 %454
  %456 = vrot.lane.b32.xlu0 %v446, 86
  %v457 = vpop.permute.xlu0 %456
  %458 = vrot.lane.b32.xlu0 %v447, 86
  %v459 = vpop.permute.xlu0 %458
  %vm460 = vcmask 703488
  %v461 = vsel %vm460, %v453, %v455
  %v462 = vsel %vm460, %v455, %v457
  %v463 = vsel %vm460, %v457, %v459
  %468 = vst [vmem:[#allocation2 + $0x180] sm:$0xff] %v461
  %469 = vst [vmem:[#allocation2 + $0x188] sm:$0xff] %v462
  %470 = vst [vmem:[#allocation2 + $0x190] sm:$0xff] %v463
  %471 = vst.msk [vmem:[#allocation2 + $0x198] sm:$0xff] %vm460, %v459
  %v472 = vld [vmem:[%s48] sm:$0xff]
  %474 = vrot.lane.b32.xlu0 %v472, 86
  %v475 = vpop.permute.xlu0 %474
  %vm477 = vcmask 1048240
  %478 = vst.msk [vmem:[#allocation2 + $0x198] sm:$0xff] %vm477, %v475
  %v479 = vld [vmem:[%s6] sm:$0xff]
  %v480 = vld [vmem:[%s6 + $0x8] sm:$0xff]
  %v481 = vld [vmem:[%s6 + $0x10] sm:$0xff]
  %v482 = vld [vmem:[%s6 + $0x18] sm:$0xff]
  %487 = vrot.lane.b32.xlu0 %v479, 85
  %v488 = vpop.permute.xlu0 %487
  %489 = vrot.lane.b32.xlu0 %v480, 85
  %v490 = vpop.permute.xlu0 %489
  %491 = vrot.lane.b32.xlu0 %v481, 85
  %v492 = vpop.permute.xlu0 %491
  %493 = vrot.lane.b32.xlu0 %v482, 85
  %v494 = vpop.permute.xlu0 %493
  %vm495 = vcmask 695296
  %v496 = vsel %vm495, %v488, %v490
  %v497 = vsel %vm495, %v490, %v492
  %v498 = vsel %vm495, %v492, %v494
  %503 = vst [vmem:[#allocation2 + $0x1a0] sm:$0xff] %v496
  %504 = vst [vmem:[#allocation2 + $0x1a8] sm:$0xff] %v497
  %505 = vst [vmem:[#allocation2 + $0x1b0] sm:$0xff] %v498
  %506 = vst.msk [vmem:[#allocation2 + $0x1b8] sm:$0xff] %vm495, %v494
  %v507 = vld [vmem:[%s48] sm:$0xff]
  %509 = vrot.lane.b32.xlu0 %v507, 85
  %v510 = vpop.permute.xlu0 %509
  %vm512 = vcmask 1048232
  %513 = vst.msk [vmem:[#allocation2 + $0x1b8] sm:$0xff] %vm512, %v510
  %v514 = vld [vmem:[%s6] sm:$0xff]
  %v515 = vld [vmem:[%s6 + $0x8] sm:$0xff]
  %v516 = vld [vmem:[%s6 + $0x10] sm:$0xff]
  %v517 = vld [vmem:[%s6 + $0x18] sm:$0xff]
  %522 = vrot.lane.b32.xlu0 %v514, 84
  %v523 = vpop.permute.xlu0 %522
  %524 = vrot.lane.b32.xlu0 %v515, 84
  %v525 = vpop.permute.xlu0 %524
  %526 = vrot.lane.b32.xlu0 %v516, 84
  %v527 = vpop.permute.xlu0 %526
  %528 = vrot.lane.b32.xlu0 %v517, 84
  %v529 = vpop.permute.xlu0 %528
  %vm530 = vcmask 687104
  %v531 = vsel %vm530, %v523, %v525
  %v532 = vsel %vm530, %v525, %v527
  %v533 = vsel %vm530, %v527, %v529
  %538 = vst [vmem:[#allocation2 + $0x1c0] sm:$0xff] %v531
  %539 = vst [vmem:[#allocation2 + $0x1c8] sm:$0xff] %v532
  %540 = vst [vmem:[#allocation2 + $0x1d0] sm:$0xff] %v533
  %541 = vst.msk [vmem:[#allocation2 + $0x1d8] sm:$0xff] %vm530, %v529
  %v542 = vld [vmem:[%s48] sm:$0xff]
  %544 = vrot.lane.b32.xlu0 %v542, 84
  %v545 = vpop.permute.xlu0 %544
  %vm547 = vcmask 1048224
  %548 = vst.msk [vmem:[#allocation2 + $0x1d8] sm:$0xff] %vm547, %v545
  %v549 = vld [vmem:[%s6] sm:$0xff]
  %v550 = vld [vmem:[%s6 + $0x8] sm:$0xff]
  %v551 = vld [vmem:[%s6 + $0x10] sm:$0xff]
  %v552 = vld [vmem:[%s6 + $0x18] sm:$0xff]
  %557 = vrot.lane.b32.xlu0 %v549, 80
  %v558 = vpop.permute.xlu0 %557
  %559 = vrot.lane.b32.xlu0 %v550, 80
  %v560 = vpop.permute.xlu0 %559
  %561 = vrot.lane.b32.xlu0 %v551, 80
  %v562 = vpop.permute.xlu0 %561
  %563 = vrot.lane.b32.xlu0 %v552, 80
  %v564 = vpop.permute.xlu0 %563
  %vm565 = vcmask 654336
  %v566 = vsel %vm565, %v558, %v560
  %v567 = vsel %vm565, %v560, %v562
  %v568 = vsel %vm565, %v562, %v564
  %573 = vst [vmem:[#allocation2 + $0x1e0] sm:$0xff] %v566
  %574 = vst [vmem:[#allocation2 + $0x1e8] sm:$0xff] %v567
  %575 = vst [vmem:[#allocation2 + $0x1f0] sm:$0xff] %v568
  %576 = vst.msk [vmem:[#allocation2 + $0x1f8] sm:$0xff] %vm565, %v564
  %v577 = vld [vmem:[%s48] sm:$0xff]
  %579 = vrot.lane.b32.xlu0 %v577, 80
  %v580 = vpop.permute.xlu0 %579
  %vm582 = vcmask 1048192
  %583 = vst.msk [vmem:[#allocation2 + $0x1f8] sm:$0xff] %vm582, %v580
  %v584 = vld [vmem:[%s6] sm:$0xff]
  %v585 = vld [vmem:[%s6 + $0x8] sm:$0xff]
  %v586 = vld [vmem:[%s6 + $0x10] sm:$0xff]
  %v587 = vld [vmem:[%s6 + $0x18] sm:$0xff]
  %592 = vrot.lane.b32.xlu0 %v584, 79
  %v593 = vpop.permute.xlu0 %592
  %594 = vrot.lane.b32.xlu0 %v585, 79
  %v595 = vpop.permute.xlu0 %594
  %596 = vrot.lane.b32.xlu0 %v586, 79
  %v597 = vpop.permute.xlu0 %596
  %598 = vrot.lane.b32.xlu0 %v587, 79
  %v599 = vpop.permute.xlu0 %598
  %vm600 = vcmask 646144
  %v601 = vsel %vm600, %v593, %v595
  %v602 = vsel %vm600, %v595, %v597
  %v603 = vsel %vm600, %v597, %v599
  %608 = vst [vmem:[#allocation2 + $0x200] sm:$0xff] %v601
  %609 = vst [vmem:[#allocation2 + $0x208] sm:$0xff] %v602
  %610 = vst [vmem:[#allocation2 + $0x210] sm:$0xff] %v603
  %611 = vst.msk [vmem:[#allocation2 + $0x218] sm:$0xff] %vm600, %v599
  %v612 = vld [vmem:[%s48] sm:$0xff]
  %614 = vrot.lane.b32.xlu0 %v612, 79
  %v615 = vpop.permute.xlu0 %614
  %vm617 = vcmask 1048184
  %618 = vst.msk [vmem:[#allocation2 + $0x218] sm:$0xff] %vm617, %v615
  %v619 = vld [vmem:[%s6] sm:$0xff]
  %v620 = vld [vmem:[%s6 + $0x8] sm:$0xff]
  %v621 = vld [vmem:[%s6 + $0x10] sm:$0xff]
  %v622 = vld [vmem:[%s6 + $0x18] sm:$0xff]
  %627 = vrot.lane.b32.xlu0 %v619, 78
  %v628 = vpop.permute.xlu0 %627
  %629 = vrot.lane.b32.xlu0 %v620, 78
  %v630 = vpop.permute.xlu0 %629
  %631 = vrot.lane.b32.xlu0 %v621, 78
  %v632 = vpop.permute.xlu0 %631
  %633 = vrot.lane.b32.xlu0 %v622, 78
  %v634 = vpop.permute.xlu0 %633
  %vm635 = vcmask 637952
  %v636 = vsel %vm635, %v628, %v630
  %v637 = vsel %vm635, %v630, %v632
  %v638 = vsel %vm635, %v632, %v634
  %643 = vst [vmem:[#allocation2 + $0x220] sm:$0xff] %v636
  %644 = vst [vmem:[#allocation2 + $0x228] sm:$0xff] %v637
  %645 = vst [vmem:[#allocation2 + $0x230] sm:$0xff] %v638
  %646 = vst.msk [vmem:[#allocation2 + $0x238] sm:$0xff] %vm635, %v634
  %v647 = vld [vmem:[%s48] sm:$0xff]
  %649 = vrot.lane.b32.xlu0 %v647, 78
  %v650 = vpop.permute.xlu0 %649
  %vm652 = vcmask 1048176
  %653 = vst.msk [vmem:[#allocation2 + $0x238] sm:$0xff] %vm652, %v650
  %v654 = vld [vmem:[%s6] sm:$0xff]
  %v655 = vld [vmem:[%s6 + $0x8] sm:$0xff]
  %v656 = vld [vmem:[%s6 + $0x10] sm:$0xff]
  %v657 = vld [vmem:[%s6 + $0x18] sm:$0xff]
  %662 = vrot.lane.b32.xlu0 %v654, 56
  %v663 = vpop.permute.xlu0 %662
  %664 = vrot.lane.b32.xlu0 %v655, 56
  %v665 = vpop.permute.xlu0 %664
  %666 = vrot.lane.b32.xlu0 %v656, 56
  %v667 = vpop.permute.xlu0 %666
  %668 = vrot.lane.b32.xlu0 %v657, 56
  %v669 = vpop.permute.xlu0 %668
  %vm670 = vcmask 457728
  %v671 = vsel %vm670, %v663, %v665
  %v672 = vsel %vm670, %v665, %v667
  %v673 = vsel %vm670, %v667, %v669
  %678 = vst [vmem:[#allocation2 + $0x240] sm:$0xff] %v671
  %679 = vst [vmem:[#allocation2 + $0x248] sm:$0xff] %v672
  %680 = vst [vmem:[#allocation2 + $0x250] sm:$0xff] %v673
  %681 = vst.msk [vmem:[#allocation2 + $0x258] sm:$0xff] %vm670, %v669
  %v682 = vld [vmem:[%s48] sm:$0xff]
  %684 = vrot.lane.b32.xlu0 %v682, 56
  %v685 = vpop.permute.xlu0 %684
  %vm687 = vcmask 1048000
  %688 = vst.msk [vmem:[#allocation2 + $0x258] sm:$0xff] %vm687, %v685
  %v689 = vld [vmem:[%s6] sm:$0xff]
  %v690 = vld [vmem:[%s6 + $0x8] sm:$0xff]
  %v691 = vld [vmem:[%s6 + $0x10] sm:$0xff]
  %v692 = vld [vmem:[%s6 + $0x18] sm:$0xff]
  %697 = vrot.lane.b32.xlu0 %v689, 55
  %v698 = vpop.permute.xlu0 %697
  %699 = vrot.lane.b32.xlu0 %v690, 55
  %v700 = vpop.permute.xlu0 %699
  %701 = vrot.lane.b32.xlu0 %v691, 55
  %v702 = vpop.permute.xlu0 %701
  %703 = vrot.lane.b32.xlu0 %v692, 55
  %v704 = vpop.permute.xlu0 %703
  %vm705 = vcmask 449536
  %v706 = vsel %vm705, %v698, %v700
  %v707 = vsel %vm705, %v700, %v702
  %v708 = vsel %vm705, %v702, %v704
  %713 = vst [vmem:[#allocation2 + $0x260] sm:$0xff] %v706
  %714 = vst [vmem:[#allocation2 + $0x268] sm:$0xff] %v707
  %715 = vst [vmem:[#allocation2 + $0x270] sm:$0xff] %v708
  %716 = vst.msk [vmem:[#allocation2 + $0x278] sm:$0xff] %vm705, %v704
  %v717 = vld [vmem:[%s48] sm:$0xff]
  %719 = vrot.lane.b32.xlu0 %v717, 55
  %v720 = vpop.permute.xlu0 %719
  %vm722 = vcmask 1047992
  %723 = vst.msk [vmem:[#allocation2 + $0x278] sm:$0xff] %vm722, %v720
  %v724 = vld [vmem:[%s6] sm:$0xff]
  %v725 = vld [vmem:[%s6 + $0x8] sm:$0xff]
  %v726 = vld [vmem:[%s6 + $0x10] sm:$0xff]
  %v727 = vld [vmem:[%s6 + $0x18] sm:$0xff]
  %732 = vrot.lane.b32.xlu0 %v724, 54
  %v733 = vpop.permute.xlu0 %732
  %734 = vrot.lane.b32.xlu0 %v725, 54
  %v735 = vpop.permute.xlu0 %734
  %736 = vrot.lane.b32.xlu0 %v726, 54
  %v737 = vpop.permute.xlu0 %736
  %738 = vrot.lane.b32.xlu0 %v727, 54
  %v739 = vpop.permute.xlu0 %738
  %vm740 = vcmask 441344
  %v741 = vsel %vm740, %v733, %v735
  %v742 = vsel %vm740, %v735, %v737
  %v743 = vsel %vm740, %v737, %v739
  %748 = vst [vmem:[#allocation2 + $0x280] sm:$0xff] %v741
  %749 = vst [vmem:[#allocation2 + $0x288] sm:$0xff] %v742
  %750 = vst [vmem:[#allocation2 + $0x290] sm:$0xff] %v743
  %751 = vst.msk [vmem:[#allocation2 + $0x298] sm:$0xff] %vm740, %v739
  %v752 = vld [vmem:[%s48] sm:$0xff]
  %754 = vrot.lane.b32.xlu0 %v752, 54
  %v755 = vpop.permute.xlu0 %754
  %vm757 = vcmask 1047984
  %758 = vst.msk [vmem:[#allocation2 + $0x298] sm:$0xff] %vm757, %v755
  %v759 = vld [vmem:[%s6] sm:$0xff]
  %v760 = vld [vmem:[%s6 + $0x8] sm:$0xff]
  %v761 = vld [vmem:[%s6 + $0x10] sm:$0xff]
  %v762 = vld [vmem:[%s6 + $0x18] sm:$0xff]
  %767 = vrot.lane.b32.xlu0 %v759, 50
  %v768 = vpop.permute.xlu0 %767
  %769 = vrot.lane.b32.xlu0 %v760, 50
  %v770 = vpop.permute.xlu0 %769
  %771 = vrot.lane.b32.xlu0 %v761, 50
  %v772 = vpop.permute.xlu0 %771
  %773 = vrot.lane.b32.xlu0 %v762, 50
  %v774 = vpop.permute.xlu0 %773
  %vm775 = vcmask 408576
  %v776 = vsel %vm775, %v768, %v770
  %v777 = vsel %vm775, %v770, %v772
  %v778 = vsel %vm775, %v772, %v774
  %783 = vst [vmem:[#allocation2 + $0x2a0] sm:$0xff] %v776
  %784 = vst [vmem:[#allocation2 + $0x2a8] sm:$0xff] %v777
  %785 = vst [vmem:[#allocation2 + $0x2b0] sm:$0xff] %v778
  %786 = vst.msk [vmem:[#allocation2 + $0x2b8] sm:$0xff] %vm775, %v774
  %v787 = vld [vmem:[%s48] sm:$0xff]
  %789 = vrot.lane.b32.xlu0 %v787, 50
  %v790 = vpop.permute.xlu0 %789
  %vm792 = vcmask 1047952
  %793 = vst.msk [vmem:[#allocation2 + $0x2b8] sm:$0xff] %vm792, %v790
  %v794 = vld [vmem:[%s6] sm:$0xff]
  %v795 = vld [vmem:[%s6 + $0x8] sm:$0xff]
  %v796 = vld [vmem:[%s6 + $0x10] sm:$0xff]
  %v797 = vld [vmem:[%s6 + $0x18] sm:$0xff]
  %802 = vrot.lane.b32.xlu0 %v794, 49
  %v803 = vpop.permute.xlu0 %802
  %804 = vrot.lane.b32.xlu0 %v795, 49
  %v805 = vpop.permute.xlu0 %804
  %806 = vrot.lane.b32.xlu0 %v796, 49
  %v807 = vpop.permute.xlu0 %806
  %808 = vrot.lane.b32.xlu0 %v797, 49
  %v809 = vpop.permute.xlu0 %808
  %vm810 = vcmask 400384
  %v811 = vsel %vm810, %v803, %v805
  %v812 = vsel %vm810, %v805, %v807
  %v813 = vsel %vm810, %v807, %v809
  %818 = vst [vmem:[#allocation2 + $0x2c0] sm:$0xff] %v811
  %819 = vst [vmem:[#allocation2 + $0x2c8] sm:$0xff] %v812
  %820 = vst [vmem:[#allocation2 + $0x2d0] sm:$0xff] %v813
  %821 = vst.msk [vmem:[#allocation2 + $0x2d8] sm:$0xff] %vm810, %v809
  %v822 = vld [vmem:[%s48] sm:$0xff]
  %824 = vrot.lane.b32.xlu0 %v822, 49
  %v825 = vpop.permute.xlu0 %824
  %vm827 = vcmask 1047944
  %828 = vst.msk [vmem:[#allocation2 + $0x2d8] sm:$0xff] %vm827, %v825
  %v829 = vld [vmem:[%s6] sm:$0xff]
  %v830 = vld [vmem:[%s6 + $0x8] sm:$0xff]
  %v831 = vld [vmem:[%s6 + $0x10] sm:$0xff]
  %v832 = vld [vmem:[%s6 + $0x18] sm:$0xff]
  %837 = vrot.lane.b32.xlu0 %v829, 48
  %v838 = vpop.permute.xlu0 %837
  %839 = vrot.lane.b32.xlu0 %v830, 48
  %v840 = vpop.permute.xlu0 %839
  %841 = vrot.lane.b32.xlu0 %v831, 48
  %v842 = vpop.permute.xlu0 %841
  %843 = vrot.lane.b32.xlu0 %v832, 48
  %v844 = vpop.permute.xlu0 %843
  %vm845 = vcmask 392192
  %v846 = vsel %vm845, %v838, %v840
  %v847 = vsel %vm845, %v840, %v842
  %v848 = vsel %vm845, %v842, %v844
  %853 = vst [vmem:[#allocation2 + $0x2e0] sm:$0xff] %v846
  %854 = vst [vmem:[#allocation2 + $0x2e8] sm:$0xff] %v847
  %855 = vst [vmem:[#allocation2 + $0x2f0] sm:$0xff] %v848
  %856 = vst.msk [vmem:[#allocation2 + $0x2f8] sm:$0xff] %vm845, %v844
  %v857 = vld [vmem:[%s48] sm:$0xff]
  %859 = vrot.lane.b32.xlu0 %v857, 48
  %v860 = vpop.permute.xlu0 %859
  %vm862 = vcmask 1047936
  %863 = vst.msk [vmem:[#allocation2 + $0x2f8] sm:$0xff] %vm862, %v860
  %v864 = vld [vmem:[%s6] sm:$0xff]
  %v865 = vld [vmem:[%s6 + $0x8] sm:$0xff]
  %v866 = vld [vmem:[%s6 + $0x10] sm:$0xff]
  %v867 = vld [vmem:[%s6 + $0x18] sm:$0xff]
  %872 = vrot.lane.b32.xlu0 %v864, 44
  %v873 = vpop.permute.xlu0 %872
  %874 = vrot.lane.b32.xlu0 %v865, 44
  %v875 = vpop.permute.xlu0 %874
  %876 = vrot.lane.b32.xlu0 %v866, 44
  %v877 = vpop.permute.xlu0 %876
  %878 = vrot.lane.b32.xlu0 %v867, 44
  %v879 = vpop.permute.xlu0 %878
  %vm880 = vcmask 359424
  %v881 = vsel %vm880, %v873, %v875
  %v882 = vsel %vm880, %v875, %v877
  %v883 = vsel %vm880, %v877, %v879
  %888 = vst [vmem:[#allocation2 + $0x300] sm:$0xff] %v881
  %889 = vst [vmem:[#allocation2 + $0x308] sm:$0xff] %v882
  %890 = vst [vmem:[#allocation2 + $0x310] sm:$0xff] %v883
  %891 = vst.msk [vmem:[#allocation2 + $0x318] sm:$0xff] %vm880, %v879
  %v892 = vld [vmem:[%s48] sm:$0xff]
  %894 = vrot.lane.b32.xlu0 %v892, 44
  %v895 = vpop.permute.xlu0 %894
  %vm897 = vcmask 1047904
  %898 = vst.msk [vmem:[#allocation2 + $0x318] sm:$0xff] %vm897, %v895
  %v899 = vld [vmem:[%s6] sm:$0xff]
  %v900 = vld [vmem:[%s6 + $0x8] sm:$0xff]
  %v901 = vld [vmem:[%s6 + $0x10] sm:$0xff]
  %v902 = vld [vmem:[%s6 + $0x18] sm:$0xff]
  %907 = vrot.lane.b32.xlu0 %v899, 43
  %v908 = vpop.permute.xlu0 %907
  %909 = vrot.lane.b32.xlu0 %v900, 43
  %v910 = vpop.permute.xlu0 %909
  %911 = vrot.lane.b32.xlu0 %v901, 43
  %v912 = vpop.permute.xlu0 %911
  %913 = vrot.lane.b32.xlu0 %v902, 43
  %v914 = vpop.permute.xlu0 %913
  %vm915 = vcmask 351232
  %v916 = vsel %vm915, %v908, %v910
  %v917 = vsel %vm915, %v910, %v912
  %v918 = vsel %vm915, %v912, %v914
  %923 = vst [vmem:[#allocation2 + $0x320] sm:$0xff] %v916
  %924 = vst [vmem:[#allocation2 + $0x328] sm:$0xff] %v917
  %925 = vst [vmem:[#allocation2 + $0x330] sm:$0xff] %v918
  %926 = vst.msk [vmem:[#allocation2 + $0x338] sm:$0xff] %vm915, %v914
  %v927 = vld [vmem:[%s48] sm:$0xff]
  %929 = vrot.lane.b32.xlu0 %v927, 43
  %v930 = vpop.permute.xlu0 %929
  %vm932 = vcmask 1047896
  %933 = vst.msk [vmem:[#allocation2 + $0x338] sm:$0xff] %vm932, %v930
  %v934 = vld [vmem:[%s6] sm:$0xff]
  %v935 = vld [vmem:[%s6 + $0x8] sm:$0xff]
  %v936 = vld [vmem:[%s6 + $0x10] sm:$0xff]
  %v937 = vld [vmem:[%s6 + $0x18] sm:$0xff]
  %942 = vrot.lane.b32.xlu0 %v934, 42
  %v943 = vpop.permute.xlu0 %942
  %944 = vrot.lane.b32.xlu0 %v935, 42
  %v945 = vpop.permute.xlu0 %944
  %946 = vrot.lane.b32.xlu0 %v936, 42
  %v947 = vpop.permute.xlu0 %946
  %948 = vrot.lane.b32.xlu0 %v937, 42
  %v949 = vpop.permute.xlu0 %948
  %vm950 = vcmask 343040
  %v951 = vsel %vm950, %v943, %v945
  %v952 = vsel %vm950, %v945, %v947
  %v953 = vsel %vm950, %v947, %v949
  %958 = vst [vmem:[#allocation2 + $0x340] sm:$0xff] %v951
  %959 = vst [vmem:[#allocation2 + $0x348] sm:$0xff] %v952
  %960 = vst [vmem:[#allocation2 + $0x350] sm:$0xff] %v953
  %961 = vst.msk [vmem:[#allocation2 + $0x358] sm:$0xff] %vm950, %v949
  %v962 = vld [vmem:[%s48] sm:$0xff]
  %964 = vrot.lane.b32.xlu0 %v962, 42
  %v965 = vpop.permute.xlu0 %964
  %vm967 = vcmask 1047888
  %968 = vst.msk [vmem:[#allocation2 + $0x358] sm:$0xff] %vm967, %v965
  %v969 = vld [vmem:[%s0] sm:$0xff]
  %v970 = vld [vmem:[%s0 + $0x8] sm:$0xff]
  %v971 = vld [vmem:[#allocation2] sm:$0xff]
  %v972 = vld [vmem:[#allocation2 + $0x8] sm:$0xff]
  %v973 = vld [vmem:[#allocation2 + $0x10] sm:$0xff]
  %v974 = vld [vmem:[#allocation2 + $0x18] sm:$0xff]
  %v975 = vld [vmem:[#allocation2 + $0x20] sm:$0xff]
  %v976 = vld [vmem:[#allocation2 + $0x28] sm:$0xff]
  %v977 = vld [vmem:[#allocation2 + $0x30] sm:$0xff]
  %v978 = vld [vmem:[#allocation2 + $0x38] sm:$0xff]
  %v979 = vld [vmem:[#allocation2 + $0x40] sm:$0xff]
  %v980 = vld [vmem:[#allocation2 + $0x48] sm:$0xff]
  %v981 = vld [vmem:[#allocation2 + $0x50] sm:$0xff]
  %v982 = vld [vmem:[#allocation2 + $0x58] sm:$0xff]
  %v983 = vld [vmem:[#allocation2 + $0x60] sm:$0xff]
  %v984 = vld [vmem:[#allocation2 + $0x68] sm:$0xff]
  %v985 = vld [vmem:[#allocation2 + $0x70] sm:$0xff]
  %v986 = vld [vmem:[#allocation2 + $0x78] sm:$0xff]
  %v987 = vld [vmem:[#allocation2 + $0x80] sm:$0xff]
  %v988 = vld [vmem:[#allocation2 + $0x88] sm:$0xff]
  %v989 = vld [vmem:[#allocation2 + $0x90] sm:$0xff]
  %v990 = vld [vmem:[#allocation2 + $0x98] sm:$0xff]
  %v991 = vld [vmem:[#allocation2 + $0xa0] sm:$0xff]
  %v992 = vld [vmem:[#allocation2 + $0xa8] sm:$0xff]
  %v993 = vld [vmem:[#allocation2 + $0xb0] sm:$0xff]
  %v994 = vld [vmem:[#allocation2 + $0xb8] sm:$0xff]
  %v995 = vld [vmem:[#allocation2 + $0xc0] sm:$0xff]
  %v996 = vld [vmem:[#allocation2 + $0xc8] sm:$0xff]
  %v997 = vld [vmem:[#allocation2 + $0xd0] sm:$0xff]
  %v998 = vld [vmem:[#allocation2 + $0xd8] sm:$0xff]
  %v999 = vld [vmem:[#allocation2 + $0xe0] sm:$0xff]
  %v1000 = vld [vmem:[#allocation2 + $0xe8] sm:$0xff]
  %v1001 = vld [vmem:[#allocation2 + $0xf0] sm:$0xff]
  %v1002 = vld [vmem:[#allocation2 + $0xf8] sm:$0xff]
  %v1003 = vld [vmem:[#allocation2 + $0x100] sm:$0xff]
  %v1004 = vld [vmem:[#allocation2 + $0x108] sm:$0xff]
  %v1005 = vld [vmem:[#allocation2 + $0x110] sm:$0xff]
  %v1006 = vld [vmem:[#allocation2 + $0x118] sm:$0xff]
  %v1007 = vld [vmem:[#allocation2 + $0x120] sm:$0xff]
  %v1008 = vld [vmem:[#allocation2 + $0x128] sm:$0xff]
  %v1009 = vld [vmem:[#allocation2 + $0x130] sm:$0xff]
  %v1010 = vld [vmem:[#allocation2 + $0x138] sm:$0xff]
  %v1011 = vld [vmem:[#allocation2 + $0x140] sm:$0xff]
  %v1012 = vld [vmem:[#allocation2 + $0x148] sm:$0xff]
  %v1013 = vld [vmem:[#allocation2 + $0x150] sm:$0xff]
  %v1014 = vld [vmem:[#allocation2 + $0x158] sm:$0xff]
  %v1015 = vld [vmem:[#allocation2 + $0x160] sm:$0xff]
  %v1016 = vld [vmem:[#allocation2 + $0x168] sm:$0xff]
  %v1017 = vld [vmem:[#allocation2 + $0x170] sm:$0xff]
  %v1018 = vld [vmem:[#allocation2 + $0x178] sm:$0xff]
  %v1019 = vld [vmem:[#allocation2 + $0x180] sm:$0xff]
  %v1020 = vld [vmem:[#allocation2 + $0x188] sm:$0xff]
  %v1021 = vld [vmem:[#allocation2 + $0x190] sm:$0xff]
  %v1022 = vld [vmem:[#allocation2 + $0x198] sm:$0xff]
  %v1023 = vld [vmem:[#allocation2 + $0x1a0] sm:$0xff]
  %v1024 = vld [vmem:[#allocation2 + $0x1a8] sm:$0xff]
  %v1025 = vld [vmem:[#allocation2 + $0x1b0] sm:$0xff]
  %v1026 = vld [vmem:[#allocation2 + $0x1b8] sm:$0xff]
  %v1027 = vld [vmem:[#allocation2 + $0x1c0] sm:$0xff]
  %v1028 = vld [vmem:[#allocation2 + $0x1c8] sm:$0xff]
  %v1029 = vld [vmem:[#allocation2 + $0x1d0] sm:$0xff]
  %v1030 = vld [vmem:[#allocation2 + $0x1d8] sm:$0xff]
  %v1031 = vld [vmem:[#allocation2 + $0x1e0] sm:$0xff]
  %v1032 = vld [vmem:[#allocation2 + $0x1e8] sm:$0xff]
  %v1033 = vld [vmem:[#allocation2 + $0x1f0] sm:$0xff]
  %v1034 = vld [vmem:[#allocation2 + $0x1f8] sm:$0xff]
  %v1035 = vld [vmem:[#allocation2 + $0x200] sm:$0xff]
  %v1036 = vld [vmem:[#allocation2 + $0x208] sm:$0xff]
  %v1037 = vld [vmem:[#allocation2 + $0x210] sm:$0xff]
  %v1038 = vld [vmem:[#allocation2 + $0x218] sm:$0xff]
  %v1039 = vld [vmem:[#allocation2 + $0x220] sm:$0xff]
  %v1040 = vld [vmem:[#allocation2 + $0x228] sm:$0xff]
  %v1041 = vld [vmem:[#allocation2 + $0x230] sm:$0xff]
  %v1042 = vld [vmem:[#allocation2 + $0x238] sm:$0xff]
  %v1043 = vld [vmem:[#allocation2 + $0x240] sm:$0xff]
  %v1044 = vld [vmem:[#allocation2 + $0x248] sm:$0xff]
  %v1045 = vld [vmem:[#allocation2 + $0x250] sm:$0xff]
  %v1046 = vld [vmem:[#allocation2 + $0x258] sm:$0xff]
  %v1047 = vld [vmem:[#allocation2 + $0x260] sm:$0xff]
  %v1048 = vld [vmem:[#allocation2 + $0x268] sm:$0xff]
  %v1049 = vld [vmem:[#allocation2 + $0x270] sm:$0xff]
  %v1050 = vld [vmem:[#allocation2 + $0x278] sm:$0xff]
  %v1051 = vld [vmem:[#allocation2 + $0x280] sm:$0xff]
  %v1052 = vld [vmem:[#allocation2 + $0x288] sm:$0xff]
  %v1053 = vld [vmem:[#allocation2 + $0x290] sm:$0xff]
  %v1054 = vld [vmem:[#allocation2 + $0x298] sm:$0xff]
  %v1055 = vld [vmem:[#allocation2 + $0x2a0] sm:$0xff]
  %v1056 = vld [vmem:[#allocation2 + $0x2a8] sm:$0xff]
  %v1057 = vld [vmem:[#allocation2 + $0x2b0] sm:$0xff]
  %v1058 = vld [vmem:[#allocation2 + $0x2b8] sm:$0xff]
  %v1059 = vld [vmem:[#allocation2 + $0x2c0] sm:$0xff]
  %v1060 = vld [vmem:[#allocation2 + $0x2c8] sm:$0xff]
  %v1061 = vld [vmem:[#allocation2 + $0x2d0] sm:$0xff]
  %v1062 = vld [vmem:[#allocation2 + $0x2d8] sm:$0xff]
  %v1063 = vld [vmem:[#allocation2 + $0x2e0] sm:$0xff]
  %v1064 = vld [vmem:[#allocation2 + $0x2e8] sm:$0xff]
  %v1065 = vld [vmem:[#allocation2 + $0x2f0] sm:$0xff]
  %v1066 = vld [vmem:[#allocation2 + $0x2f8] sm:$0xff]
  %v1067 = vld [vmem:[#allocation2 + $0x300] sm:$0xff]
  %v1068 = vld [vmem:[#allocation2 + $0x308] sm:$0xff]
  %v1069 = vld [vmem:[#allocation2 + $0x310] sm:$0xff]
  %v1070 = vld [vmem:[#allocation2 + $0x318] sm:$0xff]
  %v1071 = vld [vmem:[#allocation2 + $0x320] sm:$0xff]
  %v1072 = vld [vmem:[#allocation2 + $0x328] sm:$0xff]
  %v1073 = vld [vmem:[#allocation2 + $0x330] sm:$0xff]
  %v1074 = vld [vmem:[#allocation2 + $0x338] sm:$0xff]
  %v1075 = vld [vmem:[#allocation2 + $0x340] sm:$0xff]
  %v1076 = vld [vmem:[#allocation2 + $0x348] sm:$0xff]
  %v1077 = vld [vmem:[#allocation2 + $0x350] sm:$0xff]
  %v1078 = vld [vmem:[#allocation2 + $0x358] sm:$0xff]
  %v1079 = vld [vmem:[%s1] sm:$0xff]
  %1081 = vset.pattern.permute.xlu0 0
  %1082 = vperm.xlu0 %1081, %v1079
  %v1083 = vpop.permute.xlu0 %1082
  %vm1085 = vcmask 719872
  %v1087 = vsel %vm1085, %v970, 0
  %1089 = vmatpush.msra.mxu0 %v1031
  %1090 = vmatpush.msra.mxu0 %v1027
  %1091 = vmatpush.msra.mxu0 %v1023
  %1092 = vmatpush.msra.mxu0 %v1019
  %1093 = vmatpush.msra.mxu0 %v1015
  %1094 = vmatpush.msra.mxu0 %v1011
  %1095 = vmatpush.msra.mxu0 %v1007
  %1096 = vmatpush.msra.mxu0 %v1003
  %1097 = vmatpush.msra.mxu0 %v999
  %1098 = vmatpush.msra.mxu0 %v995
  %1099 = vmatpush.msra.mxu0 %v991
  %1100 = vmatpush.msra.mxu0 %v987
  %1101 = vmatpush.msra.mxu0 %v983
  %1102 = vmatpush.msra.mxu0 %v979
  %1103 = vmatpush.msra.mxu0 %v975
  %1104 = vmatpush.msra.mxu0 %v971
  %1105 = vmatmul.f32.gmra.mxu0 %v969
  %v1106 = vpop.f32.mrf.mxu0
  %v1107 = vadd.f32 %v1083, %v1106
  %1108 = vdwg.mxu0
  %1109 = vmatpush.msra.mxu0 0.0
  %1110 = vmatpush.msra.mxu0 0.0
  %1111 = vmatpush.msra.mxu0 0.0
  %1112 = vmatpush.msra.mxu0 0.0
  %1113 = vmatpush.msra.mxu0 0.0
  %1114 = vmatpush.msra.mxu0 %v1075
  %1115 = vmatpush.msra.mxu0 %v1071
  %1116 = vmatpush.msra.mxu0 %v1067
  %1117 = vmatpush.msra.mxu0 %v1063
  %1118 = vmatpush.msra.mxu0 %v1059
  %1119 = vmatpush.msra.mxu0 %v1055
  %1120 = vmatpush.msra.mxu0 %v1051
  %1121 = vmatpush.msra.mxu0 %v1047
  %1122 = vmatpush.msra.mxu0 %v1043
  %1123 = vmatpush.msra.mxu0 %v1039
  %1124 = vmatpush.msra.mxu0 %v1035
  %1125 = vmatmul.f32.gmra.mxu0 %v1087
  %v1126 = vpop.f32.mrf.mxu0
  %v1127 = vadd.f32 %v1107, %v1126
  %1128 = vdwg.mxu0
  %1129 = vmatpush.msra.mxu0 %v1032
  %1130 = vmatpush.msra.mxu0 %v1028
  %1131 = vmatpush.msra.mxu0 %v1024
  %1132 = vmatpush.msra.mxu0 %v1020
  %1133 = vmatpush.msra.mxu0 %v1016
  %1134 = vmatpush.msra.mxu0 %v1012
  %1135 = vmatpush.msra.mxu0 %v1008
  %1136 = vmatpush.msra.mxu0 %v1004
  %1137 = vmatpush.msra.mxu0 %v1000
  %1138 = vmatpush.msra.mxu0 %v996
  %1139 = vmatpush.msra.mxu0 %v992
  %1140 = vmatpush.msra.mxu0 %v988
  %1141 = vmatpush.msra.mxu0 %v984
  %1142 = vmatpush.msra.mxu0 %v980
  %1143 = vmatpush.msra.mxu0 %v976
  %1144 = vmatpush.msra.mxu0 %v972
  %1145 = vmatmul.f32.gmra.mxu0 %v969
  %v1146 = vpop.f32.mrf.mxu0
  %v1147 = vadd.f32 %v1083, %v1146
  %1148 = vdwg.mxu0
  %1149 = vmatpush.msra.mxu0 0.0
  %1150 = vmatpush.msra.mxu0 0.0
  %1151 = vmatpush.msra.mxu0 0.0
  %1152 = vmatpush.msra.mxu0 0.0
  %1153 = vmatpush.msra.mxu0 0.0
  %1154 = vmatpush.msra.mxu0 %v1076
  %1155 = vmatpush.msra.mxu0 %v1072
  %1156 = vmatpush.msra.mxu0 %v1068
  %1157 = vmatpush.msra.mxu0 %v1064
  %1158 = vmatpush.msra.mxu0 %v1060
  %1159 = vmatpush.msra.mxu0 %v1056
  %1160 = vmatpush.msra.mxu0 %v1052
  %1161 = vmatpush.msra.mxu0 %v1048
  %1162 = vmatpush.msra.mxu0 %v1044
  %1163 = vmatpush.msra.mxu0 %v1040
  %1164 = vmatpush.msra.mxu0 %v1036
  %1165 = vmatmul.f32.gmra.mxu0 %v1087
  %v1166 = vpop.f32.mrf.mxu0
  %v1167 = vadd.f32 %v1147, %v1166
  %1168 = vdwg.mxu0
  %1169 = vmatpush.msra.mxu0 %v1033
  %1170 = vmatpush.msra.mxu0 %v1029
  %1171 = vmatpush.msra.mxu0 %v1025
  %1172 = vmatpush.msra.mxu0 %v1021
  %1173 = vmatpush.msra.mxu0 %v1017
  %1174 = vmatpush.msra.mxu0 %v1013
  %1175 = vmatpush.msra.mxu0 %v1009
  %1176 = vmatpush.msra.mxu0 %v1005
  %1177 = vmatpush.msra.mxu0 %v1001
  %1178 = vmatpush.msra.mxu0 %v997
  %1179 = vmatpush.msra.mxu0 %v993
  %1180 = vmatpush.msra.mxu0 %v989
  %1181 = vmatpush.msra.mxu0 %v985
  %1182 = vmatpush.msra.mxu0 %v981
  %1183 = vmatpush.msra.mxu0 %v977
  %1184 = vmatpush.msra.mxu0 %v973
  %1185 = vmatmul.f32.gmra.mxu0 %v969
  %v1186 = vpop.f32.mrf.mxu0
  %v1187 = vadd.f32 %v1083, %v1186
  %1188 = vdwg.mxu0
  %1189 = vmatpush.msra.mxu0 0.0
  %1190 = vmatpush.msra.mxu0 0.0
  %1191 = vmatpush.msra.mxu0 0.0
  %1192 = vmatpush.msra.mxu0 0.0
  %1193 = vmatpush.msra.mxu0 0.0
  %1194 = vmatpush.msra.mxu0 %v1077
  %1195 = vmatpush.msra.mxu0 %v1073
  %1196 = vmatpush.msra.mxu0 %v1069
  %1197 = vmatpush.msra.mxu0 %v1065
  %1198 = vmatpush.msra.mxu0 %v1061
  %1199 = vmatpush.msra.mxu0 %v1057
  %1200 = vmatpush.msra.mxu0 %v1053
  %1201 = vmatpush.msra.mxu0 %v1049
  %1202 = vmatpush.msra.mxu0 %v1045
  %1203 = vmatpush.msra.mxu0 %v1041
  %1204 = vmatpush.msra.mxu0 %v1037
  %1205 = vmatmul.f32.gmra.mxu0 %v1087
  %v1206 = vpop.f32.mrf.mxu0
  %v1207 = vadd.f32 %v1187, %v1206
  %1208 = vdwg.mxu0
  %1209 = vmatpush.msra.mxu0 %v1034
  %1210 = vmatpush.msra.mxu0 %v1030
  %1211 = vmatpush.msra.mxu0 %v1026
  %1212 = vmatpush.msra.mxu0 %v1022
  %1213 = vmatpush.msra.mxu0 %v1018
  %1214 = vmatpush.msra.mxu0 %v1014
  %1215 = vmatpush.msra.mxu0 %v1010
  %1216 = vmatpush.msra.mxu0 %v1006
  %1217 = vmatpush.msra.mxu0 %v1002
  %1218 = vmatpush.msra.mxu0 %v998
  %1219 = vmatpush.msra.mxu0 %v994
  %1220 = vmatpush.msra.mxu0 %v990
  %1221 = vmatpush.msra.mxu0 %v986
  %1222 = vmatpush.msra.mxu0 %v982
  %1223 = vmatpush.msra.mxu0 %v978
  %1224 = vmatpush.msra.mxu0 %v974
  %1225 = vmatmul.f32.gmra.mxu0 %v969
  %v1226 = vpop.f32.mrf.mxu0
  %v1227 = vadd.f32 %v1083, %v1226
  %1228 = vdwg.mxu0
  %1229 = vmatpush.msra.mxu0 0.0
  %1230 = vmatpush.msra.mxu0 0.0
  %1231 = vmatpush.msra.mxu0 0.0
  %1232 = vmatpush.msra.mxu0 0.0
  %1233 = vmatpush.msra.mxu0 0.0
  %1234 = vmatpush.msra.mxu0 %v1078
  %1235 = vmatpush.msra.mxu0 %v1074
  %1236 = vmatpush.msra.mxu0 %v1070
  %1237 = vmatpush.msra.mxu0 %v1066
  %1238 = vmatpush.msra.mxu0 %v1062
  %1239 = vmatpush.msra.mxu0 %v1058
  %1240 = vmatpush.msra.mxu0 %v1054
  %1241 = vmatpush.msra.mxu0 %v1050
  %1242 = vmatpush.msra.mxu0 %v1046
  %1243 = vmatpush.msra.mxu0 %v1042
  %1244 = vmatpush.msra.mxu0 %v1038
  %1245 = vmatmul.f32.gmra.mxu0 %v1087
  %v1246 = vpop.f32.mrf.mxu0
  %v1247 = vadd.f32 %v1227, %v1246
  %1248 = vdwg.mxu0
  %v1249 = vmax.f32 %v1127, 0.0
  %v1250 = vmax.f32 %v1167, 0.0
  %v1251 = vmax.f32 %v1207, 0.0
  %v1252 = vmax.f32 %v1247, 0.0
  %v1253 = vld [vmem:[%s2] sm:$0xff]
  %v1254 = vld [vmem:[%s4] sm:$0xff]
  %v1255 = vld [vmem:[%s4 + $0x8] sm:$0xff]
  %v1256 = vld [vmem:[%s4 + $0x10] sm:$0xff]
  %v1257 = vld [vmem:[%s4 + $0x18] sm:$0xff]
  %vm1258 = vcmask 64512
  %v1260 = vsel %vm1258, %v1253, 0
  %1262 = vmatpush.msra.mxu0 0.0
  %1263 = vmatpush.msra.mxu0 0.0
  %1264 = vmatpush.msra.mxu0 0.0
  %1265 = vmatpush.msra.mxu0 0.0
  %1266 = vmatpush.msra.mxu0 0.0
  %1267 = vmatpush.msra.mxu0 0.0
  %1268 = vmatpush.msra.mxu0 0.0
  %1269 = vmatpush.msra.mxu0 0.0
  %1270 = vmatpush.msra.mxu0 0.0
  %1271 = vmatpush.msra.mxu0 0.0
  %1272 = vmatpush.msra.mxu0 0.0
  %1273 = vmatpush.msra.mxu0 0.0
  %1274 = vmatpush.msra.mxu0 0.0
  %1275 = vmatpush.msra.mxu0 0.0
  %1276 = vmatpush.msra.mxu0 0.0
  %1277 = vmatpush.msra.mxu0 %v1254
  %1278 = vmatmul.f32.gmra.mxu0 %v1260
  %v1279 = vpop.f32.mrf.mxu0
  %v1280 = vadd.f32 0.0, %v1279
  %1281 = vdwg.mxu0
  %1282 = vmatpush.msra.mxu0 0.0
  %1283 = vmatpush.msra.mxu0 0.0
  %1284 = vmatpush.msra.mxu0 0.0
  %1285 = vmatpush.msra.mxu0 0.0
  %1286 = vmatpush.msra.mxu0 0.0
  %1287 = vmatpush.msra.mxu0 0.0
  %1288 = vmatpush.msra.mxu0 0.0
  %1289 = vmatpush.msra.mxu0 0.0
  %1290 = vmatpush.msra.mxu0 0.0
  %1291 = vmatpush.msra.mxu0 0.0
  %1292 = vmatpush.msra.mxu0 0.0
  %1293 = vmatpush.msra.mxu0 0.0
  %1294 = vmatpush.msra.mxu0 0.0
  %1295 = vmatpush.msra.mxu0 0.0
  %1296 = vmatpush.msra.mxu0 0.0
  %1297 = vmatpush.msra.mxu0 %v1255
  %1298 = vmatmul.f32.gmra.mxu0 %v1260
  %v1299 = vpop.f32.mrf.mxu0
  %v1300 = vadd.f32 0.0, %v1299
  %1301 = vdwg.mxu0
  %1302 = vmatpush.msra.mxu0 0.0
  %1303 = vmatpush.msra.mxu0 0.0
  %1304 = vmatpush.msra.mxu0 0.0
  %1305 = vmatpush.msra.mxu0 0.0
  %1306 = vmatpush.msra.mxu0 0.0
  %1307 = vmatpush.msra.mxu0 0.0
  %1308 = vmatpush.msra.mxu0 0.0
  %1309 = vmatpush.msra.mxu0 0.0
  %1310 = vmatpush.msra.mxu0 0.0
  %1311 = vmatpush.msra.mxu0 0.0
  %1312 = vmatpush.msra.mxu0 0.0
  %1313 = vmatpush.msra.mxu0 0.0
  %1314 = vmatpush.msra.mxu0 0.0
  %1315 = vmatpush.msra.mxu0 0.0
  %1316 = vmatpush.msra.mxu0 0.0
  %1317 = vmatpush.msra.mxu0 %v1256
  %1318 = vmatmul.f32.gmra.mxu0 %v1260
  %v1319 = vpop.f32.mrf.mxu0
  %v1320 = vadd.f32 0.0, %v1319
  %1321 = vdwg.mxu0
  %1322 = vmatpush.msra.mxu0 0.0
  %1323 = vmatpush.msra.mxu0 0.0
  %1324 = vmatpush.msra.mxu0 0.0
  %1325 = vmatpush.msra.mxu0 0.0
  %1326 = vmatpush.msra.mxu0 0.0
  %1327 = vmatpush.msra.mxu0 0.0
  %1328 = vmatpush.msra.mxu0 0.0
  %1329 = vmatpush.msra.mxu0 0.0
  %1330 = vmatpush.msra.mxu0 0.0
  %1331 = vmatpush.msra.mxu0 0.0
  %1332 = vmatpush.msra.mxu0 0.0
  %1333 = vmatpush.msra.mxu0 0.0
  %1334 = vmatpush.msra.mxu0 0.0
  %1335 = vmatpush.msra.mxu0 0.0
  %1336 = vmatpush.msra.mxu0 0.0
  %1337 = vmatpush.msra.mxu0 %v1257
  %1338 = vmatmul.f32.gmra.mxu0 %v1260
  %v1339 = vpop.f32.mrf.mxu0
  %v1340 = vadd.f32 0.0, %v1339
  %1341 = vdwg.mxu0
  %v1342 = vadd.f32 %v1249, %v1280
  %v1343 = vadd.f32 %v1250, %v1300
  %v1344 = vadd.f32 %v1251, %v1320
  %v1345 = vadd.f32 %v1252, %v1340
  %v1346 = vld [vmem:[%s3] sm:$0xff]
  %1348 = vset.pattern.permute.xlu0 0
  %1349 = vperm.xlu0 %1348, %v1346
  %v1350 = vpop.permute.xlu0 %1349
  %v1352 = vadd.f32 %v1342, %v1350
  %v1353 = vadd.f32 %v1343, %v1350
  %v1354 = vadd.f32 %v1344, %v1350
  %v1355 = vadd.f32 %v1345, %v1350
  %v1356 = vld [vmem:[%s5] sm:$0xf]
  %v1358 = vperm.slane %v1356, 0
  %v1359 = vperm.slane %v1356, 1
  %v1360 = vperm.slane %v1356, 2
  %v1361 = vperm.slane %v1356, 3
  %v1366 = vmul.f32 %v1352, %v1358
  %v1367 = vmul.f32 %v1353, %v1359
  %v1368 = vmul.f32 %v1354, %v1360
  %v1369 = vmul.f32 %v1355, %v1361
  %1370 = vst [vmem:[%s8] sm:$0xff] %v1366
  %1371 = vst [vmem:[%s8 + $0x8] sm:$0xff] %v1367
  %1372 = vst [vmem:[%s8 + $0x10] sm:$0xff] %v1368
  %1373 = vst [vmem:[%s8 + $0x18] sm:$0xff] %v1369
  // Predicated region
  $region34: #{resnet_down_forward.5} parent=0 // pred_check
    _
  $region35: #{resnet_down_forward.5} parent=0 // pred_check_branch
    %1375 = sbr.rel (0) target = $region37
  $region36: #{resnet_down_forward.5} parent=0 // pred_region
    _
  $region37: #{resnet_down_forward.5} parent=0 // pred_fallthru
    _
  // Predicated region
  $region38: #{resnet_down_forward.5} parent=0 // pred_check
    _
  $region39: #{resnet_down_forward.5} parent=0 // pred_check_branch
    %1377 = sbr.rel (0) target = $region41
  $region40: #{resnet_down_forward.5} parent=0 // pred_region
    _
  $region41: #{resnet_down_forward.5} parent=0 // pred_fallthru
    _

// kernel: resnet_down_forward.4
$region0: #{resnet_down_forward.4}
  #allocation0 [shape = 'u32[]', space=smem, size = 0x4, offset = 0x4, fixed_abs, tag = 'smem constant byte address 0x4 - core index']
  #allocation1 [shape = 'u32[72,128]{1,0:T(1,128)}', space=vmem, size = 0x9000, scoped, tag = 'internal scratch']
  #allocation2 [shape = 'f32[216,512]{1,0:T(8,128)}', space=vmem, size = 0x6c000, scoped, tag = 'scratch operand']
  %s0 = inlined_call_operand.vmem [shape: f32[8,216], index: 0, kind: input, shape index: {}]
  %s1 = inlined_call_operand.vmem [shape: f32[8,1], index: 1, kind: input, shape index: {}]
  %s2 = inlined_call_operand.vmem [shape: f32[1,512], index: 2, kind: input, shape index: {}]
  %s3 = inlined_call_operand.vmem [shape: f32[8,1024], index: 3, kind: input, shape index: {}, may-alias: {3,4}]
  %s4 = inlined_call_operand.vmem [shape: f32[8,1024], index: 4, kind: input, shape index: {}, may-alias: {3,4}]
  %s5 = inlined_call_operand.vmem [shape: f32[8,512], index: 5, kind: output, shape index: {}]
  %s6 = sld [smem:[#allocation0]]
  $region30: #{resnet_down_forward.4} parent=0
    _
  %s8 = ssub.s32 1, %s6
  %s9 = scalar_select 0, %s8, %s6
  // Predicated region
  $region2: #{resnet_down_forward.4} parent=0 // pred_check
    _
  $region3: #{resnet_down_forward.4} parent=0 // pred_check_branch
    %11 = sbr.rel (0) target = $region5
  $region4: #{resnet_down_forward.4} parent=0 // pred_region
    _
  $region5: #{resnet_down_forward.4} parent=0 // pred_fallthru
    _
  // Predicated region
  $region6: #{resnet_down_forward.4} parent=0 // pred_check
    _
  $region7: #{resnet_down_forward.4} parent=0 // pred_check_branch
    %13 = sbr.rel (0) target = $region9
  $region8: #{resnet_down_forward.4} parent=0 // pred_region
    _
  $region9: #{resnet_down_forward.4} parent=0 // pred_fallthru
    _
  // Predicated region
  $region10: #{resnet_down_forward.4} parent=0 // pred_check
    _
  $region11: #{resnet_down_forward.4} parent=0 // pred_check_branch
    %15 = sbr.rel (0) target = $region13
  $region12: #{resnet_down_forward.4} parent=0 // pred_region
    _
  $region13: #{resnet_down_forward.4} parent=0 // pred_fallthru
    _
  // Predicated region
  $region14: #{resnet_down_forward.4} parent=0 // pred_check
    _
  $region15: #{resnet_down_forward.4} parent=0 // pred_check_branch
    %17 = sbr.rel (0) target = $region17
  $region16: #{resnet_down_forward.4} parent=0 // pred_region
    _
  $region17: #{resnet_down_forward.4} parent=0 // pred_fallthru
    _
  // Predicated region
  $region18: #{resnet_down_forward.4} parent=0 // pred_check
    _
  $region19: #{resnet_down_forward.4} parent=0 // pred_check_branch
    %19 = sbr.rel (0) target = $region21
  $region20: #{resnet_down_forward.4} parent=0 // pred_region
    %s20 = sadd.s32 0, 1
    %s21 = smul.u32 4, %s20
    %p22 = scmp.lt.s32.totalorder %s21, 7
    %s23 = scalar_select %p22, %s21, 7
    %s24 = smul.addr %s23, 8
    %s25 = scalar_lea.vmem %s4, %s24
    %s26 = sadd.s32 0, 1
    %s27 = smul.u32 4, %s26
  $region21: #{resnet_down_forward.4} parent=0 // pred_fallthru
    _
  %s28 = sadd.s32 0, 1
  %s29 = smul.u32 4, %s28
  %p30 = scmp.lt.s32.totalorder %s29, 7
  %s31 = scalar_select %p30, %s29, 7
  %s32 = smul.addr %s31, 8
  %s33 = scalar_lea.vmem %s4, %s32
  %s34 = sadd.s32 0, 1
  %s35 = smul.u32 4, %s34
  %p36 = scmp.lt.s32.totalorder %s35, 7
  %s37 = scalar_select %p36, %s35, 7
  %s38 = smul.addr %s37, 8
  %s39 = scalar_lea.vmem %s4, %s38
  %s40 = sadd.s32 0, 1
  %s41 = smul.u32 4, %s40
  %v42 = vld [vmem:[%s3] sm:$0xff]
  %v43 = vld [vmem:[%s3 + $0x8] sm:$0xff]
  %v44 = vld [vmem:[%s3 + $0x10] sm:$0xff]
  %v45 = vld [vmem:[%s3 + $0x18] sm:$0xff]
  %46 = vst [vmem:[#allocation2] sm:$0xff] %v42
  %47 = vst [vmem:[#allocation2 + $0x8] sm:$0xff] %v43
  %48 = vst [vmem:[#allocation2 + $0x10] sm:$0xff] %v44
  %49 = vst [vmem:[#allocation2 + $0x18] sm:$0xff] %v45
  %v50 = vld [vmem:[%s3] sm:$0xff]
  %v51 = vld [vmem:[%s3 + $0x8] sm:$0xff]
  %v52 = vld [vmem:[%s3 + $0x10] sm:$0xff]
  %v53 = vld [vmem:[%s3 + $0x18] sm:$0xff]
  %58 = vrot.lane.b32.xlu0 %v50, 127
  %v59 = vpop.permute.xlu0 %58
  %60 = vrot.lane.b32.xlu0 %v51, 127
  %v61 = vpop.permute.xlu0 %60
  %62 = vrot.lane.b32.xlu0 %v52, 127
  %v63 = vpop.permute.xlu0 %62
  %64 = vrot.lane.b32.xlu0 %v53, 127
  %v65 = vpop.permute.xlu0 %64
  %vm66 = vcmask 1039360
  %v67 = vsel %vm66, %v59, %v61
  %v68 = vsel %vm66, %v61, %v63
  %v69 = vsel %vm66, %v63, %v65
  %74 = vst [vmem:[#allocation2 + $0x20] sm:$0xff] %v67
  %75 = vst [vmem:[#allocation2 + $0x28] sm:$0xff] %v68
  %76 = vst [vmem:[#allocation2 + $0x30] sm:$0xff] %v69
  %77 = vst.msk [vmem:[#allocation2 + $0x38] sm:$0xff] %vm66, %v65
  %v78 = vld [vmem:[%s39] sm:$0xff]
  %80 = vrot.lane.b32.xlu0 %v78, 127
  %v81 = vpop.permute.xlu0 %80
  %vm83 = vcmask 1048568
  %84 = vst.msk [vmem:[#allocation2 + $0x38] sm:$0xff] %vm83, %v81
  %v85 = vld [vmem:[%s3] sm:$0xff]
  %v86 = vld [vmem:[%s3 + $0x8] sm:$0xff]
  %v87 = vld [vmem:[%s3 + $0x10] sm:$0xff]
  %v88 = vld [vmem:[%s3 + $0x18] sm:$0xff]
  %93 = vrot.lane.b32.xlu0 %v85, 126
  %v94 = vpop.permute.xlu0 %93
  %95 = vrot.lane.b32.xlu0 %v86, 126
  %v96 = vpop.permute.xlu0 %95
  %97 = vrot.lane.b32.xlu0 %v87, 126
  %v98 = vpop.permute.xlu0 %97
  %99 = vrot.lane.b32.xlu0 %v88, 126
  %v100 = vpop.permute.xlu0 %99
  %vm101 = vcmask 1031168
  %v102 = vsel %vm101, %v94, %v96
  %v103 = vsel %vm101, %v96, %v98
  %v104 = vsel %vm101, %v98, %v100
  %109 = vst [vmem:[#allocation2 + $0x40] sm:$0xff] %v102
  %110 = vst [vmem:[#allocation2 + $0x48] sm:$0xff] %v103
  %111 = vst [vmem:[#allocation2 + $0x50] sm:$0xff] %v104
  %112 = vst.msk [vmem:[#allocation2 + $0x58] sm:$0xff] %vm101, %v100
  %v113 = vld [vmem:[%s39] sm:$0xff]
  %115 = vrot.lane.b32.xlu0 %v113, 126
  %v116 = vpop.permute.xlu0 %115
  %vm118 = vcmask 1048560
  %119 = vst.msk [vmem:[#allocation2 + $0x58] sm:$0xff] %vm118, %v116
  %v120 = vld [vmem:[%s3] sm:$0xff]
  %v121 = vld [vmem:[%s3 + $0x8] sm:$0xff]
  %v122 = vld [vmem:[%s3 + $0x10] sm:$0xff]
  %v123 = vld [vmem:[%s3 + $0x18] sm:$0xff]
  %128 = vrot.lane.b32.xlu0 %v120, 122
  %v129 = vpop.permute.xlu0 %128
  %130 = vrot.lane.b32.xlu0 %v121, 122
  %v131 = vpop.permute.xlu0 %130
  %132 = vrot.lane.b32.xlu0 %v122, 122
  %v133 = vpop.permute.xlu0 %132
  %134 = vrot.lane.b32.xlu0 %v123, 122
  %v135 = vpop.permute.xlu0 %134
  %vm136 = vcmask 998400
  %v137 = vsel %vm136, %v129, %v131
  %v138 = vsel %vm136, %v131, %v133
  %v139 = vsel %vm136, %v133, %v135
  %144 = vst [vmem:[#allocation2 + $0x60] sm:$0xff] %v137
  %145 = vst [vmem:[#allocation2 + $0x68] sm:$0xff] %v138
  %146 = vst [vmem:[#allocation2 + $0x70] sm:$0xff] %v139
  %147 = vst.msk [vmem:[#allocation2 + $0x78] sm:$0xff] %vm136, %v135
  %v148 = vld [vmem:[%s39] sm:$0xff]
  %150 = vrot.lane.b32.xlu0 %v148, 122
  %v151 = vpop.permute.xlu0 %150
  %vm153 = vcmask 1048528
  %154 = vst.msk [vmem:[#allocation2 + $0x78] sm:$0xff] %vm153, %v151
  %v155 = vld [vmem:[%s3] sm:$0xff]
  %v156 = vld [vmem:[%s3 + $0x8] sm:$0xff]
  %v157 = vld [vmem:[%s3 + $0x10] sm:$0xff]
  %v158 = vld [vmem:[%s3 + $0x18] sm:$0xff]
  %163 = vrot.lane.b32.xlu0 %v155, 121
  %v164 = vpop.permute.xlu0 %163
  %165 = vrot.lane.b32.xlu0 %v156, 121
  %v166 = vpop.permute.xlu0 %165
  %167 = vrot.lane.b32.xlu0 %v157, 121
  %v168 = vpop.permute.xlu0 %167
  %169 = vrot.lane.b32.xlu0 %v158, 121
  %v170 = vpop.permute.xlu0 %169
  %vm171 = vcmask 990208
  %v172 = vsel %vm171, %v164, %v166
  %v173 = vsel %vm171, %v166, %v168
  %v174 = vsel %vm171, %v168, %v170
  %179 = vst [vmem:[#allocation2 + $0x80] sm:$0xff] %v172
  %180 = vst [vmem:[#allocation2 + $0x88] sm:$0xff] %v173
  %181 = vst [vmem:[#allocation2 + $0x90] sm:$0xff] %v174
  %182 = vst.msk [vmem:[#allocation2 + $0x98] sm:$0xff] %vm171, %v170
  %v183 = vld [vmem:[%s39] sm:$0xff]
  %185 = vrot.lane.b32.xlu0 %v183, 121
  %v186 = vpop.permute.xlu0 %185
  %vm188 = vcmask 1048520
  %189 = vst.msk [vmem:[#allocation2 + $0x98] sm:$0xff] %vm188, %v186
  %v190 = vld [vmem:[%s3] sm:$0xff]
  %v191 = vld [vmem:[%s3 + $0x8] sm:$0xff]
  %v192 = vld [vmem:[%s3 + $0x10] sm:$0xff]
  %v193 = vld [vmem:[%s3 + $0x18] sm:$0xff]
  %198 = vrot.lane.b32.xlu0 %v190, 120
  %v199 = vpop.permute.xlu0 %198
  %200 = vrot.lane.b32.xlu0 %v191, 120
  %v201 = vpop.permute.xlu0 %200
  %202 = vrot.lane.b32.xlu0 %v192, 120
  %v203 = vpop.permute.xlu0 %202
  %204 = vrot.lane.b32.xlu0 %v193, 120
  %v205 = vpop.permute.xlu0 %204
  %vm206 = vcmask 982016
  %v207 = vsel %vm206, %v199, %v201
  %v208 = vsel %vm206, %v201, %v203
  %v209 = vsel %vm206, %v203, %v205
  %214 = vst [vmem:[#allocation2 + $0xa0] sm:$0xff] %v207
  %215 = vst [vmem:[#allocation2 + $0xa8] sm:$0xff] %v208
  %216 = vst [vmem:[#allocation2 + $0xb0] sm:$0xff] %v209
  %217 = vst.msk [vmem:[#allocation2 + $0xb8] sm:$0xff] %vm206, %v205
  %v218 = vld [vmem:[%s39] sm:$0xff]
  %220 = vrot.lane.b32.xlu0 %v218, 120
  %v221 = vpop.permute.xlu0 %220
  %vm223 = vcmask 1048512
  %224 = vst.msk [vmem:[#allocation2 + $0xb8] sm:$0xff] %vm223, %v221
  %v225 = vld [vmem:[%s3] sm:$0xff]
  %v226 = vld [vmem:[%s3 + $0x8] sm:$0xff]
  %v227 = vld [vmem:[%s3 + $0x10] sm:$0xff]
  %v228 = vld [vmem:[%s3 + $0x18] sm:$0xff]
  %233 = vrot.lane.b32.xlu0 %v225, 116
  %v234 = vpop.permute.xlu0 %233
  %235 = vrot.lane.b32.xlu0 %v226, 116
  %v236 = vpop.permute.xlu0 %235
  %237 = vrot.lane.b32.xlu0 %v227, 116
  %v238 = vpop.permute.xlu0 %237
  %239 = vrot.lane.b32.xlu0 %v228, 116
  %v240 = vpop.permute.xlu0 %239
  %vm241 = vcmask 949248
  %v242 = vsel %vm241, %v234, %v236
  %v243 = vsel %vm241, %v236, %v238
  %v244 = vsel %vm241, %v238, %v240
  %249 = vst [vmem:[#allocation2 + $0xc0] sm:$0xff] %v242
  %250 = vst [vmem:[#allocation2 + $0xc8] sm:$0xff] %v243
  %251 = vst [vmem:[#allocation2 + $0xd0] sm:$0xff] %v244
  %252 = vst.msk [vmem:[#allocation2 + $0xd8] sm:$0xff] %vm241, %v240
  %v253 = vld [vmem:[%s39] sm:$0xff]
  %255 = vrot.lane.b32.xlu0 %v253, 116
  %v256 = vpop.permute.xlu0 %255
  %vm258 = vcmask 1048480
  %259 = vst.msk [vmem:[#allocation2 + $0xd8] sm:$0xff] %vm258, %v256
  %v260 = vld [vmem:[%s3] sm:$0xff]
  %v261 = vld [vmem:[%s3 + $0x8] sm:$0xff]
  %v262 = vld [vmem:[%s3 + $0x10] sm:$0xff]
  %v263 = vld [vmem:[%s3 + $0x18] sm:$0xff]
  %268 = vrot.lane.b32.xlu0 %v260, 115
  %v269 = vpop.permute.xlu0 %268
  %270 = vrot.lane.b32.xlu0 %v261, 115
  %v271 = vpop.permute.xlu0 %270
  %272 = vrot.lane.b32.xlu0 %v262, 115
  %v273 = vpop.permute.xlu0 %272
  %274 = vrot.lane.b32.xlu0 %v263, 115
  %v275 = vpop.permute.xlu0 %274
  %vm276 = vcmask 941056
  %v277 = vsel %vm276, %v269, %v271
  %v278 = vsel %vm276, %v271, %v273
  %v279 = vsel %vm276, %v273, %v275
  %284 = vst [vmem:[#allocation2 + $0xe0] sm:$0xff] %v277
  %285 = vst [vmem:[#allocation2 + $0xe8] sm:$0xff] %v278
  %286 = vst [vmem:[#allocation2 + $0xf0] sm:$0xff] %v279
  %287 = vst.msk [vmem:[#allocation2 + $0xf8] sm:$0xff] %vm276, %v275
  %v288 = vld [vmem:[%s39] sm:$0xff]
  %290 = vrot.lane.b32.xlu0 %v288, 115
  %v291 = vpop.permute.xlu0 %290
  %vm293 = vcmask 1048472
  %294 = vst.msk [vmem:[#allocation2 + $0xf8] sm:$0xff] %vm293, %v291
  %v295 = vld [vmem:[%s3] sm:$0xff]
  %v296 = vld [vmem:[%s3 + $0x8] sm:$0xff]
  %v297 = vld [vmem:[%s3 + $0x10] sm:$0xff]
  %v298 = vld [vmem:[%s3 + $0x18] sm:$0xff]
  %303 = vrot.lane.b32.xlu0 %v295, 114
  %v304 = vpop.permute.xlu0 %303
  %305 = vrot.lane.b32.xlu0 %v296, 114
  %v306 = vpop.permute.xlu0 %305
  %307 = vrot.lane.b32.xlu0 %v297, 114
  %v308 = vpop.permute.xlu0 %307
  %309 = vrot.lane.b32.xlu0 %v298, 114
  %v310 = vpop.permute.xlu0 %309
  %vm311 = vcmask 932864
  %v312 = vsel %vm311, %v304, %v306
  %v313 = vsel %vm311, %v306, %v308
  %v314 = vsel %vm311, %v308, %v310
  %319 = vst [vmem:[#allocation2 + $0x100] sm:$0xff] %v312
  %320 = vst [vmem:[#allocation2 + $0x108] sm:$0xff] %v313
  %321 = vst [vmem:[#allocation2 + $0x110] sm:$0xff] %v314
  %322 = vst.msk [vmem:[#allocation2 + $0x118] sm:$0xff] %vm311, %v310
  %v323 = vld [vmem:[%s39] sm:$0xff]
  %325 = vrot.lane.b32.xlu0 %v323, 114
  %v326 = vpop.permute.xlu0 %325
  %vm328 = vcmask 1048464
  %329 = vst.msk [vmem:[#allocation2 + $0x118] sm:$0xff] %vm328, %v326
  %v330 = vld [vmem:[%s3] sm:$0xff]
  %v331 = vld [vmem:[%s3 + $0x8] sm:$0xff]
  %v332 = vld [vmem:[%s3 + $0x10] sm:$0xff]
  %v333 = vld [vmem:[%s3 + $0x18] sm:$0xff]
  %338 = vrot.lane.b32.xlu0 %v330, 92
  %v339 = vpop.permute.xlu0 %338
  %340 = vrot.lane.b32.xlu0 %v331, 92
  %v341 = vpop.permute.xlu0 %340
  %342 = vrot.lane.b32.xlu0 %v332, 92
  %v343 = vpop.permute.xlu0 %342
  %344 = vrot.lane.b32.xlu0 %v333, 92
  %v345 = vpop.permute.xlu0 %344
  %vm346 = vcmask 752640
  %v347 = vsel %vm346, %v339, %v341
  %v348 = vsel %vm346, %v341, %v343
  %v349 = vsel %vm346, %v343, %v345
  %354 = vst [vmem:[#allocation2 + $0x120] sm:$0xff] %v347
  %355 = vst [vmem:[#allocation2 + $0x128] sm:$0xff] %v348
  %356 = vst [vmem:[#allocation2 + $0x130] sm:$0xff] %v349
  %357 = vst.msk [vmem:[#allocation2 + $0x138] sm:$0xff] %vm346, %v345
  %v358 = vld [vmem:[%s39] sm:$0xff]
  %360 = vrot.lane.b32.xlu0 %v358, 92
  %v361 = vpop.permute.xlu0 %360
  %vm363 = vcmask 1048288
  %364 = vst.msk [vmem:[#allocation2 + $0x138] sm:$0xff] %vm363, %v361
  %v365 = vld [vmem:[%s3] sm:$0xff]
  %v366 = vld [vmem:[%s3 + $0x8] sm:$0xff]
  %v367 = vld [vmem:[%s3 + $0x10] sm:$0xff]
  %v368 = vld [vmem:[%s3 + $0x18] sm:$0xff]
  %373 = vrot.lane.b32.xlu0 %v365, 91
  %v374 = vpop.permute.xlu0 %373
  %375 = vrot.lane.b32.xlu0 %v366, 91
  %v376 = vpop.permute.xlu0 %375
  %377 = vrot.lane.b32.xlu0 %v367, 91
  %v378 = vpop.permute.xlu0 %377
  %379 = vrot.lane.b32.xlu0 %v368, 91
  %v380 = vpop.permute.xlu0 %379
  %vm381 = vcmask 744448
  %v382 = vsel %vm381, %v374, %v376
  %v383 = vsel %vm381, %v376, %v378
  %v384 = vsel %vm381, %v378, %v380
  %389 = vst [vmem:[#allocation2 + $0x140] sm:$0xff] %v382
  %390 = vst [vmem:[#allocation2 + $0x148] sm:$0xff] %v383
  %391 = vst [vmem:[#allocation2 + $0x150] sm:$0xff] %v384
  %392 = vst.msk [vmem:[#allocation2 + $0x158] sm:$0xff] %vm381, %v380
  %v393 = vld [vmem:[%s39] sm:$0xff]
  %395 = vrot.lane.b32.xlu0 %v393, 91
  %v396 = vpop.permute.xlu0 %395
  %vm398 = vcmask 1048280
  %399 = vst.msk [vmem:[#allocation2 + $0x158] sm:$0xff] %vm398, %v396
  %v400 = vld [vmem:[%s3] sm:$0xff]
  %v401 = vld [vmem:[%s3 + $0x8] sm:$0xff]
  %v402 = vld [vmem:[%s3 + $0x10] sm:$0xff]
  %v403 = vld [vmem:[%s3 + $0x18] sm:$0xff]
  %408 = vrot.lane.b32.xlu0 %v400, 90
  %v409 = vpop.permute.xlu0 %408
  %410 = vrot.lane.b32.xlu0 %v401, 90
  %v411 = vpop.permute.xlu0 %410
  %412 = vrot.lane.b32.xlu0 %v402, 90
  %v413 = vpop.permute.xlu0 %412
  %414 = vrot.lane.b32.xlu0 %v403, 90
  %v415 = vpop.permute.xlu0 %414
  %vm416 = vcmask 736256
  %v417 = vsel %vm416, %v409, %v411
  %v418 = vsel %vm416, %v411, %v413
  %v419 = vsel %vm416, %v413, %v415
  %424 = vst [vmem:[#allocation2 + $0x160] sm:$0xff] %v417
  %425 = vst [vmem:[#allocation2 + $0x168] sm:$0xff] %v418
  %426 = vst [vmem:[#allocation2 + $0x170] sm:$0xff] %v419
  %427 = vst.msk [vmem:[#allocation2 + $0x178] sm:$0xff] %vm416, %v415
  %v428 = vld [vmem:[%s39] sm:$0xff]
  %430 = vrot.lane.b32.xlu0 %v428, 90
  %v431 = vpop.permute.xlu0 %430
  %vm433 = vcmask 1048272
  %434 = vst.msk [vmem:[#allocation2 + $0x178] sm:$0xff] %vm433, %v431
  %v435 = vld [vmem:[%s3] sm:$0xff]
  %v436 = vld [vmem:[%s3 + $0x8] sm:$0xff]
  %v437 = vld [vmem:[%s3 + $0x10] sm:$0xff]
  %v438 = vld [vmem:[%s3 + $0x18] sm:$0xff]
  %443 = vrot.lane.b32.xlu0 %v435, 86
  %v444 = vpop.permute.xlu0 %443
  %445 = vrot.lane.b32.xlu0 %v436, 86
  %v446 = vpop.permute.xlu0 %445
  %447 = vrot.lane.b32.xlu0 %v437, 86
  %v448 = vpop.permute.xlu0 %447
  %449 = vrot.lane.b32.xlu0 %v438, 86
  %v450 = vpop.permute.xlu0 %449
  %vm451 = vcmask 703488
  %v452 = vsel %vm451, %v444, %v446
  %v453 = vsel %vm451, %v446, %v448
  %v454 = vsel %vm451, %v448, %v450
  %459 = vst [vmem:[#allocation2 + $0x180] sm:$0xff] %v452
  %460 = vst [vmem:[#allocation2 + $0x188] sm:$0xff] %v453
  %461 = vst [vmem:[#allocation2 + $0x190] sm:$0xff] %v454
  %462 = vst.msk [vmem:[#allocation2 + $0x198] sm:$0xff] %vm451, %v450
  %v463 = vld [vmem:[%s39] sm:$0xff]
  %465 = vrot.lane.b32.xlu0 %v463, 86
  %v466 = vpop.permute.xlu0 %465
  %vm468 = vcmask 1048240
  %469 = vst.msk [vmem:[#allocation2 + $0x198] sm:$0xff] %vm468, %v466
  %v470 = vld [vmem:[%s3] sm:$0xff]
  %v471 = vld [vmem:[%s3 + $0x8] sm:$0xff]
  %v472 = vld [vmem:[%s3 + $0x10] sm:$0xff]
  %v473 = vld [vmem:[%s3 + $0x18] sm:$0xff]
  %478 = vrot.lane.b32.xlu0 %v470, 85
  %v479 = vpop.permute.xlu0 %478
  %480 = vrot.lane.b32.xlu0 %v471, 85
  %v481 = vpop.permute.xlu0 %480
  %482 = vrot.lane.b32.xlu0 %v472, 85
  %v483 = vpop.permute.xlu0 %482
  %484 = vrot.lane.b32.xlu0 %v473, 85
  %v485 = vpop.permute.xlu0 %484
  %vm486 = vcmask 695296
  %v487 = vsel %vm486, %v479, %v481
  %v488 = vsel %vm486, %v481, %v483
  %v489 = vsel %vm486, %v483, %v485
  %494 = vst [vmem:[#allocation2 + $0x1a0] sm:$0xff] %v487
  %495 = vst [vmem:[#allocation2 + $0x1a8] sm:$0xff] %v488
  %496 = vst [vmem:[#allocation2 + $0x1b0] sm:$0xff] %v489
  %497 = vst.msk [vmem:[#allocation2 + $0x1b8] sm:$0xff] %vm486, %v485
  %v498 = vld [vmem:[%s39] sm:$0xff]
  %500 = vrot.lane.b32.xlu0 %v498, 85
  %v501 = vpop.permute.xlu0 %500
  %vm503 = vcmask 1048232
  %504 = vst.msk [vmem:[#allocation2 + $0x1b8] sm:$0xff] %vm503, %v501
  %v505 = vld [vmem:[%s3] sm:$0xff]
  %v506 = vld [vmem:[%s3 + $0x8] sm:$0xff]
  %v507 = vld [vmem:[%s3 + $0x10] sm:$0xff]
  %v508 = vld [vmem:[%s3 + $0x18] sm:$0xff]
  %513 = vrot.lane.b32.xlu0 %v505, 84
  %v514 = vpop.permute.xlu0 %513
  %515 = vrot.lane.b32.xlu0 %v506, 84
  %v516 = vpop.permute.xlu0 %515
  %517 = vrot.lane.b32.xlu0 %v507, 84
  %v518 = vpop.permute.xlu0 %517
  %519 = vrot.lane.b32.xlu0 %v508, 84
  %v520 = vpop.permute.xlu0 %519
  %vm521 = vcmask 687104
  %v522 = vsel %vm521, %v514, %v516
  %v523 = vsel %vm521, %v516, %v518
  %v524 = vsel %vm521, %v518, %v520
  %529 = vst [vmem:[#allocation2 + $0x1c0] sm:$0xff] %v522
  %530 = vst [vmem:[#allocation2 + $0x1c8] sm:$0xff] %v523
  %531 = vst [vmem:[#allocation2 + $0x1d0] sm:$0xff] %v524
  %532 = vst.msk [vmem:[#allocation2 + $0x1d8] sm:$0xff] %vm521, %v520
  %v533 = vld [vmem:[%s39] sm:$0xff]
  %535 = vrot.lane.b32.xlu0 %v533, 84
  %v536 = vpop.permute.xlu0 %535
  %vm538 = vcmask 1048224
  %539 = vst.msk [vmem:[#allocation2 + $0x1d8] sm:$0xff] %vm538, %v536
  %v540 = vld [vmem:[%s3] sm:$0xff]
  %v541 = vld [vmem:[%s3 + $0x8] sm:$0xff]
  %v542 = vld [vmem:[%s3 + $0x10] sm:$0xff]
  %v543 = vld [vmem:[%s3 + $0x18] sm:$0xff]
  %548 = vrot.lane.b32.xlu0 %v540, 80
  %v549 = vpop.permute.xlu0 %548
  %550 = vrot.lane.b32.xlu0 %v541, 80
  %v551 = vpop.permute.xlu0 %550
  %552 = vrot.lane.b32.xlu0 %v542, 80
  %v553 = vpop.permute.xlu0 %552
  %554 = vrot.lane.b32.xlu0 %v543, 80
  %v555 = vpop.permute.xlu0 %554
  %vm556 = vcmask 654336
  %v557 = vsel %vm556, %v549, %v551
  %v558 = vsel %vm556, %v551, %v553
  %v559 = vsel %vm556, %v553, %v555
  %564 = vst [vmem:[#allocation2 + $0x1e0] sm:$0xff] %v557
  %565 = vst [vmem:[#allocation2 + $0x1e8] sm:$0xff] %v558
  %566 = vst [vmem:[#allocation2 + $0x1f0] sm:$0xff] %v559
  %567 = vst.msk [vmem:[#allocation2 + $0x1f8] sm:$0xff] %vm556, %v555
  %v568 = vld [vmem:[%s39] sm:$0xff]
  %570 = vrot.lane.b32.xlu0 %v568, 80
  %v571 = vpop.permute.xlu0 %570
  %vm573 = vcmask 1048192
  %574 = vst.msk [vmem:[#allocation2 + $0x1f8] sm:$0xff] %vm573, %v571
  %v575 = vld [vmem:[%s3] sm:$0xff]
  %v576 = vld [vmem:[%s3 + $0x8] sm:$0xff]
  %v577 = vld [vmem:[%s3 + $0x10] sm:$0xff]
  %v578 = vld [vmem:[%s3 + $0x18] sm:$0xff]
  %583 = vrot.lane.b32.xlu0 %v575, 79
  %v584 = vpop.permute.xlu0 %583
  %585 = vrot.lane.b32.xlu0 %v576, 79
  %v586 = vpop.permute.xlu0 %585
  %587 = vrot.lane.b32.xlu0 %v577, 79
  %v588 = vpop.permute.xlu0 %587
  %589 = vrot.lane.b32.xlu0 %v578, 79
  %v590 = vpop.permute.xlu0 %589
  %vm591 = vcmask 646144
  %v592 = vsel %vm591, %v584, %v586
  %v593 = vsel %vm591, %v586, %v588
  %v594 = vsel %vm591, %v588, %v590
  %599 = vst [vmem:[#allocation2 + $0x200] sm:$0xff] %v592
  %600 = vst [vmem:[#allocation2 + $0x208] sm:$0xff] %v593
  %601 = vst [vmem:[#allocation2 + $0x210] sm:$0xff] %v594
  %602 = vst.msk [vmem:[#allocation2 + $0x218] sm:$0xff] %vm591, %v590
  %v603 = vld [vmem:[%s39] sm:$0xff]
  %605 = vrot.lane.b32.xlu0 %v603, 79
  %v606 = vpop.permute.xlu0 %605
  %vm608 = vcmask 1048184
  %609 = vst.msk [vmem:[#allocation2 + $0x218] sm:$0xff] %vm608, %v606
  %v610 = vld [vmem:[%s3] sm:$0xff]
  %v611 = vld [vmem:[%s3 + $0x8] sm:$0xff]
  %v612 = vld [vmem:[%s3 + $0x10] sm:$0xff]
  %v613 = vld [vmem:[%s3 + $0x18] sm:$0xff]
  %618 = vrot.lane.b32.xlu0 %v610, 78
  %v619 = vpop.permute.xlu0 %618
  %620 = vrot.lane.b32.xlu0 %v611, 78
  %v621 = vpop.permute.xlu0 %620
  %622 = vrot.lane.b32.xlu0 %v612, 78
  %v623 = vpop.permute.xlu0 %622
  %624 = vrot.lane.b32.xlu0 %v613, 78
  %v625 = vpop.permute.xlu0 %624
  %vm626 = vcmask 637952
  %v627 = vsel %vm626, %v619, %v621
  %v628 = vsel %vm626, %v621, %v623
  %v629 = vsel %vm626, %v623, %v625
  %634 = vst [vmem:[#allocation2 + $0x220] sm:$0xff] %v627
  %635 = vst [vmem:[#allocation2 + $0x228] sm:$0xff] %v628
  %636 = vst [vmem:[#allocation2 + $0x230] sm:$0xff] %v629
  %637 = vst.msk [vmem:[#allocation2 + $0x238] sm:$0xff] %vm626, %v625
  %v638 = vld [vmem:[%s39] sm:$0xff]
  %640 = vrot.lane.b32.xlu0 %v638, 78
  %v641 = vpop.permute.xlu0 %640
  %vm643 = vcmask 1048176
  %644 = vst.msk [vmem:[#allocation2 + $0x238] sm:$0xff] %vm643, %v641
  %v645 = vld [vmem:[%s3] sm:$0xff]
  %v646 = vld [vmem:[%s3 + $0x8] sm:$0xff]
  %v647 = vld [vmem:[%s3 + $0x10] sm:$0xff]
  %v648 = vld [vmem:[%s3 + $0x18] sm:$0xff]
  %653 = vrot.lane.b32.xlu0 %v645, 56
  %v654 = vpop.permute.xlu0 %653
  %655 = vrot.lane.b32.xlu0 %v646, 56
  %v656 = vpop.permute.xlu0 %655
  %657 = vrot.lane.b32.xlu0 %v647, 56
  %v658 = vpop.permute.xlu0 %657
  %659 = vrot.lane.b32.xlu0 %v648, 56
  %v660 = vpop.permute.xlu0 %659
  %vm661 = vcmask 457728
  %v662 = vsel %vm661, %v654, %v656
  %v663 = vsel %vm661, %v656, %v658
  %v664 = vsel %vm661, %v658, %v660
  %669 = vst [vmem:[#allocation2 + $0x240] sm:$0xff] %v662
  %670 = vst [vmem:[#allocation2 + $0x248] sm:$0xff] %v663
  %671 = vst [vmem:[#allocation2 + $0x250] sm:$0xff] %v664
  %672 = vst.msk [vmem:[#allocation2 + $0x258] sm:$0xff] %vm661, %v660
  %v673 = vld [vmem:[%s39] sm:$0xff]
  %675 = vrot.lane.b32.xlu0 %v673, 56
  %v676 = vpop.permute.xlu0 %675
  %vm678 = vcmask 1048000
  %679 = vst.msk [vmem:[#allocation2 + $0x258] sm:$0xff] %vm678, %v676
  %v680 = vld [vmem:[%s3] sm:$0xff]
  %v681 = vld [vmem:[%s3 + $0x8] sm:$0xff]
  %v682 = vld [vmem:[%s3 + $0x10] sm:$0xff]
  %v683 = vld [vmem:[%s3 + $0x18] sm:$0xff]
  %688 = vrot.lane.b32.xlu0 %v680, 55
  %v689 = vpop.permute.xlu0 %688
  %690 = vrot.lane.b32.xlu0 %v681, 55
  %v691 = vpop.permute.xlu0 %690
  %692 = vrot.lane.b32.xlu0 %v682, 55
  %v693 = vpop.permute.xlu0 %692
  %694 = vrot.lane.b32.xlu0 %v683, 55
  %v695 = vpop.permute.xlu0 %694
  %vm696 = vcmask 449536
  %v697 = vsel %vm696, %v689, %v691
  %v698 = vsel %vm696, %v691, %v693
  %v699 = vsel %vm696, %v693, %v695
  %704 = vst [vmem:[#allocation2 + $0x260] sm:$0xff] %v697
  %705 = vst [vmem:[#allocation2 + $0x268] sm:$0xff] %v698
  %706 = vst [vmem:[#allocation2 + $0x270] sm:$0xff] %v699
  %707 = vst.msk [vmem:[#allocation2 + $0x278] sm:$0xff] %vm696, %v695
  %v708 = vld [vmem:[%s39] sm:$0xff]
  %710 = vrot.lane.b32.xlu0 %v708, 55
  %v711 = vpop.permute.xlu0 %710
  %vm713 = vcmask 1047992
  %714 = vst.msk [vmem:[#allocation2 + $0x278] sm:$0xff] %vm713, %v711
  %v715 = vld [vmem:[%s3] sm:$0xff]
  %v716 = vld [vmem:[%s3 + $0x8] sm:$0xff]
  %v717 = vld [vmem:[%s3 + $0x10] sm:$0xff]
  %v718 = vld [vmem:[%s3 + $0x18] sm:$0xff]
  %723 = vrot.lane.b32.xlu0 %v715, 54
  %v724 = vpop.permute.xlu0 %723
  %725 = vrot.lane.b32.xlu0 %v716, 54
  %v726 = vpop.permute.xlu0 %725
  %727 = vrot.lane.b32.xlu0 %v717, 54
  %v728 = vpop.permute.xlu0 %727
  %729 = vrot.lane.b32.xlu0 %v718, 54
  %v730 = vpop.permute.xlu0 %729
  %vm731 = vcmask 441344
  %v732 = vsel %vm731, %v724, %v726
  %v733 = vsel %vm731, %v726, %v728
  %v734 = vsel %vm731, %v728, %v730
  %739 = vst [vmem:[#allocation2 + $0x280] sm:$0xff] %v732
  %740 = vst [vmem:[#allocation2 + $0x288] sm:$0xff] %v733
  %741 = vst [vmem:[#allocation2 + $0x290] sm:$0xff] %v734
  %742 = vst.msk [vmem:[#allocation2 + $0x298] sm:$0xff] %vm731, %v730
  %v743 = vld [vmem:[%s39] sm:$0xff]
  %745 = vrot.lane.b32.xlu0 %v743, 54
  %v746 = vpop.permute.xlu0 %745
  %vm748 = vcmask 1047984
  %749 = vst.msk [vmem:[#allocation2 + $0x298] sm:$0xff] %vm748, %v746
  %v750 = vld [vmem:[%s3] sm:$0xff]
  %v751 = vld [vmem:[%s3 + $0x8] sm:$0xff]
  %v752 = vld [vmem:[%s3 + $0x10] sm:$0xff]
  %v753 = vld [vmem:[%s3 + $0x18] sm:$0xff]
  %758 = vrot.lane.b32.xlu0 %v750, 50
  %v759 = vpop.permute.xlu0 %758
  %760 = vrot.lane.b32.xlu0 %v751, 50
  %v761 = vpop.permute.xlu0 %760
  %762 = vrot.lane.b32.xlu0 %v752, 50
  %v763 = vpop.permute.xlu0 %762
  %764 = vrot.lane.b32.xlu0 %v753, 50
  %v765 = vpop.permute.xlu0 %764
  %vm766 = vcmask 408576
  %v767 = vsel %vm766, %v759, %v761
  %v768 = vsel %vm766, %v761, %v763
  %v769 = vsel %vm766, %v763, %v765
  %774 = vst [vmem:[#allocation2 + $0x2a0] sm:$0xff] %v767
  %775 = vst [vmem:[#allocation2 + $0x2a8] sm:$0xff] %v768
  %776 = vst [vmem:[#allocation2 + $0x2b0] sm:$0xff] %v769
  %777 = vst.msk [vmem:[#allocation2 + $0x2b8] sm:$0xff] %vm766, %v765
  %v778 = vld [vmem:[%s39] sm:$0xff]
  %780 = vrot.lane.b32.xlu0 %v778, 50
  %v781 = vpop.permute.xlu0 %780
  %vm783 = vcmask 1047952
  %784 = vst.msk [vmem:[#allocation2 + $0x2b8] sm:$0xff] %vm783, %v781
  %v785 = vld [vmem:[%s3] sm:$0xff]
  %v786 = vld [vmem:[%s3 + $0x8] sm:$0xff]
  %v787 = vld [vmem:[%s3 + $0x10] sm:$0xff]
  %v788 = vld [vmem:[%s3 + $0x18] sm:$0xff]
  %793 = vrot.lane.b32.xlu0 %v785, 49
  %v794 = vpop.permute.xlu0 %793
  %795 = vrot.lane.b32.xlu0 %v786, 49
  %v796 = vpop.permute.xlu0 %795
  %797 = vrot.lane.b32.xlu0 %v787, 49
  %v798 = vpop.permute.xlu0 %797
  %799 = vrot.lane.b32.xlu0 %v788, 49
  %v800 = vpop.permute.xlu0 %799
  %vm801 = vcmask 400384
  %v802 = vsel %vm801, %v794, %v796
  %v803 = vsel %vm801, %v796, %v798
  %v804 = vsel %vm801, %v798, %v800
  %809 = vst [vmem:[#allocation2 + $0x2c0] sm:$0xff] %v802
  %810 = vst [vmem:[#allocation2 + $0x2c8] sm:$0xff] %v803
  %811 = vst [vmem:[#allocation2 + $0x2d0] sm:$0xff] %v804
  %812 = vst.msk [vmem:[#allocation2 + $0x2d8] sm:$0xff] %vm801, %v800
  %v813 = vld [vmem:[%s39] sm:$0xff]
  %815 = vrot.lane.b32.xlu0 %v813, 49
  %v816 = vpop.permute.xlu0 %815
  %vm818 = vcmask 1047944
  %819 = vst.msk [vmem:[#allocation2 + $0x2d8] sm:$0xff] %vm818, %v816
  %v820 = vld [vmem:[%s3] sm:$0xff]
  %v821 = vld [vmem:[%s3 + $0x8] sm:$0xff]
  %v822 = vld [vmem:[%s3 + $0x10] sm:$0xff]
  %v823 = vld [vmem:[%s3 + $0x18] sm:$0xff]
  %828 = vrot.lane.b32.xlu0 %v820, 48
  %v829 = vpop.permute.xlu0 %828
  %830 = vrot.lane.b32.xlu0 %v821, 48
  %v831 = vpop.permute.xlu0 %830
  %832 = vrot.lane.b32.xlu0 %v822, 48
  %v833 = vpop.permute.xlu0 %832
  %834 = vrot.lane.b32.xlu0 %v823, 48
  %v835 = vpop.permute.xlu0 %834
  %vm836 = vcmask 392192
  %v837 = vsel %vm836, %v829, %v831
  %v838 = vsel %vm836, %v831, %v833
  %v839 = vsel %vm836, %v833, %v835
  %844 = vst [vmem:[#allocation2 + $0x2e0] sm:$0xff] %v837
  %845 = vst [vmem:[#allocation2 + $0x2e8] sm:$0xff] %v838
  %846 = vst [vmem:[#allocation2 + $0x2f0] sm:$0xff] %v839
  %847 = vst.msk [vmem:[#allocation2 + $0x2f8] sm:$0xff] %vm836, %v835
  %v848 = vld [vmem:[%s39] sm:$0xff]
  %850 = vrot.lane.b32.xlu0 %v848, 48
  %v851 = vpop.permute.xlu0 %850
  %vm853 = vcmask 1047936
  %854 = vst.msk [vmem:[#allocation2 + $0x2f8] sm:$0xff] %vm853, %v851
  %v855 = vld [vmem:[%s3] sm:$0xff]
  %v856 = vld [vmem:[%s3 + $0x8] sm:$0xff]
  %v857 = vld [vmem:[%s3 + $0x10] sm:$0xff]
  %v858 = vld [vmem:[%s3 + $0x18] sm:$0xff]
  %863 = vrot.lane.b32.xlu0 %v855, 44
  %v864 = vpop.permute.xlu0 %863
  %865 = vrot.lane.b32.xlu0 %v856, 44
  %v866 = vpop.permute.xlu0 %865
  %867 = vrot.lane.b32.xlu0 %v857, 44
  %v868 = vpop.permute.xlu0 %867
  %869 = vrot.lane.b32.xlu0 %v858, 44
  %v870 = vpop.permute.xlu0 %869
  %vm871 = vcmask 359424
  %v872 = vsel %vm871, %v864, %v866
  %v873 = vsel %vm871, %v866, %v868
  %v874 = vsel %vm871, %v868, %v870
  %879 = vst [vmem:[#allocation2 + $0x300] sm:$0xff] %v872
  %880 = vst [vmem:[#allocation2 + $0x308] sm:$0xff] %v873
  %881 = vst [vmem:[#allocation2 + $0x310] sm:$0xff] %v874
  %882 = vst.msk [vmem:[#allocation2 + $0x318] sm:$0xff] %vm871, %v870
  %v883 = vld [vmem:[%s39] sm:$0xff]
  %885 = vrot.lane.b32.xlu0 %v883, 44
  %v886 = vpop.permute.xlu0 %885
  %vm888 = vcmask 1047904
  %889 = vst.msk [vmem:[#allocation2 + $0x318] sm:$0xff] %vm888, %v886
  %v890 = vld [vmem:[%s3] sm:$0xff]
  %v891 = vld [vmem:[%s3 + $0x8] sm:$0xff]
  %v892 = vld [vmem:[%s3 + $0x10] sm:$0xff]
  %v893 = vld [vmem:[%s3 + $0x18] sm:$0xff]
  %898 = vrot.lane.b32.xlu0 %v890, 43
  %v899 = vpop.permute.xlu0 %898
  %900 = vrot.lane.b32.xlu0 %v891, 43
  %v901 = vpop.permute.xlu0 %900
  %902 = vrot.lane.b32.xlu0 %v892, 43
  %v903 = vpop.permute.xlu0 %902
  %904 = vrot.lane.b32.xlu0 %v893, 43
  %v905 = vpop.permute.xlu0 %904
  %vm906 = vcmask 351232
  %v907 = vsel %vm906, %v899, %v901
  %v908 = vsel %vm906, %v901, %v903
  %v909 = vsel %vm906, %v903, %v905
  %914 = vst [vmem:[#allocation2 + $0x320] sm:$0xff] %v907
  %915 = vst [vmem:[#allocation2 + $0x328] sm:$0xff] %v908
  %916 = vst [vmem:[#allocation2 + $0x330] sm:$0xff] %v909
  %917 = vst.msk [vmem:[#allocation2 + $0x338] sm:$0xff] %vm906, %v905
  %v918 = vld [vmem:[%s39] sm:$0xff]
  %920 = vrot.lane.b32.xlu0 %v918, 43
  %v921 = vpop.permute.xlu0 %920
  %vm923 = vcmask 1047896
  %924 = vst.msk [vmem:[#allocation2 + $0x338] sm:$0xff] %vm923, %v921
  %v925 = vld [vmem:[%s3] sm:$0xff]
  %v926 = vld [vmem:[%s3 + $0x8] sm:$0xff]
  %v927 = vld [vmem:[%s3 + $0x10] sm:$0xff]
  %v928 = vld [vmem:[%s3 + $0x18] sm:$0xff]
  %933 = vrot.lane.b32.xlu0 %v925, 42
  %v934 = vpop.permute.xlu0 %933
  %935 = vrot.lane.b32.xlu0 %v926, 42
  %v936 = vpop.permute.xlu0 %935
  %937 = vrot.lane.b32.xlu0 %v927, 42
  %v938 = vpop.permute.xlu0 %937
  %939 = vrot.lane.b32.xlu0 %v928, 42
  %v940 = vpop.permute.xlu0 %939
  %vm941 = vcmask 343040
  %v942 = vsel %vm941, %v934, %v936
  %v943 = vsel %vm941, %v936, %v938
  %v944 = vsel %vm941, %v938, %v940
  %949 = vst [vmem:[#allocation2 + $0x340] sm:$0xff] %v942
  %950 = vst [vmem:[#allocation2 + $0x348] sm:$0xff] %v943
  %951 = vst [vmem:[#allocation2 + $0x350] sm:$0xff] %v944
  %952 = vst.msk [vmem:[#allocation2 + $0x358] sm:$0xff] %vm941, %v940
  %v953 = vld [vmem:[%s39] sm:$0xff]
  %955 = vrot.lane.b32.xlu0 %v953, 42
  %v956 = vpop.permute.xlu0 %955
  %vm958 = vcmask 1047888
  %959 = vst.msk [vmem:[#allocation2 + $0x358] sm:$0xff] %vm958, %v956
  %v960 = vld [vmem:[%s0] sm:$0xff]
  %v961 = vld [vmem:[%s0 + $0x8] sm:$0xff]
  %v962 = vld [vmem:[#allocation2] sm:$0xff]
  %v963 = vld [vmem:[#allocation2 + $0x8] sm:$0xff]
  %v964 = vld [vmem:[#allocation2 + $0x10] sm:$0xff]
  %v965 = vld [vmem:[#allocation2 + $0x18] sm:$0xff]
  %v966 = vld [vmem:[#allocation2 + $0x20] sm:$0xff]
  %v967 = vld [vmem:[#allocation2 + $0x28] sm:$0xff]
  %v968 = vld [vmem:[#allocation2 + $0x30] sm:$0xff]
  %v969 = vld [vmem:[#allocation2 + $0x38] sm:$0xff]
  %v970 = vld [vmem:[#allocation2 + $0x40] sm:$0xff]
  %v971 = vld [vmem:[#allocation2 + $0x48] sm:$0xff]
  %v972 = vld [vmem:[#allocation2 + $0x50] sm:$0xff]
  %v973 = vld [vmem:[#allocation2 + $0x58] sm:$0xff]
  %v974 = vld [vmem:[#allocation2 + $0x60] sm:$0xff]
  %v975 = vld [vmem:[#allocation2 + $0x68] sm:$0xff]
  %v976 = vld [vmem:[#allocation2 + $0x70] sm:$0xff]
  %v977 = vld [vmem:[#allocation2 + $0x78] sm:$0xff]
  %v978 = vld [vmem:[#allocation2 + $0x80] sm:$0xff]
  %v979 = vld [vmem:[#allocation2 + $0x88] sm:$0xff]
  %v980 = vld [vmem:[#allocation2 + $0x90] sm:$0xff]
  %v981 = vld [vmem:[#allocation2 + $0x98] sm:$0xff]
  %v982 = vld [vmem:[#allocation2 + $0xa0] sm:$0xff]
  %v983 = vld [vmem:[#allocation2 + $0xa8] sm:$0xff]
  %v984 = vld [vmem:[#allocation2 + $0xb0] sm:$0xff]
  %v985 = vld [vmem:[#allocation2 + $0xb8] sm:$0xff]
  %v986 = vld [vmem:[#allocation2 + $0xc0] sm:$0xff]
  %v987 = vld [vmem:[#allocation2 + $0xc8] sm:$0xff]
  %v988 = vld [vmem:[#allocation2 + $0xd0] sm:$0xff]
  %v989 = vld [vmem:[#allocation2 + $0xd8] sm:$0xff]
  %v990 = vld [vmem:[#allocation2 + $0xe0] sm:$0xff]
  %v991 = vld [vmem:[#allocation2 + $0xe8] sm:$0xff]
  %v992 = vld [vmem:[#allocation2 + $0xf0] sm:$0xff]
  %v993 = vld [vmem:[#allocation2 + $0xf8] sm:$0xff]
  %v994 = vld [vmem:[#allocation2 + $0x100] sm:$0xff]
  %v995 = vld [vmem:[#allocation2 + $0x108] sm:$0xff]
  %v996 = vld [vmem:[#allocation2 + $0x110] sm:$0xff]
  %v997 = vld [vmem:[#allocation2 + $0x118] sm:$0xff]
  %v998 = vld [vmem:[#allocation2 + $0x120] sm:$0xff]
  %v999 = vld [vmem:[#allocation2 + $0x128] sm:$0xff]
  %v1000 = vld [vmem:[#allocation2 + $0x130] sm:$0xff]
  %v1001 = vld [vmem:[#allocation2 + $0x138] sm:$0xff]
  %v1002 = vld [vmem:[#allocation2 + $0x140] sm:$0xff]
  %v1003 = vld [vmem:[#allocation2 + $0x148] sm:$0xff]
  %v1004 = vld [vmem:[#allocation2 + $0x150] sm:$0xff]
  %v1005 = vld [vmem:[#allocation2 + $0x158] sm:$0xff]
  %v1006 = vld [vmem:[#allocation2 + $0x160] sm:$0xff]
  %v1007 = vld [vmem:[#allocation2 + $0x168] sm:$0xff]
  %v1008 = vld [vmem:[#allocation2 + $0x170] sm:$0xff]
  %v1009 = vld [vmem:[#allocation2 + $0x178] sm:$0xff]
  %v1010 = vld [vmem:[#allocation2 + $0x180] sm:$0xff]
  %v1011 = vld [vmem:[#allocation2 + $0x188] sm:$0xff]
  %v1012 = vld [vmem:[#allocation2 + $0x190] sm:$0xff]
  %v1013 = vld [vmem:[#allocation2 + $0x198] sm:$0xff]
  %v1014 = vld [vmem:[#allocation2 + $0x1a0] sm:$0xff]
  %v1015 = vld [vmem:[#allocation2 + $0x1a8] sm:$0xff]
  %v1016 = vld [vmem:[#allocation2 + $0x1b0] sm:$0xff]
  %v1017 = vld [vmem:[#allocation2 + $0x1b8] sm:$0xff]
  %v1018 = vld [vmem:[#allocation2 + $0x1c0] sm:$0xff]
  %v1019 = vld [vmem:[#allocation2 + $0x1c8] sm:$0xff]
  %v1020 = vld [vmem:[#allocation2 + $0x1d0] sm:$0xff]
  %v1021 = vld [vmem:[#allocation2 + $0x1d8] sm:$0xff]
  %v1022 = vld [vmem:[#allocation2 + $0x1e0] sm:$0xff]
  %v1023 = vld [vmem:[#allocation2 + $0x1e8] sm:$0xff]
  %v1024 = vld [vmem:[#allocation2 + $0x1f0] sm:$0xff]
  %v1025 = vld [vmem:[#allocation2 + $0x1f8] sm:$0xff]
  %v1026 = vld [vmem:[#allocation2 + $0x200] sm:$0xff]
  %v1027 = vld [vmem:[#allocation2 + $0x208] sm:$0xff]
  %v1028 = vld [vmem:[#allocation2 + $0x210] sm:$0xff]
  %v1029 = vld [vmem:[#allocation2 + $0x218] sm:$0xff]
  %v1030 = vld [vmem:[#allocation2 + $0x220] sm:$0xff]
  %v1031 = vld [vmem:[#allocation2 + $0x228] sm:$0xff]
  %v1032 = vld [vmem:[#allocation2 + $0x230] sm:$0xff]
  %v1033 = vld [vmem:[#allocation2 + $0x238] sm:$0xff]
  %v1034 = vld [vmem:[#allocation2 + $0x240] sm:$0xff]
  %v1035 = vld [vmem:[#allocation2 + $0x248] sm:$0xff]
  %v1036 = vld [vmem:[#allocation2 + $0x250] sm:$0xff]
  %v1037 = vld [vmem:[#allocation2 + $0x258] sm:$0xff]
  %v1038 = vld [vmem:[#allocation2 + $0x260] sm:$0xff]
  %v1039 = vld [vmem:[#allocation2 + $0x268] sm:$0xff]
  %v1040 = vld [vmem:[#allocation2 + $0x270] sm:$0xff]
  %v1041 = vld [vmem:[#allocation2 + $0x278] sm:$0xff]
  %v1042 = vld [vmem:[#allocation2 + $0x280] sm:$0xff]
  %v1043 = vld [vmem:[#allocation2 + $0x288] sm:$0xff]
  %v1044 = vld [vmem:[#allocation2 + $0x290] sm:$0xff]
  %v1045 = vld [vmem:[#allocation2 + $0x298] sm:$0xff]
  %v1046 = vld [vmem:[#allocation2 + $0x2a0] sm:$0xff]
  %v1047 = vld [vmem:[#allocation2 + $0x2a8] sm:$0xff]
  %v1048 = vld [vmem:[#allocation2 + $0x2b0] sm:$0xff]
  %v1049 = vld [vmem:[#allocation2 + $0x2b8] sm:$0xff]
  %v1050 = vld [vmem:[#allocation2 + $0x2c0] sm:$0xff]
  %v1051 = vld [vmem:[#allocation2 + $0x2c8] sm:$0xff]
  %v1052 = vld [vmem:[#allocation2 + $0x2d0] sm:$0xff]
  %v1053 = vld [vmem:[#allocation2 + $0x2d8] sm:$0xff]
  %v1054 = vld [vmem:[#allocation2 + $0x2e0] sm:$0xff]
  %v1055 = vld [vmem:[#allocation2 + $0x2e8] sm:$0xff]
  %v1056 = vld [vmem:[#allocation2 + $0x2f0] sm:$0xff]
  %v1057 = vld [vmem:[#allocation2 + $0x2f8] sm:$0xff]
  %v1058 = vld [vmem:[#allocation2 + $0x300] sm:$0xff]
  %v1059 = vld [vmem:[#allocation2 + $0x308] sm:$0xff]
  %v1060 = vld [vmem:[#allocation2 + $0x310] sm:$0xff]
  %v1061 = vld [vmem:[#allocation2 + $0x318] sm:$0xff]
  %v1062 = vld [vmem:[#allocation2 + $0x320] sm:$0xff]
  %v1063 = vld [vmem:[#allocation2 + $0x328] sm:$0xff]
  %v1064 = vld [vmem:[#allocation2 + $0x330] sm:$0xff]
  %v1065 = vld [vmem:[#allocation2 + $0x338] sm:$0xff]
  %v1066 = vld [vmem:[#allocation2 + $0x340] sm:$0xff]
  %v1067 = vld [vmem:[#allocation2 + $0x348] sm:$0xff]
  %v1068 = vld [vmem:[#allocation2 + $0x350] sm:$0xff]
  %v1069 = vld [vmem:[#allocation2 + $0x358] sm:$0xff]
  %v1070 = vld [vmem:[%s1] sm:$0xff]
  %1072 = vset.pattern.permute.xlu0 0
  %1073 = vperm.xlu0 %1072, %v1070
  %v1074 = vpop.permute.xlu0 %1073
  %vm1076 = vcmask 719872
  %v1078 = vsel %vm1076, %v961, 0
  %1080 = vmatpush.msra.mxu0 %v1022
  %1081 = vmatpush.msra.mxu0 %v1018
  %1082 = vmatpush.msra.mxu0 %v1014
  %1083 = vmatpush.msra.mxu0 %v1010
  %1084 = vmatpush.msra.mxu0 %v1006
  %1085 = vmatpush.msra.mxu0 %v1002
  %1086 = vmatpush.msra.mxu0 %v998
  %1087 = vmatpush.msra.mxu0 %v994
  %1088 = vmatpush.msra.mxu0 %v990
  %1089 = vmatpush.msra.mxu0 %v986
  %1090 = vmatpush.msra.mxu0 %v982
  %1091 = vmatpush.msra.mxu0 %v978
  %1092 = vmatpush.msra.mxu0 %v974
  %1093 = vmatpush.msra.mxu0 %v970
  %1094 = vmatpush.msra.mxu0 %v966
  %1095 = vmatpush.msra.mxu0 %v962
  %1096 = vmatmul.f32.gmra.mxu0 %v960
  %v1097 = vpop.f32.mrf.mxu0
  %v1098 = vadd.f32 %v1074, %v1097
  %1099 = vdwg.mxu0
  %1100 = vmatpush.msra.mxu0 0.0
  %1101 = vmatpush.msra.mxu0 0.0
  %1102 = vmatpush.msra.mxu0 0.0
  %1103 = vmatpush.msra.mxu0 0.0
  %1104 = vmatpush.msra.mxu0 0.0
  %1105 = vmatpush.msra.mxu0 %v1066
  %1106 = vmatpush.msra.mxu0 %v1062
  %1107 = vmatpush.msra.mxu0 %v1058
  %1108 = vmatpush.msra.mxu0 %v1054
  %1109 = vmatpush.msra.mxu0 %v1050
  %1110 = vmatpush.msra.mxu0 %v1046
  %1111 = vmatpush.msra.mxu0 %v1042
  %1112 = vmatpush.msra.mxu0 %v1038
  %1113 = vmatpush.msra.mxu0 %v1034
  %1114 = vmatpush.msra.mxu0 %v1030
  %1115 = vmatpush.msra.mxu0 %v1026
  %1116 = vmatmul.f32.gmra.mxu0 %v1078
  %v1117 = vpop.f32.mrf.mxu0
  %v1118 = vadd.f32 %v1098, %v1117
  %1119 = vdwg.mxu0
  %1120 = vmatpush.msra.mxu0 %v1023
  %1121 = vmatpush.msra.mxu0 %v1019
  %1122 = vmatpush.msra.mxu0 %v1015
  %1123 = vmatpush.msra.mxu0 %v1011
  %1124 = vmatpush.msra.mxu0 %v1007
  %1125 = vmatpush.msra.mxu0 %v1003
  %1126 = vmatpush.msra.mxu0 %v999
  %1127 = vmatpush.msra.mxu0 %v995
  %1128 = vmatpush.msra.mxu0 %v991
  %1129 = vmatpush.msra.mxu0 %v987
  %1130 = vmatpush.msra.mxu0 %v983
  %1131 = vmatpush.msra.mxu0 %v979
  %1132 = vmatpush.msra.mxu0 %v975
  %1133 = vmatpush.msra.mxu0 %v971
  %1134 = vmatpush.msra.mxu0 %v967
  %1135 = vmatpush.msra.mxu0 %v963
  %1136 = vmatmul.f32.gmra.mxu0 %v960
  %v1137 = vpop.f32.mrf.mxu0
  %v1138 = vadd.f32 %v1074, %v1137
  %1139 = vdwg.mxu0
  %1140 = vmatpush.msra.mxu0 0.0
  %1141 = vmatpush.msra.mxu0 0.0
  %1142 = vmatpush.msra.mxu0 0.0
  %1143 = vmatpush.msra.mxu0 0.0
  %1144 = vmatpush.msra.mxu0 0.0
  %1145 = vmatpush.msra.mxu0 %v1067
  %1146 = vmatpush.msra.mxu0 %v1063
  %1147 = vmatpush.msra.mxu0 %v1059
  %1148 = vmatpush.msra.mxu0 %v1055
  %1149 = vmatpush.msra.mxu0 %v1051
  %1150 = vmatpush.msra.mxu0 %v1047
  %1151 = vmatpush.msra.mxu0 %v1043
  %1152 = vmatpush.msra.mxu0 %v1039
  %1153 = vmatpush.msra.mxu0 %v1035
  %1154 = vmatpush.msra.mxu0 %v1031
  %1155 = vmatpush.msra.mxu0 %v1027
  %1156 = vmatmul.f32.gmra.mxu0 %v1078
  %v1157 = vpop.f32.mrf.mxu0
  %v1158 = vadd.f32 %v1138, %v1157
  %1159 = vdwg.mxu0
  %1160 = vmatpush.msra.mxu0 %v1024
  %1161 = vmatpush.msra.mxu0 %v1020
  %1162 = vmatpush.msra.mxu0 %v1016
  %1163 = vmatpush.msra.mxu0 %v1012
  %1164 = vmatpush.msra.mxu0 %v1008
  %1165 = vmatpush.msra.mxu0 %v1004
  %1166 = vmatpush.msra.mxu0 %v1000
  %1167 = vmatpush.msra.mxu0 %v996
  %1168 = vmatpush.msra.mxu0 %v992
  %1169 = vmatpush.msra.mxu0 %v988
  %1170 = vmatpush.msra.mxu0 %v984
  %1171 = vmatpush.msra.mxu0 %v980
  %1172 = vmatpush.msra.mxu0 %v976
  %1173 = vmatpush.msra.mxu0 %v972
  %1174 = vmatpush.msra.mxu0 %v968
  %1175 = vmatpush.msra.mxu0 %v964
  %1176 = vmatmul.f32.gmra.mxu0 %v960
  %v1177 = vpop.f32.mrf.mxu0
  %v1178 = vadd.f32 %v1074, %v1177
  %1179 = vdwg.mxu0
  %1180 = vmatpush.msra.mxu0 0.0
  %1181 = vmatpush.msra.mxu0 0.0
  %1182 = vmatpush.msra.mxu0 0.0
  %1183 = vmatpush.msra.mxu0 0.0
  %1184 = vmatpush.msra.mxu0 0.0
  %1185 = vmatpush.msra.mxu0 %v1068
  %1186 = vmatpush.msra.mxu0 %v1064
  %1187 = vmatpush.msra.mxu0 %v1060
  %1188 = vmatpush.msra.mxu0 %v1056
  %1189 = vmatpush.msra.mxu0 %v1052
  %1190 = vmatpush.msra.mxu0 %v1048
  %1191 = vmatpush.msra.mxu0 %v1044
  %1192 = vmatpush.msra.mxu0 %v1040
  %1193 = vmatpush.msra.mxu0 %v1036
  %1194 = vmatpush.msra.mxu0 %v1032
  %1195 = vmatpush.msra.mxu0 %v1028
  %1196 = vmatmul.f32.gmra.mxu0 %v1078
  %v1197 = vpop.f32.mrf.mxu0
  %v1198 = vadd.f32 %v1178, %v1197
  %1199 = vdwg.mxu0
  %1200 = vmatpush.msra.mxu0 %v1025
  %1201 = vmatpush.msra.mxu0 %v1021
  %1202 = vmatpush.msra.mxu0 %v1017
  %1203 = vmatpush.msra.mxu0 %v1013
  %1204 = vmatpush.msra.mxu0 %v1009
  %1205 = vmatpush.msra.mxu0 %v1005
  %1206 = vmatpush.msra.mxu0 %v1001
  %1207 = vmatpush.msra.mxu0 %v997
  %1208 = vmatpush.msra.mxu0 %v993
  %1209 = vmatpush.msra.mxu0 %v989
  %1210 = vmatpush.msra.mxu0 %v985
  %1211 = vmatpush.msra.mxu0 %v981
  %1212 = vmatpush.msra.mxu0 %v977
  %1213 = vmatpush.msra.mxu0 %v973
  %1214 = vmatpush.msra.mxu0 %v969
  %1215 = vmatpush.msra.mxu0 %v965
  %1216 = vmatmul.f32.gmra.mxu0 %v960
  %v1217 = vpop.f32.mrf.mxu0
  %v1218 = vadd.f32 %v1074, %v1217
  %1219 = vdwg.mxu0
  %1220 = vmatpush.msra.mxu0 0.0
  %1221 = vmatpush.msra.mxu0 0.0
  %1222 = vmatpush.msra.mxu0 0.0
  %1223 = vmatpush.msra.mxu0 0.0
  %1224 = vmatpush.msra.mxu0 0.0
  %1225 = vmatpush.msra.mxu0 %v1069
  %1226 = vmatpush.msra.mxu0 %v1065
  %1227 = vmatpush.msra.mxu0 %v1061
  %1228 = vmatpush.msra.mxu0 %v1057
  %1229 = vmatpush.msra.mxu0 %v1053
  %1230 = vmatpush.msra.mxu0 %v1049
  %1231 = vmatpush.msra.mxu0 %v1045
  %1232 = vmatpush.msra.mxu0 %v1041
  %1233 = vmatpush.msra.mxu0 %v1037
  %1234 = vmatpush.msra.mxu0 %v1033
  %1235 = vmatpush.msra.mxu0 %v1029
  %1236 = vmatmul.f32.gmra.mxu0 %v1078
  %v1237 = vpop.f32.mrf.mxu0
  %v1238 = vadd.f32 %v1218, %v1237
  %1239 = vdwg.mxu0
  %v1240 = vmax.f32 %v1118, 0.0
  %v1241 = vmax.f32 %v1158, 0.0
  %v1242 = vmax.f32 %v1198, 0.0
  %v1243 = vmax.f32 %v1238, 0.0
  %v1244 = vld [vmem:[%s2] sm:$0xf]
  %v1246 = vperm.slane %v1244, 0
  %v1247 = vperm.slane %v1244, 1
  %v1248 = vperm.slane %v1244, 2
  %v1249 = vperm.slane %v1244, 3
  %v1254 = vmul.f32 %v1240, %v1246
  %v1255 = vmul.f32 %v1241, %v1247
  %v1256 = vmul.f32 %v1242, %v1248
  %v1257 = vmul.f32 %v1243, %v1249
  %1258 = vst [vmem:[%s5] sm:$0xff] %v1254
  %1259 = vst [vmem:[%s5 + $0x8] sm:$0xff] %v1255
  %1260 = vst [vmem:[%s5 + $0x10] sm:$0xff] %v1256
  %1261 = vst [vmem:[%s5 + $0x18] sm:$0xff] %v1257
  // Predicated region
  $region22: #{resnet_down_forward.4} parent=0 // pred_check
    _
  $region23: #{resnet_down_forward.4} parent=0 // pred_check_branch
    %1263 = sbr.rel (0) target = $region25
  $region24: #{resnet_down_forward.4} parent=0 // pred_region
    _
  $region25: #{resnet_down_forward.4} parent=0 // pred_fallthru
    _
  // Predicated region
  $region26: #{resnet_down_forward.4} parent=0 // pred_check
    _
  $region27: #{resnet_down_forward.4} parent=0 // pred_check_branch
    %1265 = sbr.rel (0) target = $region29
  $region28: #{resnet_down_forward.4} parent=0 // pred_region
    _
  $region29: #{resnet_down_forward.4} parent=0 // pred_fallthru
    _

</llo_original>
